<compile_context>
chip_gen: v7x
topology: tpu7x:2x2x1
jax: 0.10.0
libtpu: 0.0.40
codegen_flags: <defaults>
</compile_context>

<pallas_src>
import functools
import math

import jax
import jax.numpy as jnp
from jax import lax
from jax.experimental import pallas as pl
from jax.experimental.pallas import tpu as pltpu

_LANE = 128          # padded feature width (lane-dense loads/stores and output slab)
_STREAM_TK = 512     # adjacency-column tile when streamed from HBM


def _round_up(x, m):
    return (x + m - 1) // m * m


def _vmem_capacity_bytes():
    """Physical VMEM of the attached TPU (fallback: 64 MiB, v7x-sized, conservative)."""
    try:
        info = pltpu.get_tpu_info()
        for attr in ("vmem_capacity_bytes", "vmem_size_bytes", "vmem_bytes"):
            cap = getattr(info, attr, None)
            if cap:
                return int(cap)
    except Exception:
        pass
    return 64 * 1024 * 1024


_VMEM_CAP = _vmem_capacity_bytes()
# ~40% of physical VMEM for the resident bf16 adjacency:
#   v5e/v6e (128 MiB phys) -> ~51 MiB ; v7x (64 MiB phys) -> ~25 MiB. Hard cap 56 MiB.
_RESIDENT_ADJ_BYTES = min(int(0.40 * _VMEM_CAP), 56 * 1024 * 1024)


def _choose_tiling(n):
    """Return (n_pad, tk, resident)."""
    n8 = _round_up(max(n, 8), 8)
    if n8 * n8 * 2 <= _RESIDENT_ADJ_BYTES:
        return n8, n8, True                 # adjacency fully resident in VMEM
    return _round_up(n, _STREAM_TK), _STREAM_TK, False


def _vmem_limit(footprint_bytes):
    """Explicit scoped-VMEM budget: footprint + headroom, clamped below physical."""
    budget = footprint_bytes + 16 * 1024 * 1024
    return int(max(16 * 1024 * 1024, min(int(0.9 * _VMEM_CAP), budget)))


# ----------------------------------------------------------------------------------
# Kernels
# ----------------------------------------------------------------------------------
def _gcn_resident_kernel(adj_ref, feats_ref, deginv_ref, w_ref, b_ref, out_ref,
                         emb_ref, *, n_layers):
    """Single-invocation fast path (whole bf16 adjacency resident in VMEM).

      adj_ref   : (N_pad, N_pad) bf16   0/1 adjacency
      feats_ref : (N_pad, P)     f32    zero-padded input features
      deginv_ref: (N_pad, 1)     f32    1/deg (0 where deg == 0)
      w_ref     : (L, 2P, P)     f32    packed [W_self; W_neigh] per layer (zero padded)
      b_ref     : (L, 1, P)      f32    per-layer bias (zero padded)
      out_ref   : (N_pad, P)     f32    lane-dense output slab
      emb_ref   : (N_pad, P)     f32    VMEM embedding carry (read-before-write/layer)
    """
    p = _LANE
    emb_ref[...] = feats_ref[...]

    def aggregate_project(l, x):
        # Mean aggregation: bf16 adj x bf16 emb on the MXU, f32 accumulation,
        # f32 1/deg applied AFTER the matmul (never folded into bf16).
        neigh = jnp.dot(adj_ref[...], x.astype(jnp.bfloat16),
                        preferred_element_type=jnp.float32) * deginv_ref[...]
        wl = w_ref[l]                                   # (2P, P)
        # Two accumulated dots: no lane-concatenate temporary.
        return (jnp.dot(x, wl[:p], preferred_element_type=jnp.float32)
                + jnp.dot(neigh, wl[p:], preferred_element_type=jnp.float32)
                + b_ref[l])

    def hidden_layer(l, carry):
        h = aggregate_project(l, emb_ref[...])
        h = jnp.maximum(h, 0.0)                         # ReLU
        sumsq = jnp.sum(h * h, axis=-1, keepdims=True)
        # x / max(||x||, 1e-12)  ==  x * rsqrt(max(sumsq, 1e-24))   (EUP rsqrt)
        emb_ref[...] = h * lax.rsqrt(jnp.maximum(sumsq, 1e-24))
        return carry

    lax.fori_loop(0, n_layers - 1, hidden_layer, 0, unroll=True)
    # Last layer: projection only (no activation / normalization).
    out_ref[...] = aggregate_project(n_layers - 1, emb_ref[...])


def _gcn_streamed_kernel(adj_ref, feats_ref, deginv_ref, w_ref, b_ref, out_ref,
                         emb_ref, neigh_ref, *, tk):
    """Streamed path: grid = (num_layers, num_k_tiles); adjacency-column reduction last.

      adj_ref   : (N_pad, TK)   bf16   column stripe k of the adjacency (streamed)
      emb_ref   : (2, N_pad, P) f32    VMEM ping-pong embedding buffers
      neigh_ref : (N_pad, P)    f32    VMEM accumulator for adj @ x
    """
    p = _LANE
    l = pl.program_id(0)
    k = pl.program_id(1)
    n_layers = pl.num_programs(0)
    n_k = pl.num_programs(1)

    @pl.when((l == 0) & (k == 0))
    def _init():
        emb_ref[0] = feats_ref[...]

    rb = l & 1            # buffer holding the previous layer's embeddings
    wb = 1 - rb           # buffer this layer writes into

    # Partial mean-aggregation: bf16 adjacency stripe x bf16 embedding slab, f32 acc.
    start = pl.multiple_of(k * tk, tk)
    x_k = emb_ref[rb, pl.ds(start, tk), :].astype(jnp.bfloat16)
    part = jnp.dot(adj_ref[...], x_k, preferred_element_type=jnp.float32)

    # First partial product initializes the accumulator (no zero-fill pass).
    @pl.when(k == 0)
    def _first():
        neigh_ref[...] = part

    @pl.when(k > 0)
    def _rest():
        neigh_ref[...] += part

    @pl.when(k == n_k - 1)
    def _finalize():
        x = emb_ref[rb]
        neigh = neigh_ref[...] * deginv_ref[...]        # f32 1/deg after the matmul
        w = w_ref[0]
        h = (jnp.dot(x, w[:p], preferred_element_type=jnp.float32)
             + jnp.dot(neigh, w[p:], preferred_element_type=jnp.float32)
             + b_ref[0])

        @pl.when(l < n_layers - 1)
        def _hidden():
            ha = jnp.maximum(h, 0.0)
            sumsq = jnp.sum(ha * ha, axis=-1, keepdims=True)
            emb_ref[wb] = ha * lax.rsqrt(jnp.maximum(sumsq, 1e-24))

        @pl.when(l == n_layers - 1)
        def _last():
            out_ref[...] = h


# ----------------------------------------------------------------------------------
# Wrapper
# ----------------------------------------------------------------------------------
def _pack_params(params, p):
    """Stack per-layer (2*Fin, Fout) weights / (1, Fout) biases into zero-padded
    (L, 2P, P) / (L, 1, P) tensors, with W_self in rows [0:P) and W_neigh in [P:2P)."""
    n_layers = len(params)
    w_stack = jnp.zeros((n_layers, 2 * p, p), jnp.float32)
    b_stack = jnp.zeros((n_layers, 1, p), jnp.float32)
    for i, (w, b) in enumerate(params):
        f_in = w.shape[0] // 2
        f_out = w.shape[1]
        assert f_in <= p and f_out <= p
        w_stack = w_stack.at[i, :f_in, :f_out].set(w[:f_in])          # W_self half
        w_stack = w_stack.at[i, p:p + f_in, :f_out].set(w[f_in:])     # W_neigh half
        b_stack = b_stack.at[i, 0, :f_out].set(b[0])
    return w_stack, b_stack


def _call_gcn(adj_bf16, feats_p, deg_inv, w_stack, b_stack, *,
              n_pad, tk, resident, n_layers, single_buffer):
    p = _LANE

    def spec(shape, imap, const_index):
        if const_index and single_buffer:
            return pl.BlockSpec(shape, imap, pipeline_mode=pl.Buffered(1))
        return pl.BlockSpec(shape, imap)

    row_f32 = n_pad * p * 4
    if resident:
        footprint = (n_pad * n_pad * 2                       # bf16 adjacency, 1 buffer
                     + 4 * row_f32                           # feats + out + deg_inv(pad) + emb
                     + n_layers * (2 * p * p + 8 * p) * 4)   # packed weights + bias
        grid = (1,)
        in_specs = [
            spec((n_pad, n_pad), lambda i: (0, 0), True),          # adjacency (resident)
            spec((n_pad, p), lambda i: (0, 0), True),              # feats
            spec((n_pad, 1), lambda i: (0, 0), True),              # deg_inv
            spec((n_layers, 2 * p, p), lambda i: (0, 0, 0), True),  # all layer weights
            spec((n_layers, 1, p), lambda i: (0, 0, 0), True),      # all layer biases
        ]
        out_spec = spec((n_pad, p), lambda i: (0, 0), True)
        scratch = [pltpu.VMEM((n_pad, p), jnp.float32)]            # embedding carry
        kernel = functools.partial(_gcn_resident_kernel, n_layers=n_layers)
        semantics = ("arbitrary",)
    else:
        footprint = (2 * n_pad * tk * 2                      # adjacency stripes, 2 buffers
                     + 6 * row_f32                           # feats + out + deg_inv + 3 scratch
                     + 2 * (2 * p * p + 8 * p) * 4)          # per-layer W/b, 2 buffers
        grid = (n_layers, n_pad // tk)
        in_specs = [
            spec((n_pad, tk), lambda l, k: (0, k), False),         # adjacency stripe (streamed)
            spec((n_pad, p), lambda l, k: (0, 0), True),           # feats
            spec((n_pad, 1), lambda l, k: (0, 0), True),           # deg_inv
            spec((1, 2 * p, p), lambda l, k: (l, 0, 0), False),    # layer weights
            spec((1, 1, p), lambda l, k: (l, 0, 0), False),        # layer bias
        ]
        out_spec = spec((n_pad, p), lambda l, k: (0, 0), True)
        scratch = [pltpu.VMEM((2, n_pad, p), jnp.float32),         # emb ping-pong
                   pltpu.VMEM((n_pad, p), jnp.float32)]            # neigh accumulator
        kernel = functools.partial(_gcn_streamed_kernel, tk=tk)
        # Layer axis carries a sequential dependency through VMEM scratch; k is a
        # reduction -> both "arbitrary".
        semantics = ("arbitrary", "arbitrary")

    return pl.pallas_call(
        kernel,
        out_shape=jax.ShapeDtypeStruct((n_pad, p), jnp.float32),
        grid_spec=pltpu.PrefetchScalarGridSpec(
            num_scalar_prefetch=0, grid=grid,
            in_specs=in_specs, out_specs=out_spec, scratch_shapes=scratch),
        compiler_params=pltpu.CompilerParams(
            dimension_semantics=semantics,
            vmem_limit_bytes=_vmem_limit(footprint)),
    )(adj_bf16, feats_p, deg_inv, w_stack, b_stack)


def variable_gcn_forward(adj, feats, params):
    """VariableGCN.forward as ONE fused pallas_call over all layers."""
    n = adj.shape[0]
    f_in0 = feats.shape[1]
    num_labels = params[-1][0].shape[1]
    n_layers = len(params)
    p = _LANE

    n_pad, tk, resident = _choose_tiling(n)

    # Hoisted, layer-invariant degree normalization (f32, from the un-padded adjacency).
    deg = jnp.sum(adj.astype(jnp.float32), axis=1, keepdims=True)
    deg_inv = jnp.where(deg > 0.0, 1.0 / deg, 0.0).astype(jnp.float32)
    deg_inv = jnp.pad(deg_inv, ((0, n_pad - n), (0, 0)))

    # 0/1 adjacency is exact in bf16; cast BEFORE padding (no padded f32 HBM temporary).
    adj_bf16 = jnp.pad(adj.astype(jnp.bfloat16), ((0, n_pad - n), (0, n_pad - n)))
    feats_p = jnp.pad(feats.astype(jnp.float32), ((0, n_pad - n), (0, p - f_in0)))

    w_stack, b_stack = _pack_params(params, p)

    def run(single_buffer):
        out = _call_gcn(adj_bf16, feats_p, deg_inv, w_stack, b_stack,
                        n_pad=n_pad, tk=tk, resident=resident,
                        n_layers=n_layers, single_buffer=single_buffer)
        return jax.block_until_ready(out)

    try:
        out_padded = run(True)
    except Exception:
        # Fallback if this jax build rejects pipeline_mode=pl.Buffered(1).
        out_padded = run(False)

    return out_padded[:n, :num_labels]


# ----------------------------------------------------------------------------------
# Parameter init + pure-JAX reference
# ----------------------------------------------------------------------------------
def init_params(key, num_feats, num_hidden, num_labels, num_layers):
    """Matches GraphConvolution.init_weights: weight (2*Fin, Fout) ~ U(-stdv, stdv),
    bias (1, Fout) ~ U(-stdv, stdv), stdv = 1/sqrt(Fout)."""
    dims = [(num_feats, num_hidden)]
    dims += [(num_hidden, num_hidden)] * (num_layers - 2)
    dims += [(num_hidden, num_labels)]
    params = []
    for (f_in, f_out) in dims:
        key, kw, kb = jax.random.split(key, 3)
        stdv = 1.0 / math.sqrt(f_out)
        w = jax.random.uniform(kw, (2 * f_in, f_out), jnp.float32, -stdv, stdv)
        b = jax.random.uniform(kb, (1, f_out), jnp.float32, -stdv, stdv)
        params.append((w, b))
    return params


def _ref_forward(adj, feats, params):
    """Pure-JAX reference mirroring the kernel's compute recipe
    (bf16 adjacency aggregation with f32 accumulation, everything else f32)."""
    deg = jnp.sum(adj, axis=1, keepdims=True)
    deg_inv = jnp.where(deg > 0.0, 1.0 / deg, 0.0)
    adj_bf = adj.astype(jnp.bfloat16)
    x = feats.astype(jnp.float32)
    n_layers = len(params)
    for i, (w, b) in enumerate(params):
        f_in = w.shape[0] // 2
        neigh = jnp.dot(adj_bf, x.astype(jnp.bfloat16),
                        preferred_element_type=jnp.float32) * deg_inv
        h = x @ w[:f_in] + neigh @ w[f_in:] + b
        if i < n_layers - 1:
            h = jnp.maximum(h, 0.0)
            nrm = jnp.linalg.norm(h, axis=1, keepdims=True)
            h = h / jnp.maximum(nrm, 1e-12)
        x = h
    return x


if __name__ == "__main__":
    N_NODES = 64
    NUM_FEATS = 16
    NUM_HIDDEN = 32
    NUM_LABELS = 8
    NUM_LAYERS = 4   # VariableGCN default is 10; 4 keeps the demo small

    key = jax.random.PRNGKey(0)
    k_adj, k_feat, k_param = jax.random.split(key, 3)

    # Random sparse adjacency with self-loops so every node has >= 1 neighbor.
    adj = (jax.random.uniform(k_adj, (N_NODES, N_NODES)) < 0.1).astype(jnp.float32)
    adj = jnp.maximum(adj, jnp.eye(N_NODES, dtype=jnp.float32))

    feats = jax.random.normal(k_feat, (N_NODES, NUM_FEATS), jnp.float32)
    params = init_params(k_param, NUM_FEATS, NUM_HIDDEN, NUM_LABELS, NUM_LAYERS)

    probs = variable_gcn_forward(adj, feats, params)
    probs = jax.block_until_ready(probs)

    ref = _ref_forward(adj, feats, params)

    assert probs.shape == (N_NODES, NUM_LABELS)
    assert jnp.allclose(probs, ref, atol=2e-3, rtol=2e-3), \
        float(jnp.max(jnp.abs(probs - ref)))
    print("KERNEL_OK")
</pallas_src>

<mosaic_0001>
module attributes {stable_mosaic.version = 11 : i64} {
  func.func @_gcn_resident_kernel(%arg0: i32, %arg1: memref<64x64xbf16, #tpu.memory_space<vmem>>, %arg2: memref<64x128xf32, #tpu.memory_space<vmem>>, %arg3: memref<64x1xf32, #tpu.memory_space<vmem>>, %arg4: memref<4x256x128xf32, #tpu.memory_space<vmem>>, %arg5: memref<4x1x128xf32, #tpu.memory_space<vmem>>, %arg6: memref<64x128xf32, #tpu.memory_space<vmem>>, %arg7: memref<64x128xf32, #tpu.memory_space<vmem>>) attributes {dimension_semantics = [#tpu.dimension_semantics<arbitrary>], iteration_bounds = array<i64: 1>, scalar_prefetch = 0 : i64, scratch_operands = 1 : i64, tpu.core_type = #tpu.core_type<tc>, window_params = [{pipeline_mode = #tpu.pipeline_mode<synchronous>, transform_indices = @transform_0, window_bounds = array<i64: 64, 64>}, {pipeline_mode = #tpu.pipeline_mode<synchronous>, transform_indices = @transform_1, window_bounds = array<i64: 64, 128>}, {pipeline_mode = #tpu.pipeline_mode<synchronous>, transform_indices = @transform_2, window_bounds = array<i64: 64, 1>}, {pipeline_mode = #tpu.pipeline_mode<synchronous>, transform_indices = @transform_3, window_bounds = array<i64: 4, 256, 128>}, {pipeline_mode = #tpu.pipeline_mode<synchronous>, transform_indices = @transform_4, window_bounds = array<i64: 4, 1, 128>}, {pipeline_mode = #tpu.pipeline_mode<synchronous>, transform_indices = @transform_5, window_bounds = array<i64: 64, 128>}]} {
    %c0 = arith.constant 0 : index
    %c0_0 = arith.constant 0 : index
    %0 = vector.load %arg2[%c0, %c0_0] : memref<64x128xf32, #tpu.memory_space<vmem>>, vector<64x128xf32>
    %c0_1 = arith.constant 0 : index
    %c0_2 = arith.constant 0 : index
    %1 = vector.load %arg7[%c0_1, %c0_2] : memref<64x128xf32, #tpu.memory_space<vmem>>, vector<64x128xf32>
    tpu.vector_store %arg7[%c0_1, %c0_2], %0 {strides = array<i32>} : memref<64x128xf32, #tpu.memory_space<vmem>>, vector<64x128xf32>,
    %c0_i32 = arith.constant 0 : i32
    %c0_3 = arith.constant 0 : index
    %c0_4 = arith.constant 0 : index
    %2 = vector.load %arg7[%c0_3, %c0_4] : memref<64x128xf32, #tpu.memory_space<vmem>>, vector<64x128xf32>
    %c0_5 = arith.constant 0 : index
    %c0_6 = arith.constant 0 : index
    %3 = vector.load %arg1[%c0_5, %c0_6] : memref<64x64xbf16, #tpu.memory_space<vmem>>, vector<64x64xbf16>
    %4 = arith.truncf %2 : vector<64x128xf32> to vector<64x128xbf16>
    %cst = arith.constant dense<0.000000e+00> : vector<64x128xf32>
    %5 = tpu.matmul %3, %4, %cst {dimension_numbers = #tpu.dot_dimension_numbers<[1], [0], [0], [1], [0, 0, 1, 1], [], []>} : vector<64x64xbf16>, vector<64x128xbf16>, vector<64x128xf32> -> vector<64x128xf32>
    %c0_7 = arith.constant 0 : index
    %c0_8 = arith.constant 0 : index
    %6 = vector.load %arg3[%c0_7, %c0_8] : memref<64x1xf32, #tpu.memory_space<vmem>>, vector<64x1xf32>
    %7 = vector.broadcast %6 : vector<64x1xf32> to vector<64x128xf32>
    %8 = arith.mulf %5, %7 : vector<64x128xf32>
    %9 = arith.index_cast %c0_i32 : i32 to index
    %c0_9 = arith.constant 0 : index
    %c0_10 = arith.constant 0 : index
    %10 = vector.load %arg4[%9, %c0_9, %c0_10] : memref<4x256x128xf32, #tpu.memory_space<vmem>>, vector<1x256x128xf32>
    %11 = vector.shape_cast %10 : vector<1x256x128xf32> to vector<256x128xf32>
    %12 = vector.extract_strided_slice %11 {offsets = [0, 0], sizes = [128, 128], strides = [1, 1]} : vector<256x128xf32> to vector<128x128xf32>
    %cst_11 = arith.constant dense<0.000000e+00> : vector<64x128xf32>
    %13 = tpu.matmul %2, %12, %cst_11 {dimension_numbers = #tpu.dot_dimension_numbers<[1], [0], [0], [1], [0, 0, 1, 1], [], []>} : vector<64x128xf32>, vector<128x128xf32>, vector<64x128xf32> -> vector<64x128xf32>
    %14 = vector.extract_strided_slice %11 {offsets = [128, 0], sizes = [128, 128], strides = [1, 1]} : vector<256x128xf32> to vector<128x128xf32>
    %cst_12 = arith.constant dense<0.000000e+00> : vector<64x128xf32>
    %15 = tpu.matmul %8, %14, %cst_12 {dimension_numbers = #tpu.dot_dimension_numbers<[1], [0], [0], [1], [0, 0, 1, 1], [], []>} : vector<64x128xf32>, vector<128x128xf32>, vector<64x128xf32> -> vector<64x128xf32>
    %16 = arith.addf %13, %15 : vector<64x128xf32>
    %17 = arith.index_cast %c0_i32 : i32 to index
    %c0_13 = arith.constant 0 : index
    %c0_14 = arith.constant 0 : index
    %18 = vector.load %arg5[%17, %c0_13, %c0_14] : memref<4x1x128xf32, #tpu.memory_space<vmem>>, vector<1x1x128xf32>
    %19 = vector.shape_cast %18 : vector<1x1x128xf32> to vector<1x128xf32>
    %20 = vector.broadcast %19 : vector<1x128xf32> to vector<64x128xf32>
    %21 = arith.addf %16, %20 : vector<64x128xf32>
    %cst_15 = arith.constant 0.000000e+00 : f32
    %22 = vector.broadcast %cst_15 : f32 to vector<64x128xf32>
    %23 = arith.maximumf %21, %22 : vector<64x128xf32>
    %24 = arith.mulf %23, %23 : vector<64x128xf32>
    %cst_16 = arith.constant dense<0.000000e+00> : vector<64xf32>
    %25 = vector.multi_reduction <add>, %24, %cst_16 [1] : vector<64x128xf32> to vector<64xf32>
    %26 = vector.shape_cast %25 : vector<64xf32> to vector<64x1xf32>
    %cst_17 = arith.constant 1.000000e-24 : f32
    %27 = vector.broadcast %cst_17 : f32 to vector<64x1xf32>
    %28 = arith.maximumf %26, %27 : vector<64x1xf32>
    %29 = math.rsqrt %28 : vector<64x1xf32>
    %30 = vector.broadcast %29 : vector<64x1xf32> to vector<64x128xf32>
    %31 = arith.mulf %23, %30 : vector<64x128xf32>
    %c0_18 = arith.constant 0 : index
    %c0_19 = arith.constant 0 : index
    %32 = vector.load %arg7[%c0_18, %c0_19] : memref<64x128xf32, #tpu.memory_space<vmem>>, vector<64x128xf32>
    tpu.vector_store %arg7[%c0_18, %c0_19], %31 {strides = array<i32>} : memref<64x128xf32, #tpu.memory_space<vmem>>, vector<64x128xf32>,
    %c1_i32 = arith.constant 1 : i32
    %c0_20 = arith.constant 0 : index
    %c0_21 = arith.constant 0 : index
    %33 = vector.load %arg7[%c0_20, %c0_21] : memref<64x128xf32, #tpu.memory_space<vmem>>, vector<64x128xf32>
    %c0_22 = arith.constant 0 : index
    %c0_23 = arith.constant 0 : index
    %34 = vector.load %arg1[%c0_22, %c0_23] : memref<64x64xbf16, #tpu.memory_space<vmem>>, vector<64x64xbf16>
    %35 = arith.truncf %33 : vector<64x128xf32> to vector<64x128xbf16>
    %cst_24 = arith.constant dense<0.000000e+00> : vector<64x128xf32>
    %36 = tpu.matmul %34, %35, %cst_24 {dimension_numbers = #tpu.dot_dimension_numbers<[1], [0], [0], [1], [0, 0, 1, 1], [], []>} : vector<64x64xbf16>, vector<64x128xbf16>, vector<64x128xf32> -> vector<64x128xf32>
    %c0_25 = arith.constant 0 : index
    %c0_26 = arith.constant 0 : index
    %37 = vector.load %arg3[%c0_25, %c0_26] : memref<64x1xf32, #tpu.memory_space<vmem>>, vector<64x1xf32>
    %38 = vector.broadcast %37 : vector<64x1xf32> to vector<64x128xf32>
    %39 = arith.mulf %36, %38 : vector<64x128xf32>
    %40 = arith.index_cast %c1_i32 : i32 to index
    %c0_27 = arith.constant 0 : index
    %c0_28 = arith.constant 0 : index
    %41 = vector.load %arg4[%40, %c0_27, %c0_28] : memref<4x256x128xf32, #tpu.memory_space<vmem>>, vector<1x256x128xf32>
    %42 = vector.shape_cast %41 : vector<1x256x128xf32> to vector<256x128xf32>
    %43 = vector.extract_strided_slice %42 {offsets = [0, 0], sizes = [128, 128], strides = [1, 1]} : vector<256x128xf32> to vector<128x128xf32>
    %cst_29 = arith.constant dense<0.000000e+00> : vector<64x128xf32>
    %44 = tpu.matmul %33, %43, %cst_29 {dimension_numbers = #tpu.dot_dimension_numbers<[1], [0], [0], [1], [0, 0, 1, 1], [], []>} : vector<64x128xf32>, vector<128x128xf32>, vector<64x128xf32> -> vector<64x128xf32>
    %45 = vector.extract_strided_slice %42 {offsets = [128, 0], sizes = [128, 128], strides = [1, 1]} : vector<256x128xf32> to vector<128x128xf32>
    %cst_30 = arith.constant dense<0.000000e+00> : vector<64x128xf32>
    %46 = tpu.matmul %39, %45, %cst_30 {dimension_numbers = #tpu.dot_dimension_numbers<[1], [0], [0], [1], [0, 0, 1, 1], [], []>} : vector<64x128xf32>, vector<128x128xf32>, vector<64x128xf32> -> vector<64x128xf32>
    %47 = arith.addf %44, %46 : vector<64x128xf32>
    %48 = arith.index_cast %c1_i32 : i32 to index
    %c0_31 = arith.constant 0 : index
    %c0_32 = arith.constant 0 : index
    %49 = vector.load %arg5[%48, %c0_31, %c0_32] : memref<4x1x128xf32, #tpu.memory_space<vmem>>, vector<1x1x128xf32>
    %50 = vector.shape_cast %49 : vector<1x1x128xf32> to vector<1x128xf32>
    %51 = vector.broadcast %50 : vector<1x128xf32> to vector<64x128xf32>
    %52 = arith.addf %47, %51 : vector<64x128xf32>
    %cst_33 = arith.constant 0.000000e+00 : f32
    %53 = vector.broadcast %cst_33 : f32 to vector<64x128xf32>
    %54 = arith.maximumf %52, %53 : vector<64x128xf32>
    %55 = arith.mulf %54, %54 : vector<64x128xf32>
    %cst_34 = arith.constant dense<0.000000e+00> : vector<64xf32>
    %56 = vector.multi_reduction <add>, %55, %cst_34 [1] : vector<64x128xf32> to vector<64xf32>
    %57 = vector.shape_cast %56 : vector<64xf32> to vector<64x1xf32>
    %cst_35 = arith.constant 1.000000e-24 : f32
    %58 = vector.broadcast %cst_35 : f32 to vector<64x1xf32>
    %59 = arith.maximumf %57, %58 : vector<64x1xf32>
    %60 = math.rsqrt %59 : vector<64x1xf32>
    %61 = vector.broadcast %60 : vector<64x1xf32> to vector<64x128xf32>
    %62 = arith.mulf %54, %61 : vector<64x128xf32>
    %c0_36 = arith.constant 0 : index
    %c0_37 = arith.constant 0 : index
    %63 = vector.load %arg7[%c0_36, %c0_37] : memref<64x128xf32, #tpu.memory_space<vmem>>, vector<64x128xf32>
    tpu.vector_store %arg7[%c0_36, %c0_37], %62 {strides = array<i32>} : memref<64x128xf32, #tpu.memory_space<vmem>>, vector<64x128xf32>,
    %c2_i32 = arith.constant 2 : i32
    %c0_38 = arith.constant 0 : index
    %c0_39 = arith.constant 0 : index
    %64 = vector.load %arg7[%c0_38, %c0_39] : memref<64x128xf32, #tpu.memory_space<vmem>>, vector<64x128xf32>
    %c0_40 = arith.constant 0 : index
    %c0_41 = arith.constant 0 : index
    %65 = vector.load %arg1[%c0_40, %c0_41] : memref<64x64xbf16, #tpu.memory_space<vmem>>, vector<64x64xbf16>
    %66 = arith.truncf %64 : vector<64x128xf32> to vector<64x128xbf16>
    %cst_42 = arith.constant dense<0.000000e+00> : vector<64x128xf32>
    %67 = tpu.matmul %65, %66, %cst_42 {dimension_numbers = #tpu.dot_dimension_numbers<[1], [0], [0], [1], [0, 0, 1, 1], [], []>} : vector<64x64xbf16>, vector<64x128xbf16>, vector<64x128xf32> -> vector<64x128xf32>
    %c0_43 = arith.constant 0 : index
    %c0_44 = arith.constant 0 : index
    %68 = vector.load %arg3[%c0_43, %c0_44] : memref<64x1xf32, #tpu.memory_space<vmem>>, vector<64x1xf32>
    %69 = vector.broadcast %68 : vector<64x1xf32> to vector<64x128xf32>
    %70 = arith.mulf %67, %69 : vector<64x128xf32>
    %71 = arith.index_cast %c2_i32 : i32 to index
    %c0_45 = arith.constant 0 : index
    %c0_46 = arith.constant 0 : index
    %72 = vector.load %arg4[%71, %c0_45, %c0_46] : memref<4x256x128xf32, #tpu.memory_space<vmem>>, vector<1x256x128xf32>
    %73 = vector.shape_cast %72 : vector<1x256x128xf32> to vector<256x128xf32>
    %74 = vector.extract_strided_slice %73 {offsets = [0, 0], sizes = [128, 128], strides = [1, 1]} : vector<256x128xf32> to vector<128x128xf32>
    %cst_47 = arith.constant dense<0.000000e+00> : vector<64x128xf32>
    %75 = tpu.matmul %64, %74, %cst_47 {dimension_numbers = #tpu.dot_dimension_numbers<[1], [0], [0], [1], [0, 0, 1, 1], [], []>} : vector<64x128xf32>, vector<128x128xf32>, vector<64x128xf32> -> vector<64x128xf32>
    %76 = vector.extract_strided_slice %73 {offsets = [128, 0], sizes = [128, 128], strides = [1, 1]} : vector<256x128xf32> to vector<128x128xf32>
    %cst_48 = arith.constant dense<0.000000e+00> : vector<64x128xf32>
    %77 = tpu.matmul %70, %76, %cst_48 {dimension_numbers = #tpu.dot_dimension_numbers<[1], [0], [0], [1], [0, 0, 1, 1], [], []>} : vector<64x128xf32>, vector<128x128xf32>, vector<64x128xf32> -> vector<64x128xf32>
    %78 = arith.addf %75, %77 : vector<64x128xf32>
    %79 = arith.index_cast %c2_i32 : i32 to index
    %c0_49 = arith.constant 0 : index
    %c0_50 = arith.constant 0 : index
    %80 = vector.load %arg5[%79, %c0_49, %c0_50] : memref<4x1x128xf32, #tpu.memory_space<vmem>>, vector<1x1x128xf32>
    %81 = vector.shape_cast %80 : vector<1x1x128xf32> to vector<1x128xf32>
    %82 = vector.broadcast %81 : vector<1x128xf32> to vector<64x128xf32>
    %83 = arith.addf %78, %82 : vector<64x128xf32>
    %cst_51 = arith.constant 0.000000e+00 : f32
    %84 = vector.broadcast %cst_51 : f32 to vector<64x128xf32>
    %85 = arith.maximumf %83, %84 : vector<64x128xf32>
    %86 = arith.mulf %85, %85 : vector<64x128xf32>
    %cst_52 = arith.constant dense<0.000000e+00> : vector<64xf32>
    %87 = vector.multi_reduction <add>, %86, %cst_52 [1] : vector<64x128xf32> to vector<64xf32>
    %88 = vector.shape_cast %87 : vector<64xf32> to vector<64x1xf32>
    %cst_53 = arith.constant 1.000000e-24 : f32
    %89 = vector.broadcast %cst_53 : f32 to vector<64x1xf32>
    %90 = arith.maximumf %88, %89 : vector<64x1xf32>
    %91 = math.rsqrt %90 : vector<64x1xf32>
    %92 = vector.broadcast %91 : vector<64x1xf32> to vector<64x128xf32>
    %93 = arith.mulf %85, %92 : vector<64x128xf32>
    %c0_54 = arith.constant 0 : index
    %c0_55 = arith.constant 0 : index
    %94 = vector.load %arg7[%c0_54, %c0_55] : memref<64x128xf32, #tpu.memory_space<vmem>>, vector<64x128xf32>
    tpu.vector_store %arg7[%c0_54, %c0_55], %93 {strides = array<i32>} : memref<64x128xf32, #tpu.memory_space<vmem>>, vector<64x128xf32>,
    %c3_i32 = arith.constant 3 : i32
    %c0_56 = arith.constant 0 : index
    %c0_57 = arith.constant 0 : index
    %95 = vector.load %arg7[%c0_56, %c0_57] : memref<64x128xf32, #tpu.memory_space<vmem>>, vector<64x128xf32>
    %c0_58 = arith.constant 0 : index
    %c0_59 = arith.constant 0 : index
    %96 = vector.load %arg1[%c0_58, %c0_59] : memref<64x64xbf16, #tpu.memory_space<vmem>>, vector<64x64xbf16>
    %97 = arith.truncf %95 : vector<64x128xf32> to vector<64x128xbf16>
    %cst_60 = arith.constant dense<0.000000e+00> : vector<64x128xf32>
    %98 = tpu.matmul %96, %97, %cst_60 {dimension_numbers = #tpu.dot_dimension_numbers<[1], [0], [0], [1], [0, 0, 1, 1], [], []>} : vector<64x64xbf16>, vector<64x128xbf16>, vector<64x128xf32> -> vector<64x128xf32>
    %c0_61 = arith.constant 0 : index
    %c0_62 = arith.constant 0 : index
    %99 = vector.load %arg3[%c0_61, %c0_62] : memref<64x1xf32, #tpu.memory_space<vmem>>, vector<64x1xf32>
    %100 = vector.broadcast %99 : vector<64x1xf32> to vector<64x128xf32>
    %101 = arith.mulf %98, %100 : vector<64x128xf32>
    %c3 = arith.constant 3 : index
    %c0_63 = arith.constant 0 : index
    %c0_64 = arith.constant 0 : index
    %102 = vector.load %arg4[%c3, %c0_63, %c0_64] : memref<4x256x128xf32, #tpu.memory_space<vmem>>, vector<1x256x128xf32>
    %103 = vector.shape_cast %102 : vector<1x256x128xf32> to vector<256x128xf32>
    %104 = vector.extract_strided_slice %103 {offsets = [0, 0], sizes = [128, 128], strides = [1, 1]} : vector<256x128xf32> to vector<128x128xf32>
    %cst_65 = arith.constant dense<0.000000e+00> : vector<64x128xf32>
    %105 = tpu.matmul %95, %104, %cst_65 {dimension_numbers = #tpu.dot_dimension_numbers<[1], [0], [0], [1], [0, 0, 1, 1], [], []>} : vector<64x128xf32>, vector<128x128xf32>, vector<64x128xf32> -> vector<64x128xf32>
    %106 = vector.extract_strided_slice %103 {offsets = [128, 0], sizes = [128, 128], strides = [1, 1]} : vector<256x128xf32> to vector<128x128xf32>
    %cst_66 = arith.constant dense<0.000000e+00> : vector<64x128xf32>
    %107 = tpu.matmul %101, %106, %cst_66 {dimension_numbers = #tpu.dot_dimension_numbers<[1], [0], [0], [1], [0, 0, 1, 1], [], []>} : vector<64x128xf32>, vector<128x128xf32>, vector<64x128xf32> -> vector<64x128xf32>
    %108 = arith.addf %105, %107 : vector<64x128xf32>
    %c3_67 = arith.constant 3 : index
    %c0_68 = arith.constant 0 : index
    %c0_69 = arith.constant 0 : index
    %109 = vector.load %arg5[%c3_67, %c0_68, %c0_69] : memref<4x1x128xf32, #tpu.memory_space<vmem>>, vector<1x1x128xf32>
    %110 = vector.shape_cast %109 : vector<1x1x128xf32> to vector<1x128xf32>
    %111 = vector.broadcast %110 : vector<1x128xf32> to vector<64x128xf32>
    %112 = arith.addf %108, %111 : vector<64x128xf32>
    %c0_70 = arith.constant 0 : index
    %c0_71 = arith.constant 0 : index
    %113 = vector.load %arg6[%c0_70, %c0_71] : memref<64x128xf32, #tpu.memory_space<vmem>>, vector<64x128xf32>
    tpu.vector_store %arg6[%c0_70, %c0_71], %112 {strides = array<i32>} : memref<64x128xf32, #tpu.memory_space<vmem>>, vector<64x128xf32>,
    return
  }
  func.func @transform_0(%arg0: i32) -> (i32, i32) {
    %c0_i32 = arith.constant 0 : i32
    %c0_i32_0 = arith.constant 0 : i32
    %c0_i32_1 = arith.constant 0 : i32
    return %c0_i32, %c0_i32_0 : i32, i32
  }
  func.func @transform_1(%arg0: i32) -> (i32, i32) {
    %c0_i32 = arith.constant 0 : i32
    %c0_i32_0 = arith.constant 0 : i32
    %c0_i32_1 = arith.constant 0 : i32
    return %c0_i32, %c0_i32_0 : i32, i32
  }
  func.func @transform_2(%arg0: i32) -> (i32, i32) {
    %c0_i32 = arith.constant 0 : i32
    %c0_i32_0 = arith.constant 0 : i32
    %c0_i32_1 = arith.constant 0 : i32
    return %c0_i32, %c0_i32_0 : i32, i32
  }
  func.func @transform_3(%arg0: i32) -> (i32, i32, i32) {
    %c0_i32 = arith.constant 0 : i32
    %c0_i32_0 = arith.constant 0 : i32
    %c0_i32_1 = arith.constant 0 : i32
    %c0_i32_2 = arith.constant 0 : i32
    return %c0_i32, %c0_i32_0, %c0_i32_1 : i32, i32, i32
  }
  func.func @transform_4(%arg0: i32) -> (i32, i32, i32) {
    %c0_i32 = arith.constant 0 : i32
    %c0_i32_0 = arith.constant 0 : i32
    %c0_i32_1 = arith.constant 0 : i32
    %c0_i32_2 = arith.constant 0 : i32
    return %c0_i32, %c0_i32_0, %c0_i32_1 : i32, i32, i32
  }
  func.func @transform_5(%arg0: i32) -> (i32, i32) {
    %c0_i32 = arith.constant 0 : i32
    %c0_i32_0 = arith.constant 0 : i32
    %c0_i32_1 = arith.constant 0 : i32
    return %c0_i32, %c0_i32_0 : i32, i32
  }
}

module attributes {stable_mosaic.version = 11 : i64} {
  func.func @_gcn_resident_kernel(%arg0: i32, %arg1: memref<64x64xbf16, #tpu.memory_space<vmem>>, %arg2: memref<64x128xf32, #tpu.memory_space<vmem>>, %arg3: memref<64x1xf32, #tpu.memory_space<vmem>>, %arg4: memref<4x256x128xf32, #tpu.memory_space<vmem>>, %arg5: memref<4x1x128xf32, #tpu.memory_space<vmem>>, %arg6: memref<64x128xf32, #tpu.memory_space<vmem>>, %arg7: memref<64x128xf32, #tpu.memory_space<vmem>>) attributes {dimension_semantics = [#tpu.dimension_semantics<arbitrary>], iteration_bounds = array<i64: 1>, scalar_prefetch = 0 : i64, scratch_operands = 1 : i64, tpu.core_type = #tpu.core_type<tc>, window_params = [{pipeline_mode = #tpu.pipeline_mode<synchronous>, transform_indices = @transform_0, window_bounds = array<i64: 64, 64>}, {pipeline_mode = #tpu.pipeline_mode<synchronous>, transform_indices = @transform_1, window_bounds = array<i64: 64, 128>}, {pipeline_mode = #tpu.pipeline_mode<synchronous>, transform_indices = @transform_2, window_bounds = array<i64: 64, 1>}, {pipeline_mode = #tpu.pipeline_mode<synchronous>, transform_indices = @transform_3, window_bounds = array<i64: 4, 256, 128>}, {pipeline_mode = #tpu.pipeline_mode<synchronous>, transform_indices = @transform_4, window_bounds = array<i64: 4, 1, 128>}, {pipeline_mode = #tpu.pipeline_mode<synchronous>, transform_indices = @transform_5, window_bounds = array<i64: 64, 128>}]} {
    %c0 = arith.constant 0 : index
    %c0_0 = arith.constant 0 : index
    %0 = vector.load %arg2[%c0, %c0_0] : memref<64x128xf32, #tpu.memory_space<vmem>>, vector<64x128xf32>
    %c0_1 = arith.constant 0 : index
    %c0_2 = arith.constant 0 : index
    %1 = vector.load %arg7[%c0_1, %c0_2] : memref<64x128xf32, #tpu.memory_space<vmem>>, vector<64x128xf32>
    tpu.vector_store %arg7[%c0_1, %c0_2], %0 {strides = array<i32>} : memref<64x128xf32, #tpu.memory_space<vmem>>, vector<64x128xf32>,
    %c0_i32 = arith.constant 0 : i32
    %c0_3 = arith.constant 0 : index
    %c0_4 = arith.constant 0 : index
    %2 = vector.load %arg7[%c0_3, %c0_4] : memref<64x128xf32, #tpu.memory_space<vmem>>, vector<64x128xf32>
    %c0_5 = arith.constant 0 : index
    %c0_6 = arith.constant 0 : index
    %3 = vector.load %arg1[%c0_5, %c0_6] : memref<64x64xbf16, #tpu.memory_space<vmem>>, vector<64x64xbf16>
    %4 = arith.truncf %2 : vector<64x128xf32> to vector<64x128xbf16>
    %cst = arith.constant dense<0.000000e+00> : vector<64x128xf32>
    %5 = tpu.matmul %3, %4, %cst {dimension_numbers = #tpu.dot_dimension_numbers<[1], [0], [0], [1], [0, 0, 1, 1], [], []>} : vector<64x64xbf16>, vector<64x128xbf16>, vector<64x128xf32> -> vector<64x128xf32>
    %c0_7 = arith.constant 0 : index
    %c0_8 = arith.constant 0 : index
    %6 = vector.load %arg3[%c0_7, %c0_8] : memref<64x1xf32, #tpu.memory_space<vmem>>, vector<64x1xf32>
    %7 = vector.broadcast %6 : vector<64x1xf32> to vector<64x128xf32>
    %8 = arith.mulf %5, %7 : vector<64x128xf32>
    %9 = arith.index_cast %c0_i32 : i32 to index
    %c0_9 = arith.constant 0 : index
    %c0_10 = arith.constant 0 : index
    %10 = vector.load %arg4[%9, %c0_9, %c0_10] : memref<4x256x128xf32, #tpu.memory_space<vmem>>, vector<1x256x128xf32>
    %11 = vector.shape_cast %10 : vector<1x256x128xf32> to vector<256x128xf32>
    %12 = vector.extract_strided_slice %11 {offsets = [0, 0], sizes = [128, 128], strides = [1, 1]} : vector<256x128xf32> to vector<128x128xf32>
    %cst_11 = arith.constant dense<0.000000e+00> : vector<64x128xf32>
    %13 = tpu.matmul %2, %12, %cst_11 {dimension_numbers = #tpu.dot_dimension_numbers<[1], [0], [0], [1], [0, 0, 1, 1], [], []>} : vector<64x128xf32>, vector<128x128xf32>, vector<64x128xf32> -> vector<64x128xf32>
    %14 = vector.extract_strided_slice %11 {offsets = [128, 0], sizes = [128, 128], strides = [1, 1]} : vector<256x128xf32> to vector<128x128xf32>
    %cst_12 = arith.constant dense<0.000000e+00> : vector<64x128xf32>
    %15 = tpu.matmul %8, %14, %cst_12 {dimension_numbers = #tpu.dot_dimension_numbers<[1], [0], [0], [1], [0, 0, 1, 1], [], []>} : vector<64x128xf32>, vector<128x128xf32>, vector<64x128xf32> -> vector<64x128xf32>
    %16 = arith.addf %13, %15 : vector<64x128xf32>
    %17 = arith.index_cast %c0_i32 : i32 to index
    %c0_13 = arith.constant 0 : index
    %c0_14 = arith.constant 0 : index
    %18 = vector.load %arg5[%17, %c0_13, %c0_14] : memref<4x1x128xf32, #tpu.memory_space<vmem>>, vector<1x1x128xf32>
    %19 = vector.shape_cast %18 : vector<1x1x128xf32> to vector<1x128xf32>
    %20 = vector.broadcast %19 : vector<1x128xf32> to vector<64x128xf32>
    %21 = arith.addf %16, %20 : vector<64x128xf32>
    %cst_15 = arith.constant 0.000000e+00 : f32
    %22 = vector.broadcast %cst_15 : f32 to vector<64x128xf32>
    %23 = arith.maximumf %21, %22 : vector<64x128xf32>
    %24 = arith.mulf %23, %23 : vector<64x128xf32>
    %cst_16 = arith.constant dense<0.000000e+00> : vector<64xf32>
    %25 = vector.multi_reduction <add>, %24, %cst_16 [1] : vector<64x128xf32> to vector<64xf32>
    %26 = vector.shape_cast %25 : vector<64xf32> to vector<64x1xf32>
    %cst_17 = arith.constant 1.000000e-24 : f32
    %27 = vector.broadcast %cst_17 : f32 to vector<64x1xf32>
    %28 = arith.maximumf %26, %27 : vector<64x1xf32>
    %29 = math.rsqrt %28 : vector<64x1xf32>
    %30 = vector.broadcast %29 : vector<64x1xf32> to vector<64x128xf32>
    %31 = arith.mulf %23, %30 : vector<64x128xf32>
    %c0_18 = arith.constant 0 : index
    %c0_19 = arith.constant 0 : index
    %32 = vector.load %arg7[%c0_18, %c0_19] : memref<64x128xf32, #tpu.memory_space<vmem>>, vector<64x128xf32>
    tpu.vector_store %arg7[%c0_18, %c0_19], %31 {strides = array<i32>} : memref<64x128xf32, #tpu.memory_space<vmem>>, vector<64x128xf32>,
    %c1_i32 = arith.constant 1 : i32
    %c0_20 = arith.constant 0 : index
    %c0_21 = arith.constant 0 : index
    %33 = vector.load %arg7[%c0_20, %c0_21] : memref<64x128xf32, #tpu.memory_space<vmem>>, vector<64x128xf32>
    %c0_22 = arith.constant 0 : index
    %c0_23 = arith.constant 0 : index
    %34 = vector.load %arg1[%c0_22, %c0_23] : memref<64x64xbf16, #tpu.memory_space<vmem>>, vector<64x64xbf16>
    %35 = arith.truncf %33 : vector<64x128xf32> to vector<64x128xbf16>
    %cst_24 = arith.constant dense<0.000000e+00> : vector<64x128xf32>
    %36 = tpu.matmul %34, %35, %cst_24 {dimension_numbers = #tpu.dot_dimension_numbers<[1], [0], [0], [1], [0, 0, 1, 1], [], []>} : vector<64x64xbf16>, vector<64x128xbf16>, vector<64x128xf32> -> vector<64x128xf32>
    %c0_25 = arith.constant 0 : index
    %c0_26 = arith.constant 0 : index
    %37 = vector.load %arg3[%c0_25, %c0_26] : memref<64x1xf32, #tpu.memory_space<vmem>>, vector<64x1xf32>
    %38 = vector.broadcast %37 : vector<64x1xf32> to vector<64x128xf32>
    %39 = arith.mulf %36, %38 : vector<64x128xf32>
    %40 = arith.index_cast %c1_i32 : i32 to index
    %c0_27 = arith.constant 0 : index
    %c0_28 = arith.constant 0 : index
    %41 = vector.load %arg4[%40, %c0_27, %c0_28] : memref<4x256x128xf32, #tpu.memory_space<vmem>>, vector<1x256x128xf32>
    %42 = vector.shape_cast %41 : vector<1x256x128xf32> to vector<256x128xf32>
    %43 = vector.extract_strided_slice %42 {offsets = [0, 0], sizes = [128, 128], strides = [1, 1]} : vector<256x128xf32> to vector<128x128xf32>
    %cst_29 = arith.constant dense<0.000000e+00> : vector<64x128xf32>
    %44 = tpu.matmul %33, %43, %cst_29 {dimension_numbers = #tpu.dot_dimension_numbers<[1], [0], [0], [1], [0, 0, 1, 1], [], []>} : vector<64x128xf32>, vector<128x128xf32>, vector<64x128xf32> -> vector<64x128xf32>
    %45 = vector.extract_strided_slice %42 {offsets = [128, 0], sizes = [128, 128], strides = [1, 1]} : vector<256x128xf32> to vector<128x128xf32>
    %cst_30 = arith.constant dense<0.000000e+00> : vector<64x128xf32>
    %46 = tpu.matmul %39, %45, %cst_30 {dimension_numbers = #tpu.dot_dimension_numbers<[1], [0], [0], [1], [0, 0, 1, 1], [], []>} : vector<64x128xf32>, vector<128x128xf32>, vector<64x128xf32> -> vector<64x128xf32>
    %47 = arith.addf %44, %46 : vector<64x128xf32>
    %48 = arith.index_cast %c1_i32 : i32 to index
    %c0_31 = arith.constant 0 : index
    %c0_32 = arith.constant 0 : index
    %49 = vector.load %arg5[%48, %c0_31, %c0_32] : memref<4x1x128xf32, #tpu.memory_space<vmem>>, vector<1x1x128xf32>
    %50 = vector.shape_cast %49 : vector<1x1x128xf32> to vector<1x128xf32>
    %51 = vector.broadcast %50 : vector<1x128xf32> to vector<64x128xf32>
    %52 = arith.addf %47, %51 : vector<64x128xf32>
    %cst_33 = arith.constant 0.000000e+00 : f32
    %53 = vector.broadcast %cst_33 : f32 to vector<64x128xf32>
    %54 = arith.maximumf %52, %53 : vector<64x128xf32>
    %55 = arith.mulf %54, %54 : vector<64x128xf32>
    %cst_34 = arith.constant dense<0.000000e+00> : vector<64xf32>
    %56 = vector.multi_reduction <add>, %55, %cst_34 [1] : vector<64x128xf32> to vector<64xf32>
    %57 = vector.shape_cast %56 : vector<64xf32> to vector<64x1xf32>
    %cst_35 = arith.constant 1.000000e-24 : f32
    %58 = vector.broadcast %cst_35 : f32 to vector<64x1xf32>
    %59 = arith.maximumf %57, %58 : vector<64x1xf32>
    %60 = math.rsqrt %59 : vector<64x1xf32>
    %61 = vector.broadcast %60 : vector<64x1xf32> to vector<64x128xf32>
    %62 = arith.mulf %54, %61 : vector<64x128xf32>
    %c0_36 = arith.constant 0 : index
    %c0_37 = arith.constant 0 : index
    %63 = vector.load %arg7[%c0_36, %c0_37] : memref<64x128xf32, #tpu.memory_space<vmem>>, vector<64x128xf32>
    tpu.vector_store %arg7[%c0_36, %c0_37], %62 {strides = array<i32>} : memref<64x128xf32, #tpu.memory_space<vmem>>, vector<64x128xf32>,
    %c2_i32 = arith.constant 2 : i32
    %c0_38 = arith.constant 0 : index
    %c0_39 = arith.constant 0 : index
    %64 = vector.load %arg7[%c0_38, %c0_39] : memref<64x128xf32, #tpu.memory_space<vmem>>, vector<64x128xf32>
    %c0_40 = arith.constant 0 : index
    %c0_41 = arith.constant 0 : index
    %65 = vector.load %arg1[%c0_40, %c0_41] : memref<64x64xbf16, #tpu.memory_space<vmem>>, vector<64x64xbf16>
    %66 = arith.truncf %64 : vector<64x128xf32> to vector<64x128xbf16>
    %cst_42 = arith.constant dense<0.000000e+00> : vector<64x128xf32>
    %67 = tpu.matmul %65, %66, %cst_42 {dimension_numbers = #tpu.dot_dimension_numbers<[1], [0], [0], [1], [0, 0, 1, 1], [], []>} : vector<64x64xbf16>, vector<64x128xbf16>, vector<64x128xf32> -> vector<64x128xf32>
    %c0_43 = arith.constant 0 : index
    %c0_44 = arith.constant 0 : index
    %68 = vector.load %arg3[%c0_43, %c0_44] : memref<64x1xf32, #tpu.memory_space<vmem>>, vector<64x1xf32>
    %69 = vector.broadcast %68 : vector<64x1xf32> to vector<64x128xf32>
    %70 = arith.mulf %67, %69 : vector<64x128xf32>
    %71 = arith.index_cast %c2_i32 : i32 to index
    %c0_45 = arith.constant 0 : index
    %c0_46 = arith.constant 0 : index
    %72 = vector.load %arg4[%71, %c0_45, %c0_46] : memref<4x256x128xf32, #tpu.memory_space<vmem>>, vector<1x256x128xf32>
    %73 = vector.shape_cast %72 : vector<1x256x128xf32> to vector<256x128xf32>
    %74 = vector.extract_strided_slice %73 {offsets = [0, 0], sizes = [128, 128], strides = [1, 1]} : vector<256x128xf32> to vector<128x128xf32>
    %cst_47 = arith.constant dense<0.000000e+00> : vector<64x128xf32>
    %75 = tpu.matmul %64, %74, %cst_47 {dimension_numbers = #tpu.dot_dimension_numbers<[1], [0], [0], [1], [0, 0, 1, 1], [], []>} : vector<64x128xf32>, vector<128x128xf32>, vector<64x128xf32> -> vector<64x128xf32>
    %76 = vector.extract_strided_slice %73 {offsets = [128, 0], sizes = [128, 128], strides = [1, 1]} : vector<256x128xf32> to vector<128x128xf32>
    %cst_48 = arith.constant dense<0.000000e+00> : vector<64x128xf32>
    %77 = tpu.matmul %70, %76, %cst_48 {dimension_numbers = #tpu.dot_dimension_numbers<[1], [0], [0], [1], [0, 0, 1, 1], [], []>} : vector<64x128xf32>, vector<128x128xf32>, vector<64x128xf32> -> vector<64x128xf32>
    %78 = arith.addf %75, %77 : vector<64x128xf32>
    %79 = arith.index_cast %c2_i32 : i32 to index
    %c0_49 = arith.constant 0 : index
    %c0_50 = arith.constant 0 : index
    %80 = vector.load %arg5[%79, %c0_49, %c0_50] : memref<4x1x128xf32, #tpu.memory_space<vmem>>, vector<1x1x128xf32>
    %81 = vector.shape_cast %80 : vector<1x1x128xf32> to vector<1x128xf32>
    %82 = vector.broadcast %81 : vector<1x128xf32> to vector<64x128xf32>
    %83 = arith.addf %78, %82 : vector<64x128xf32>
    %cst_51 = arith.constant 0.000000e+00 : f32
    %84 = vector.broadcast %cst_51 : f32 to vector<64x128xf32>
    %85 = arith.maximumf %83, %84 : vector<64x128xf32>
    %86 = arith.mulf %85, %85 : vector<64x128xf32>
    %cst_52 = arith.constant dense<0.000000e+00> : vector<64xf32>
    %87 = vector.multi_reduction <add>, %86, %cst_52 [1] : vector<64x128xf32> to vector<64xf32>
    %88 = vector.shape_cast %87 : vector<64xf32> to vector<64x1xf32>
    %cst_53 = arith.constant 1.000000e-24 : f32
    %89 = vector.broadcast %cst_53 : f32 to vector<64x1xf32>
    %90 = arith.maximumf %88, %89 : vector<64x1xf32>
    %91 = math.rsqrt %90 : vector<64x1xf32>
    %92 = vector.broadcast %91 : vector<64x1xf32> to vector<64x128xf32>
    %93 = arith.mulf %85, %92 : vector<64x128xf32>
    %c0_54 = arith.constant 0 : index
    %c0_55 = arith.constant 0 : index
    %94 = vector.load %arg7[%c0_54, %c0_55] : memref<64x128xf32, #tpu.memory_space<vmem>>, vector<64x128xf32>
    tpu.vector_store %arg7[%c0_54, %c0_55], %93 {strides = array<i32>} : memref<64x128xf32, #tpu.memory_space<vmem>>, vector<64x128xf32>,
    %c3_i32 = arith.constant 3 : i32
    %c0_56 = arith.constant 0 : index
    %c0_57 = arith.constant 0 : index
    %95 = vector.load %arg7[%c0_56, %c0_57] : memref<64x128xf32, #tpu.memory_space<vmem>>, vector<64x128xf32>
    %c0_58 = arith.constant 0 : index
    %c0_59 = arith.constant 0 : index
    %96 = vector.load %arg1[%c0_58, %c0_59] : memref<64x64xbf16, #tpu.memory_space<vmem>>, vector<64x64xbf16>
    %97 = arith.truncf %95 : vector<64x128xf32> to vector<64x128xbf16>
    %cst_60 = arith.constant dense<0.000000e+00> : vector<64x128xf32>
    %98 = tpu.matmul %96, %97, %cst_60 {dimension_numbers = #tpu.dot_dimension_numbers<[1], [0], [0], [1], [0, 0, 1, 1], [], []>} : vector<64x64xbf16>, vector<64x128xbf16>, vector<64x128xf32> -> vector<64x128xf32>
    %c0_61 = arith.constant 0 : index
    %c0_62 = arith.constant 0 : index
    %99 = vector.load %arg3[%c0_61, %c0_62] : memref<64x1xf32, #tpu.memory_space<vmem>>, vector<64x1xf32>
    %100 = vector.broadcast %99 : vector<64x1xf32> to vector<64x128xf32>
    %101 = arith.mulf %98, %100 : vector<64x128xf32>
    %c3 = arith.constant 3 : index
    %c0_63 = arith.constant 0 : index
    %c0_64 = arith.constant 0 : index
    %102 = vector.load %arg4[%c3, %c0_63, %c0_64] : memref<4x256x128xf32, #tpu.memory_space<vmem>>, vector<1x256x128xf32>
    %103 = vector.shape_cast %102 : vector<1x256x128xf32> to vector<256x128xf32>
    %104 = vector.extract_strided_slice %103 {offsets = [0, 0], sizes = [128, 128], strides = [1, 1]} : vector<256x128xf32> to vector<128x128xf32>
    %cst_65 = arith.constant dense<0.000000e+00> : vector<64x128xf32>
    %105 = tpu.matmul %95, %104, %cst_65 {dimension_numbers = #tpu.dot_dimension_numbers<[1], [0], [0], [1], [0, 0, 1, 1], [], []>} : vector<64x128xf32>, vector<128x128xf32>, vector<64x128xf32> -> vector<64x128xf32>
    %106 = vector.extract_strided_slice %103 {offsets = [128, 0], sizes = [128, 128], strides = [1, 1]} : vector<256x128xf32> to vector<128x128xf32>
    %cst_66 = arith.constant dense<0.000000e+00> : vector<64x128xf32>
    %107 = tpu.matmul %101, %106, %cst_66 {dimension_numbers = #tpu.dot_dimension_numbers<[1], [0], [0], [1], [0, 0, 1, 1], [], []>} : vector<64x128xf32>, vector<128x128xf32>, vector<64x128xf32> -> vector<64x128xf32>
    %108 = arith.addf %105, %107 : vector<64x128xf32>
    %c3_67 = arith.constant 3 : index
    %c0_68 = arith.constant 0 : index
    %c0_69 = arith.constant 0 : index
    %109 = vector.load %arg5[%c3_67, %c0_68, %c0_69] : memref<4x1x128xf32, #tpu.memory_space<vmem>>, vector<1x1x128xf32>
    %110 = vector.shape_cast %109 : vector<1x1x128xf32> to vector<1x128xf32>
    %111 = vector.broadcast %110 : vector<1x128xf32> to vector<64x128xf32>
    %112 = arith.addf %108, %111 : vector<64x128xf32>
    %c0_70 = arith.constant 0 : index
    %c0_71 = arith.constant 0 : index
    %113 = vector.load %arg6[%c0_70, %c0_71] : memref<64x128xf32, #tpu.memory_space<vmem>>, vector<64x128xf32>
    tpu.vector_store %arg6[%c0_70, %c0_71], %112 {strides = array<i32>} : memref<64x128xf32, #tpu.memory_space<vmem>>, vector<64x128xf32>,
    return
  }
  func.func @transform_0(%arg0: i32) -> (i32, i32) {
    %c0_i32 = arith.constant 0 : i32
    %c0_i32_0 = arith.constant 0 : i32
    %c0_i32_1 = arith.constant 0 : i32
    return %c0_i32, %c0_i32_0 : i32, i32
  }
  func.func @transform_1(%arg0: i32) -> (i32, i32) {
    %c0_i32 = arith.constant 0 : i32
    %c0_i32_0 = arith.constant 0 : i32
    %c0_i32_1 = arith.constant 0 : i32
    return %c0_i32, %c0_i32_0 : i32, i32
  }
  func.func @transform_2(%arg0: i32) -> (i32, i32) {
    %c0_i32 = arith.constant 0 : i32
    %c0_i32_0 = arith.constant 0 : i32
    %c0_i32_1 = arith.constant 0 : i32
    return %c0_i32, %c0_i32_0 : i32, i32
  }
  func.func @transform_3(%arg0: i32) -> (i32, i32, i32) {
    %c0_i32 = arith.constant 0 : i32
    %c0_i32_0 = arith.constant 0 : i32
    %c0_i32_1 = arith.constant 0 : i32
    %c0_i32_2 = arith.constant 0 : i32
    return %c0_i32, %c0_i32_0, %c0_i32_1 : i32, i32, i32
  }
  func.func @transform_4(%arg0: i32) -> (i32, i32, i32) {
    %c0_i32 = arith.constant 0 : i32
    %c0_i32_0 = arith.constant 0 : i32
    %c0_i32_1 = arith.constant 0 : i32
    %c0_i32_2 = arith.constant 0 : i32
    return %c0_i32, %c0_i32_0, %c0_i32_1 : i32, i32, i32
  }
  func.func @transform_5(%arg0: i32) -> (i32, i32) {
    %c0_i32 = arith.constant 0 : i32
    %c0_i32_0 = arith.constant 0 : i32
    %c0_i32_1 = arith.constant 0 : i32
    return %c0_i32, %c0_i32_0 : i32, i32
  }
}

</mosaic_0001>

<llo_original>
// kernel: tpu_custom_call.1
$region0: #{tpu_custom_call.1}
  #allocation0 [shape = 'u32[]', space=smem, size = 0x4, offset = 0x4, fixed_abs, tag = 'smem constant byte address 0x4 - core index']
  #allocation1 [shape = 'u32[144,128]{1,0:T(1,128)}', space=vmem, size = 0x12000, scoped, tag = 'internal scratch']
  #allocation2 [shape = 'f32[64,128]{1,0:T(8,128)}', space=vmem, size = 0x8000, scoped, tag = 'scratch operand']
  %s0 = inlined_call_operand.hbm [shape: bf16[64,64], index: 0, kind: input, shape index: {}]
  %s1 = inlined_call_operand.vmem [shape: f32[64,128], index: 1, kind: input, shape index: {}]
  %s2 = inlined_call_operand.vmem [shape: f32[64,1], index: 2, kind: input, shape index: {}]
  %s3 = inlined_call_operand.hbm [shape: f32[4,256,128], index: 3, kind: input, shape index: {}]
  %s4 = inlined_call_operand.vmem [shape: f32[4,1,128], index: 4, kind: input, shape index: {}]
  %s5 = inlined_call_operand.hbm [shape: f32[64,128], index: 5, kind: output, shape index: {}]
  %s6 = sld [smem:[#allocation0]]
  $region38: #{tpu_custom_call.1} parent=0
    _
  %s8 = ssub.s32 1, %s6
  %s9 = scalar_select 0, %s8, %s6
  $region1: #{tpu_custom_call.1} parent=0
    #allocation3 [shape = 'u8[16384]{0}', space=vmem, size = 0x4000, scoped, tag = 'input window, operand 0, single buffered']
    #allocation4 [shape = 's32[1]{0}', space=sflag, size = 0x4, scoped, tag = 'scoped memory for tpu_custom_call.1']
    #allocation5 [shape = 's32[1]{0}', space=sflag, size = 0x4, scoped, tag = 'scoped memory for tpu_custom_call.1']
    #allocation6 [shape = 'u8[524288]{0}', space=vmem, size = 0x80000, scoped, tag = 'input window, operand 3, single buffered']
    #allocation7 [shape = 's32[1]{0}', space=sflag, size = 0x4, scoped, tag = 'scoped memory for tpu_custom_call.1']
    #allocation8 [shape = 'u8[32768]{0}', space=vmem, size = 0x8000, scoped, tag = 'output window, operand 0, single buffered']
    %10 = vsyncpa [#allocation4], 0
    %11 = vsyncpa [#allocation7], 0
    %12 = vsyncpa [#allocation5], 0
    // Predicated region
    $region2: #{tpu_custom_call.1} parent=1 // pred_check
      _
    $region3: #{tpu_custom_call.1} parent=1 // pred_check_branch
      %14 = sbr.rel (0) target = $region5
    $region4: #{tpu_custom_call.1} parent=1 // pred_region
      %s16 = ssub.s32 512, 512
      %17 = vsyncadd [#allocation4], %s16
      %s18 = sshll.u32 [#allocation3], 4
      %s19 = int_to_ptr.vmem [resolvable:$true] %s18
      %24 = dma.hbm_to_vmem [thread:$0]  %s0, 512, %s19, [#allocation4], 64, 64, 4
    $region5: #{tpu_custom_call.1} parent=1 // pred_fallthru
      _
    // Predicated region
    $region6: #{tpu_custom_call.1} parent=1 // pred_check
      _
    $region7: #{tpu_custom_call.1} parent=1 // pred_check_branch
      %26 = sbr.rel (0) target = $region9
    $region8: #{tpu_custom_call.1} parent=1 // pred_region
      _
    $region9: #{tpu_custom_call.1} parent=1 // pred_fallthru
      _
    // Predicated region
    $region10: #{tpu_custom_call.1} parent=1 // pred_check
      _
    $region11: #{tpu_custom_call.1} parent=1 // pred_check_branch
      %28 = sbr.rel (0) target = $region13
    $region12: #{tpu_custom_call.1} parent=1 // pred_region
      _
    $region13: #{tpu_custom_call.1} parent=1 // pred_fallthru
      _
    // Predicated region
    $region14: #{tpu_custom_call.1} parent=1 // pred_check
      _
    $region15: #{tpu_custom_call.1} parent=1 // pred_check_branch
      %30 = sbr.rel (0) target = $region17
    $region16: #{tpu_custom_call.1} parent=1 // pred_region
      %s32 = ssub.s32 16384, 16384
      %33 = vsyncadd [#allocation7], %s32
      %s34 = sshll.u32 [#allocation6], 4
      %s35 = int_to_ptr.vmem [resolvable:$true] %s34
      %40 = dma.hbm_to_vmem [thread:$0]  %s3, 16384, %s35, [#allocation7], 128, 128, 8
    $region17: #{tpu_custom_call.1} parent=1 // pred_fallthru
      _
    // Predicated region
    $region18: #{tpu_custom_call.1} parent=1 // pred_check
      _
    $region19: #{tpu_custom_call.1} parent=1 // pred_check_branch
      %42 = sbr.rel (0) target = $region21
    $region20: #{tpu_custom_call.1} parent=1 // pred_region
      _
    $region21: #{tpu_custom_call.1} parent=1 // pred_fallthru
      _
    // Predicated region
    $region22: #{tpu_custom_call.1} parent=1 // pred_check
      _
    $region23: #{tpu_custom_call.1} parent=1 // pred_check_branch
      %44 = sbr.rel (0) target = $region25
    $region24: #{tpu_custom_call.1} parent=1 // pred_region
      %45 = dma.done [#allocation4], 512
    $region25: #{tpu_custom_call.1} parent=1 // pred_fallthru
      _
    // Predicated region
    $region26: #{tpu_custom_call.1} parent=1 // pred_check
      _
    $region27: #{tpu_custom_call.1} parent=1 // pred_check_branch
      %47 = sbr.rel (0) target = $region29
    $region28: #{tpu_custom_call.1} parent=1 // pred_region
      %48 = dma.done [#allocation7], 16384
    $region29: #{tpu_custom_call.1} parent=1 // pred_fallthru
      _
    %v50 = vld [vmem:[%s1] sm:$0xff]
    %v51 = vld [vmem:[%s1 + $0x8] sm:$0xff]
    %v52 = vld [vmem:[%s1 + $0x10] sm:$0xff]
    %v53 = vld [vmem:[%s1 + $0x18] sm:$0xff]
    %v54 = vld [vmem:[%s1 + $0x20] sm:$0xff]
    %v55 = vld [vmem:[%s1 + $0x28] sm:$0xff]
    %v56 = vld [vmem:[%s1 + $0x30] sm:$0xff]
    %v57 = vld [vmem:[%s1 + $0x38] sm:$0xff]
    %58 = vst [vmem:[#allocation2] sm:$0xff] %v50
    %59 = vst [vmem:[#allocation2 + $0x8] sm:$0xff] %v51
    %60 = vst [vmem:[#allocation2 + $0x10] sm:$0xff] %v52
    %61 = vst [vmem:[#allocation2 + $0x18] sm:$0xff] %v53
    %62 = vst [vmem:[#allocation2 + $0x20] sm:$0xff] %v54
    %63 = vst [vmem:[#allocation2 + $0x28] sm:$0xff] %v55
    %64 = vst [vmem:[#allocation2 + $0x30] sm:$0xff] %v56
    %65 = vst [vmem:[#allocation2 + $0x38] sm:$0xff] %v57
    %v66 = vld [vmem:[#allocation2] sm:$0xff]
    %v67 = vld [vmem:[#allocation2 + $0x8] sm:$0xff]
    %v68 = vld [vmem:[#allocation2 + $0x10] sm:$0xff]
    %v69 = vld [vmem:[#allocation2 + $0x18] sm:$0xff]
    %v70 = vld [vmem:[#allocation2 + $0x20] sm:$0xff]
    %v71 = vld [vmem:[#allocation2 + $0x28] sm:$0xff]
    %v72 = vld [vmem:[#allocation2 + $0x30] sm:$0xff]
    %v73 = vld [vmem:[#allocation2 + $0x38] sm:$0xff]
    %v74 = vld [vmem:[#allocation3] sm:$0xf]
    %v75 = vld [vmem:[#allocation3 + $0x4] sm:$0xf]
    %v76 = vld [vmem:[#allocation3 + $0x8] sm:$0xf]
    %v77 = vld [vmem:[#allocation3 + $0xc] sm:$0xf]
    %v78 = vld [vmem:[#allocation3 + $0x10] sm:$0xf]
    %v79 = vld [vmem:[#allocation3 + $0x14] sm:$0xf]
    %v80 = vld [vmem:[#allocation3 + $0x18] sm:$0xf]
    %v81 = vld [vmem:[#allocation3 + $0x1c] sm:$0xf]
    %v82 = vpack.c.bf16 %v67, %v66
    %v83 = vpack.c.bf16 %v69, %v68
    %v84 = vpack.c.bf16 %v71, %v70
    %v85 = vpack.c.bf16 %v73, %v72
    %v94 = vunpack.c.l.b16 %v74
    %v95 = vunpack.c.l.b16 %v75
    %v96 = vunpack.c.l.b16 %v76
    %v97 = vunpack.c.l.b16 %v77
    %v98 = vunpack.c.l.b16 %v78
    %v99 = vunpack.c.l.b16 %v79
    %v100 = vunpack.c.l.b16 %v80
    %v101 = vunpack.c.l.b16 %v81
    %v102 = vpack.c.b16 %v95, %v94
    %v103 = vpack.c.b16 %v97, %v96
    %v104 = vpack.c.b16 %v99, %v98
    %v105 = vpack.c.b16 %v101, %v100
    %vm106 = vcmask 523264
    %v108 = vsel %vm106, %v102, 0
    %v111 = vsel %vm106, %v103, 0
    %v114 = vsel %vm106, %v104, 0
    %v117 = vsel %vm106, %v105, 0
    %119 = vmatprep.subr.bf16.mxu0 0
    %120 = vmatpush1.bf16.msra.mxu0 %v82
    %121 = vmatprep.subr.bf16.mxu0 0
    %122 = vmatpush1.bf16.msra.mxu0 %v83
    %123 = vmatprep.subr.bf16.mxu0 0
    %124 = vmatpush1.bf16.msra.mxu0 %v84
    %125 = vmatprep.subr.bf16.mxu0 0
    %126 = vmatpush1.bf16.msra.mxu0 %v85
    %127 = vmatprep.subr.bf16.mxu0 0
    %128 = vmatpush1.bf16.msra.mxu0 0
    %129 = vmatprep.subr.bf16.mxu0 0
    %130 = vmatpush1.bf16.msra.mxu0 0
    %131 = vmatprep.subr.bf16.mxu0 0
    %132 = vmatpush1.bf16.msra.mxu0 0
    %133 = vmatprep.subr.bf16.mxu0 0
    %134 = vmatpush1.bf16.msra.mxu0 0
    %135 = vmatprep.subr.bf16.mxu0 0
    %136 = vmatpush1.bf16.msra.mxu0 0
    %137 = vmatprep.subr.bf16.mxu0 0
    %138 = vmatpush1.bf16.msra.mxu0 0
    %139 = vmatprep.subr.bf16.mxu0 0
    %140 = vmatpush1.bf16.msra.mxu0 0
    %141 = vmatprep.subr.bf16.mxu0 0
    %142 = vmatpush1.bf16.msra.mxu0 0
    %143 = vmatprep.subr.bf16.mxu0 0
    %144 = vmatpush1.bf16.msra.mxu0 0
    %145 = vmatprep.subr.bf16.mxu0 0
    %146 = vmatpush1.bf16.msra.mxu0 0
    %147 = vmatprep.subr.bf16.mxu0 0
    %148 = vmatpush1.bf16.msra.mxu0 0
    %149 = vmatprep.subr.bf16.mxu0 0
    %150 = vmatpush1.bf16.msra.mxu0 0
    %151 = vmatprep.mubr.bf16.mxu0 0
    %152 = vmatmul.mubr.bf16.gmra.mrb[0].mxu0 %v108
    %v153 = vpop.f32.mrb[0].mxu0
    %v154 = vadd.f32 0.0, %v153
    %v155 = vpop.f32.mrb[0].mxu0
    %v156 = vpop.f32.mrb[0].mxu0
    %v157 = vadd.f32 0.0, %v156
    %v158 = vpop.f32.mrb[0].mxu0
    %159 = vmatprep.mubr.bf16.mxu0 0
    %160 = vmatmul.mubr.bf16.gmra.mrb[0].mxu0 %v111
    %v161 = vpop.f32.mrb[0].mxu0
    %v162 = vadd.f32 0.0, %v161
    %v163 = vpop.f32.mrb[0].mxu0
    %v164 = vpop.f32.mrb[0].mxu0
    %v165 = vadd.f32 0.0, %v164
    %v166 = vpop.f32.mrb[0].mxu0
    %167 = vmatprep.mubr.bf16.mxu0 0
    %168 = vmatmul.mubr.bf16.gmra.mrb[0].mxu0 %v114
    %v169 = vpop.f32.mrb[0].mxu0
    %v170 = vadd.f32 0.0, %v169
    %v171 = vpop.f32.mrb[0].mxu0
    %v172 = vpop.f32.mrb[0].mxu0
    %v173 = vadd.f32 0.0, %v172
    %v174 = vpop.f32.mrb[0].mxu0
    %175 = vmatprep.mubr.bf16.mxu0 0
    %176 = vmatmul.mubr.bf16.gmra.mrb[0].mxu0 %v117
    %v177 = vpop.f32.mrb[0].mxu0
    %v178 = vadd.f32 0.0, %v177
    %v179 = vpop.f32.mrb[0].mxu0
    %v180 = vpop.f32.mrb[0].mxu0
    %v181 = vadd.f32 0.0, %v180
    %v182 = vpop.f32.mrb[0].mxu0
    %183 = vdwg.mxu0
    %v184 = vld [vmem:[%s2] sm:$0xff]
    %v185 = vld [vmem:[%s2 + $0x8] sm:$0xff]
    %v186 = vld [vmem:[%s2 + $0x10] sm:$0xff]
    %v187 = vld [vmem:[%s2 + $0x18] sm:$0xff]
    %v188 = vld [vmem:[%s2 + $0x20] sm:$0xff]
    %v189 = vld [vmem:[%s2 + $0x28] sm:$0xff]
    %v190 = vld [vmem:[%s2 + $0x30] sm:$0xff]
    %v191 = vld [vmem:[%s2 + $0x38] sm:$0xff]
    %193 = vset.pattern.permute.xlu0 0
    %194 = vperm.xlu0 %193, %v184
    %v195 = vpop.permute.xlu0 %194
    %198 = vset.pattern.permute.xlu0 0
    %199 = vperm.xlu0 %198, %v185
    %v200 = vpop.permute.xlu0 %199
    %203 = vset.pattern.permute.xlu0 0
    %204 = vperm.xlu0 %203, %v186
    %v205 = vpop.permute.xlu0 %204
    %208 = vset.pattern.permute.xlu0 0
    %209 = vperm.xlu0 %208, %v187
    %v210 = vpop.permute.xlu0 %209
    %213 = vset.pattern.permute.xlu0 0
    %214 = vperm.xlu0 %213, %v188
    %v215 = vpop.permute.xlu0 %214
    %218 = vset.pattern.permute.xlu0 0
    %219 = vperm.xlu0 %218, %v189
    %v220 = vpop.permute.xlu0 %219
    %223 = vset.pattern.permute.xlu0 0
    %224 = vperm.xlu0 %223, %v190
    %v225 = vpop.permute.xlu0 %224
    %228 = vset.pattern.permute.xlu0 0
    %229 = vperm.xlu0 %228, %v191
    %v230 = vpop.permute.xlu0 %229
    %v232 = vmul.f32 %v154, %v195
    %v233 = vmul.f32 %v157, %v200
    %v234 = vmul.f32 %v162, %v205
    %v235 = vmul.f32 %v165, %v210
    %v236 = vmul.f32 %v170, %v215
    %v237 = vmul.f32 %v173, %v220
    %v238 = vmul.f32 %v178, %v225
    %v239 = vmul.f32 %v181, %v230
    %v240 = vld [vmem:[#allocation6] sm:$0xff]
    %v241 = vld [vmem:[#allocation6 + $0x8] sm:$0xff]
    %v242 = vld [vmem:[#allocation6 + $0x10] sm:$0xff]
    %v243 = vld [vmem:[#allocation6 + $0x18] sm:$0xff]
    %v244 = vld [vmem:[#allocation6 + $0x20] sm:$0xff]
    %v245 = vld [vmem:[#allocation6 + $0x28] sm:$0xff]
    %v246 = vld [vmem:[#allocation6 + $0x30] sm:$0xff]
    %v247 = vld [vmem:[#allocation6 + $0x38] sm:$0xff]
    %v248 = vld [vmem:[#allocation6 + $0x40] sm:$0xff]
    %v249 = vld [vmem:[#allocation6 + $0x48] sm:$0xff]
    %v250 = vld [vmem:[#allocation6 + $0x50] sm:$0xff]
    %v251 = vld [vmem:[#allocation6 + $0x58] sm:$0xff]
    %v252 = vld [vmem:[#allocation6 + $0x60] sm:$0xff]
    %v253 = vld [vmem:[#allocation6 + $0x68] sm:$0xff]
    %v254 = vld [vmem:[#allocation6 + $0x70] sm:$0xff]
    %v255 = vld [vmem:[#allocation6 + $0x78] sm:$0xff]
    %v256 = vld [vmem:[#allocation6 + $0x80] sm:$0xff]
    %v257 = vld [vmem:[#allocation6 + $0x88] sm:$0xff]
    %v258 = vld [vmem:[#allocation6 + $0x90] sm:$0xff]
    %v259 = vld [vmem:[#allocation6 + $0x98] sm:$0xff]
    %v260 = vld [vmem:[#allocation6 + $0xa0] sm:$0xff]
    %v261 = vld [vmem:[#allocation6 + $0xa8] sm:$0xff]
    %v262 = vld [vmem:[#allocation6 + $0xb0] sm:$0xff]
    %v263 = vld [vmem:[#allocation6 + $0xb8] sm:$0xff]
    %v264 = vld [vmem:[#allocation6 + $0xc0] sm:$0xff]
    %v265 = vld [vmem:[#allocation6 + $0xc8] sm:$0xff]
    %v266 = vld [vmem:[#allocation6 + $0xd0] sm:$0xff]
    %v267 = vld [vmem:[#allocation6 + $0xd8] sm:$0xff]
    %v268 = vld [vmem:[#allocation6 + $0xe0] sm:$0xff]
    %v269 = vld [vmem:[#allocation6 + $0xe8] sm:$0xff]
    %v270 = vld [vmem:[#allocation6 + $0xf0] sm:$0xff]
    %v271 = vld [vmem:[#allocation6 + $0xf8] sm:$0xff]
    %272 = vmatprep.subr.mxu0 0.0
    %273 = vmatpush1.msra.mxu0 %v256
    %274 = vmatprep.subr.mxu0 0.0
    %275 = vmatpush1.msra.mxu0 %v257
    %276 = vmatprep.subr.mxu0 0.0
    %277 = vmatpush1.msra.mxu0 %v258
    %278 = vmatprep.subr.mxu0 0.0
    %279 = vmatpush1.msra.mxu0 %v259
    %280 = vmatprep.subr.mxu0 0.0
    %281 = vmatpush1.msra.mxu0 %v260
    %282 = vmatprep.subr.mxu0 0.0
    %283 = vmatpush1.msra.mxu0 %v261
    %284 = vmatprep.subr.mxu0 0.0
    %285 = vmatpush1.msra.mxu0 %v262
    %286 = vmatprep.subr.mxu0 0.0
    %287 = vmatpush1.msra.mxu0 %v263
    %288 = vmatprep.subr.mxu0 0.0
    %289 = vmatpush1.msra.mxu0 %v264
    %290 = vmatprep.subr.mxu0 0.0
    %291 = vmatpush1.msra.mxu0 %v265
    %292 = vmatprep.subr.mxu0 0.0
    %293 = vmatpush1.msra.mxu0 %v266
    %294 = vmatprep.subr.mxu0 0.0
    %295 = vmatpush1.msra.mxu0 %v267
    %296 = vmatprep.subr.mxu0 0.0
    %297 = vmatpush1.msra.mxu0 %v268
    %298 = vmatprep.subr.mxu0 0.0
    %299 = vmatpush1.msra.mxu0 %v269
    %300 = vmatprep.subr.mxu0 0.0
    %301 = vmatpush1.msra.mxu0 %v270
    %302 = vmatprep.subr.mxu0 0.0
    %303 = vmatpush1.msra.mxu0 %v271
    %304 = vmatprep.subr.mxu0 0.0
    %305 = vmatpush1.msra.mxu0 0.0
    %306 = vmatprep.subr.mxu0 0.0
    %307 = vmatpush1.msra.mxu0 0.0
    %308 = vmatprep.subr.mxu0 0.0
    %309 = vmatpush1.msra.mxu0 0.0
    %310 = vmatprep.subr.mxu0 0.0
    %311 = vmatpush1.msra.mxu0 0.0
    %312 = vmatprep.subr.mxu0 0.0
    %313 = vmatpush1.msra.mxu0 0.0
    %314 = vmatprep.subr.mxu0 0.0
    %315 = vmatpush1.msra.mxu0 0.0
    %316 = vmatprep.subr.mxu0 0.0
    %317 = vmatpush1.msra.mxu0 0.0
    %318 = vmatprep.subr.mxu0 0.0
    %319 = vmatpush1.msra.mxu0 0.0
    %320 = vmatprep.subr.mxu0 0.0
    %321 = vmatpush1.msra.mxu0 0.0
    %322 = vmatprep.subr.mxu0 0.0
    %323 = vmatpush1.msra.mxu0 0.0
    %324 = vmatprep.subr.mxu0 0.0
    %325 = vmatpush1.msra.mxu0 0.0
    %326 = vmatprep.subr.mxu0 0.0
    %327 = vmatpush1.msra.mxu0 0.0
    %328 = vmatprep.subr.mxu0 0.0
    %329 = vmatpush1.msra.mxu0 0.0
    %330 = vmatprep.subr.mxu0 0.0
    %331 = vmatpush1.msra.mxu0 0.0
    %332 = vmatprep.subr.mxu0 0.0
    %333 = vmatpush1.msra.mxu0 0.0
    %334 = vmatprep.subr.mxu0 0.0
    %335 = vmatpush1.msra.mxu0 0.0
    %336 = vmatprep.mubr.f32.mxu0 0.0
    %337 = vmatmul.mubr.f32.gmra.mrb[0].mxu0 %v232
    %v338 = vpop.f32.mrb[0].mxu0
    %v339 = vadd.f32 0.0, %v338
    %v340 = vpop.f32.mrb[0].mxu0
    %341 = vmatprep.mubr.f32.mxu0 0.0
    %342 = vmatmul.mubr.f32.gmra.mrb[0].mxu0 %v233
    %v343 = vpop.f32.mrb[0].mxu0
    %v344 = vadd.f32 0.0, %v343
    %v345 = vpop.f32.mrb[0].mxu0
    %346 = vmatprep.mubr.f32.mxu0 0.0
    %347 = vmatmul.mubr.f32.gmra.mrb[0].mxu0 %v234
    %v348 = vpop.f32.mrb[0].mxu0
    %v349 = vadd.f32 0.0, %v348
    %v350 = vpop.f32.mrb[0].mxu0
    %351 = vmatprep.mubr.f32.mxu0 0.0
    %352 = vmatmul.mubr.f32.gmra.mrb[0].mxu0 %v235
    %v353 = vpop.f32.mrb[0].mxu0
    %v354 = vadd.f32 0.0, %v353
    %v355 = vpop.f32.mrb[0].mxu0
    %356 = vmatprep.mubr.f32.mxu0 0.0
    %357 = vmatmul.mubr.f32.gmra.mrb[0].mxu0 %v236
    %v358 = vpop.f32.mrb[0].mxu0
    %v359 = vadd.f32 0.0, %v358
    %v360 = vpop.f32.mrb[0].mxu0
    %361 = vmatprep.mubr.f32.mxu0 0.0
    %362 = vmatmul.mubr.f32.gmra.mrb[0].mxu0 %v237
    %v363 = vpop.f32.mrb[0].mxu0
    %v364 = vadd.f32 0.0, %v363
    %v365 = vpop.f32.mrb[0].mxu0
    %366 = vmatprep.mubr.f32.mxu0 0.0
    %367 = vmatmul.mubr.f32.gmra.mrb[0].mxu0 %v238
    %v368 = vpop.f32.mrb[0].mxu0
    %v369 = vadd.f32 0.0, %v368
    %v370 = vpop.f32.mrb[0].mxu0
    %371 = vmatprep.mubr.f32.mxu0 0.0
    %372 = vmatmul.mubr.f32.gmra.mrb[0].mxu0 %v239
    %v373 = vpop.f32.mrb[0].mxu0
    %v374 = vadd.f32 0.0, %v373
    %v375 = vpop.f32.mrb[0].mxu0
    %376 = vdwg.mxu0
    %377 = vmatprep.subr.mxu0 0.0
    %378 = vmatpush1.msra.mxu0 %v240
    %379 = vmatprep.subr.mxu0 0.0
    %380 = vmatpush1.msra.mxu0 %v241
    %381 = vmatprep.subr.mxu0 0.0
    %382 = vmatpush1.msra.mxu0 %v242
    %383 = vmatprep.subr.mxu0 0.0
    %384 = vmatpush1.msra.mxu0 %v243
    %385 = vmatprep.subr.mxu0 0.0
    %386 = vmatpush1.msra.mxu0 %v244
    %387 = vmatprep.subr.mxu0 0.0
    %388 = vmatpush1.msra.mxu0 %v245
    %389 = vmatprep.subr.mxu0 0.0
    %390 = vmatpush1.msra.mxu0 %v246
    %391 = vmatprep.subr.mxu0 0.0
    %392 = vmatpush1.msra.mxu0 %v247
    %393 = vmatprep.subr.mxu0 0.0
    %394 = vmatpush1.msra.mxu0 %v248
    %395 = vmatprep.subr.mxu0 0.0
    %396 = vmatpush1.msra.mxu0 %v249
    %397 = vmatprep.subr.mxu0 0.0
    %398 = vmatpush1.msra.mxu0 %v250
    %399 = vmatprep.subr.mxu0 0.0
    %400 = vmatpush1.msra.mxu0 %v251
    %401 = vmatprep.subr.mxu0 0.0
    %402 = vmatpush1.msra.mxu0 %v252
    %403 = vmatprep.subr.mxu0 0.0
    %404 = vmatpush1.msra.mxu0 %v253
    %405 = vmatprep.subr.mxu0 0.0
    %406 = vmatpush1.msra.mxu0 %v254
    %407 = vmatprep.subr.mxu0 0.0
    %408 = vmatpush1.msra.mxu0 %v255
    %409 = vmatprep.subr.mxu0 0.0
    %410 = vmatpush1.msra.mxu0 0.0
    %411 = vmatprep.subr.mxu0 0.0
    %412 = vmatpush1.msra.mxu0 0.0
    %413 = vmatprep.subr.mxu0 0.0
    %414 = vmatpush1.msra.mxu0 0.0
    %415 = vmatprep.subr.mxu0 0.0
    %416 = vmatpush1.msra.mxu0 0.0
    %417 = vmatprep.subr.mxu0 0.0
    %418 = vmatpush1.msra.mxu0 0.0
    %419 = vmatprep.subr.mxu0 0.0
    %420 = vmatpush1.msra.mxu0 0.0
    %421 = vmatprep.subr.mxu0 0.0
    %422 = vmatpush1.msra.mxu0 0.0
    %423 = vmatprep.subr.mxu0 0.0
    %424 = vmatpush1.msra.mxu0 0.0
    %425 = vmatprep.subr.mxu0 0.0
    %426 = vmatpush1.msra.mxu0 0.0
    %427 = vmatprep.subr.mxu0 0.0
    %428 = vmatpush1.msra.mxu0 0.0
    %429 = vmatprep.subr.mxu0 0.0
    %430 = vmatpush1.msra.mxu0 0.0
    %431 = vmatprep.subr.mxu0 0.0
    %432 = vmatpush1.msra.mxu0 0.0
    %433 = vmatprep.subr.mxu0 0.0
    %434 = vmatpush1.msra.mxu0 0.0
    %435 = vmatprep.subr.mxu0 0.0
    %436 = vmatpush1.msra.mxu0 0.0
    %437 = vmatprep.subr.mxu0 0.0
    %438 = vmatpush1.msra.mxu0 0.0
    %439 = vmatprep.subr.mxu0 0.0
    %440 = vmatpush1.msra.mxu0 0.0
    %441 = vmatprep.mubr.f32.mxu0 0.0
    %442 = vmatmul.mubr.f32.gmra.mrb[0].mxu0 %v66
    %v443 = vpop.f32.mrb[0].mxu0
    %v444 = vadd.f32 %v339, %v443
    %v445 = vpop.f32.mrb[0].mxu0
    %446 = vmatprep.mubr.f32.mxu0 0.0
    %447 = vmatmul.mubr.f32.gmra.mrb[0].mxu0 %v67
    %v448 = vpop.f32.mrb[0].mxu0
    %v449 = vadd.f32 %v344, %v448
    %v450 = vpop.f32.mrb[0].mxu0
    %451 = vmatprep.mubr.f32.mxu0 0.0
    %452 = vmatmul.mubr.f32.gmra.mrb[0].mxu0 %v68
    %v453 = vpop.f32.mrb[0].mxu0
    %v454 = vadd.f32 %v349, %v453
    %v455 = vpop.f32.mrb[0].mxu0
    %456 = vmatprep.mubr.f32.mxu0 0.0
    %457 = vmatmul.mubr.f32.gmra.mrb[0].mxu0 %v69
    %v458 = vpop.f32.mrb[0].mxu0
    %v459 = vadd.f32 %v354, %v458
    %v460 = vpop.f32.mrb[0].mxu0
    %461 = vmatprep.mubr.f32.mxu0 0.0
    %462 = vmatmul.mubr.f32.gmra.mrb[0].mxu0 %v70
    %v463 = vpop.f32.mrb[0].mxu0
    %v464 = vadd.f32 %v359, %v463
    %v465 = vpop.f32.mrb[0].mxu0
    %466 = vmatprep.mubr.f32.mxu0 0.0
    %467 = vmatmul.mubr.f32.gmra.mrb[0].mxu0 %v71
    %v468 = vpop.f32.mrb[0].mxu0
    %v469 = vadd.f32 %v364, %v468
    %v470 = vpop.f32.mrb[0].mxu0
    %471 = vmatprep.mubr.f32.mxu0 0.0
    %472 = vmatmul.mubr.f32.gmra.mrb[0].mxu0 %v72
    %v473 = vpop.f32.mrb[0].mxu0
    %v474 = vadd.f32 %v369, %v473
    %v475 = vpop.f32.mrb[0].mxu0
    %476 = vmatprep.mubr.f32.mxu0 0.0
    %477 = vmatmul.mubr.f32.gmra.mrb[0].mxu0 %v73
    %v478 = vpop.f32.mrb[0].mxu0
    %v479 = vadd.f32 %v374, %v478
    %v480 = vpop.f32.mrb[0].mxu0
    %481 = vdwg.mxu0
    %v482 = vld [vmem:[%s4] sm:$0x1]
    %v484 = vlaneseq
    %v485 = vshrl.u32 %v484, 7
    %v486 = vsub.s32 0, %v485
    %v487 = vrot.slane %v482, %v486
    %v489 = vadd.f32 %v444, %v487
    %v490 = vadd.f32 %v449, %v487
    %v491 = vadd.f32 %v454, %v487
    %v492 = vadd.f32 %v459, %v487
    %v493 = vadd.f32 %v464, %v487
    %v494 = vadd.f32 %v469, %v487
    %v495 = vadd.f32 %v474, %v487
    %v496 = vadd.f32 %v479, %v487
    %v497 = vmax.f32 %v489, 0.0
    %v498 = vmax.f32 %v490, 0.0
    %v499 = vmax.f32 %v491, 0.0
    %v500 = vmax.f32 %v492, 0.0
    %v501 = vmax.f32 %v493, 0.0
    %v502 = vmax.f32 %v494, 0.0
    %v503 = vmax.f32 %v495, 0.0
    %v504 = vmax.f32 %v496, 0.0
    %v505 = vmul.f32 %v497, %v497
    %v506 = vmul.f32 %v498, %v498
    %v507 = vmul.f32 %v499, %v499
    %v508 = vmul.f32 %v500, %v500
    %v509 = vmul.f32 %v501, %v501
    %v510 = vmul.f32 %v502, %v502
    %v511 = vmul.f32 %v503, %v503
    %v512 = vmul.f32 %v504, %v504
    %513 = vadd.xlane.f32.xlu0 %v505
    %v514 = vpop.xlane.xlu0 %513
    %515 = vadd.xlane.f32.xlu0 %v506
    %v516 = vpop.xlane.xlu0 %515
    %517 = vadd.xlane.f32.xlu0 %v507
    %v518 = vpop.xlane.xlu0 %517
    %519 = vadd.xlane.f32.xlu0 %v508
    %v520 = vpop.xlane.xlu0 %519
    %521 = vadd.xlane.f32.xlu0 %v509
    %v522 = vpop.xlane.xlu0 %521
    %523 = vadd.xlane.f32.xlu0 %v510
    %v524 = vpop.xlane.xlu0 %523
    %525 = vadd.xlane.f32.xlu0 %v511
    %v526 = vpop.xlane.xlu0 %525
    %527 = vadd.xlane.f32.xlu0 %v512
    %v528 = vpop.xlane.xlu0 %527
    %v529 = vmax.f32 %v514, 1e-24
    %v530 = vmax.f32 %v516, 1e-24
    %v531 = vmax.f32 %v518, 1e-24
    %v532 = vmax.f32 %v520, 1e-24
    %v533 = vmax.f32 %v522, 1e-24
    %v534 = vmax.f32 %v524, 1e-24
    %v535 = vmax.f32 %v526, 1e-24
    %v536 = vmax.f32 %v528, 1e-24
    %v537 = vrsqrt.pop %v529
    %v538 = vrsqrt.pop %v530
    %v539 = vrsqrt.pop %v531
    %v540 = vrsqrt.pop %v532
    %v541 = vrsqrt.pop %v533
    %v542 = vrsqrt.pop %v534
    %v543 = vrsqrt.pop %v535
    %v544 = vrsqrt.pop %v536
    %v545 = vmul.f32 %v497, %v537
    %v546 = vmul.f32 %v498, %v538
    %v547 = vmul.f32 %v499, %v539
    %v548 = vmul.f32 %v500, %v540
    %v549 = vmul.f32 %v501, %v541
    %v550 = vmul.f32 %v502, %v542
    %v551 = vmul.f32 %v503, %v543
    %v552 = vmul.f32 %v504, %v544
    %553 = vst [vmem:[#allocation2] sm:$0xff] %v545
    %554 = vst [vmem:[#allocation2 + $0x8] sm:$0xff] %v546
    %555 = vst [vmem:[#allocation2 + $0x10] sm:$0xff] %v547
    %556 = vst [vmem:[#allocation2 + $0x18] sm:$0xff] %v548
    %557 = vst [vmem:[#allocation2 + $0x20] sm:$0xff] %v549
    %558 = vst [vmem:[#allocation2 + $0x28] sm:$0xff] %v550
    %559 = vst [vmem:[#allocation2 + $0x30] sm:$0xff] %v551
    %560 = vst [vmem:[#allocation2 + $0x38] sm:$0xff] %v552
    %v561 = vld [vmem:[#allocation2] sm:$0xff]
    %v562 = vld [vmem:[#allocation2 + $0x8] sm:$0xff]
    %v563 = vld [vmem:[#allocation2 + $0x10] sm:$0xff]
    %v564 = vld [vmem:[#allocation2 + $0x18] sm:$0xff]
    %v565 = vld [vmem:[#allocation2 + $0x20] sm:$0xff]
    %v566 = vld [vmem:[#allocation2 + $0x28] sm:$0xff]
    %v567 = vld [vmem:[#allocation2 + $0x30] sm:$0xff]
    %v568 = vld [vmem:[#allocation2 + $0x38] sm:$0xff]
    %v569 = vld [vmem:[#allocation3] sm:$0xf]
    %v570 = vld [vmem:[#allocation3 + $0x4] sm:$0xf]
    %v571 = vld [vmem:[#allocation3 + $0x8] sm:$0xf]
    %v572 = vld [vmem:[#allocation3 + $0xc] sm:$0xf]
    %v573 = vld [vmem:[#allocation3 + $0x10] sm:$0xf]
    %v574 = vld [vmem:[#allocation3 + $0x14] sm:$0xf]
    %v575 = vld [vmem:[#allocation3 + $0x18] sm:$0xf]
    %v576 = vld [vmem:[#allocation3 + $0x1c] sm:$0xf]
    %v577 = vpack.c.bf16 %v562, %v561
    %v578 = vpack.c.bf16 %v564, %v563
    %v579 = vpack.c.bf16 %v566, %v565
    %v580 = vpack.c.bf16 %v568, %v567
    %v589 = vunpack.c.l.b16 %v569
    %v590 = vunpack.c.l.b16 %v570
    %v591 = vunpack.c.l.b16 %v571
    %v592 = vunpack.c.l.b16 %v572
    %v593 = vunpack.c.l.b16 %v573
    %v594 = vunpack.c.l.b16 %v574
    %v595 = vunpack.c.l.b16 %v575
    %v596 = vunpack.c.l.b16 %v576
    %v597 = vpack.c.b16 %v590, %v589
    %v598 = vpack.c.b16 %v592, %v591
    %v599 = vpack.c.b16 %v594, %v593
    %v600 = vpack.c.b16 %v596, %v595
    %v602 = vsel %vm106, %v597, 0
    %v605 = vsel %vm106, %v598, 0
    %v608 = vsel %vm106, %v599, 0
    %v611 = vsel %vm106, %v600, 0
    %613 = vmatprep.subr.bf16.mxu0 0
    %614 = vmatpush1.bf16.msra.mxu0 %v577
    %615 = vmatprep.subr.bf16.mxu0 0
    %616 = vmatpush1.bf16.msra.mxu0 %v578
    %617 = vmatprep.subr.bf16.mxu0 0
    %618 = vmatpush1.bf16.msra.mxu0 %v579
    %619 = vmatprep.subr.bf16.mxu0 0
    %620 = vmatpush1.bf16.msra.mxu0 %v580
    %621 = vmatprep.subr.bf16.mxu0 0
    %622 = vmatpush1.bf16.msra.mxu0 0
    %623 = vmatprep.subr.bf16.mxu0 0
    %624 = vmatpush1.bf16.msra.mxu0 0
    %625 = vmatprep.subr.bf16.mxu0 0
    %626 = vmatpush1.bf16.msra.mxu0 0
    %627 = vmatprep.subr.bf16.mxu0 0
    %628 = vmatpush1.bf16.msra.mxu0 0
    %629 = vmatprep.subr.bf16.mxu0 0
    %630 = vmatpush1.bf16.msra.mxu0 0
    %631 = vmatprep.subr.bf16.mxu0 0
    %632 = vmatpush1.bf16.msra.mxu0 0
    %633 = vmatprep.subr.bf16.mxu0 0
    %634 = vmatpush1.bf16.msra.mxu0 0
    %635 = vmatprep.subr.bf16.mxu0 0
    %636 = vmatpush1.bf16.msra.mxu0 0
    %637 = vmatprep.subr.bf16.mxu0 0
    %638 = vmatpush1.bf16.msra.mxu0 0
    %639 = vmatprep.subr.bf16.mxu0 0
    %640 = vmatpush1.bf16.msra.mxu0 0
    %641 = vmatprep.subr.bf16.mxu0 0
    %642 = vmatpush1.bf16.msra.mxu0 0
    %643 = vmatprep.subr.bf16.mxu0 0
    %644 = vmatpush1.bf16.msra.mxu0 0
    %645 = vmatprep.mubr.bf16.mxu0 0
    %646 = vmatmul.mubr.bf16.gmra.mrb[0].mxu0 %v602
    %v647 = vpop.f32.mrb[0].mxu0
    %v648 = vadd.f32 0.0, %v647
    %v649 = vpop.f32.mrb[0].mxu0
    %v650 = vpop.f32.mrb[0].mxu0
    %v651 = vadd.f32 0.0, %v650
    %v652 = vpop.f32.mrb[0].mxu0
    %653 = vmatprep.mubr.bf16.mxu0 0
    %654 = vmatmul.mubr.bf16.gmra.mrb[0].mxu0 %v605
    %v655 = vpop.f32.mrb[0].mxu0
    %v656 = vadd.f32 0.0, %v655
    %v657 = vpop.f32.mrb[0].mxu0
    %v658 = vpop.f32.mrb[0].mxu0
    %v659 = vadd.f32 0.0, %v658
    %v660 = vpop.f32.mrb[0].mxu0
    %661 = vmatprep.mubr.bf16.mxu0 0
    %662 = vmatmul.mubr.bf16.gmra.mrb[0].mxu0 %v608
    %v663 = vpop.f32.mrb[0].mxu0
    %v664 = vadd.f32 0.0, %v663
    %v665 = vpop.f32.mrb[0].mxu0
    %v666 = vpop.f32.mrb[0].mxu0
    %v667 = vadd.f32 0.0, %v666
    %v668 = vpop.f32.mrb[0].mxu0
    %669 = vmatprep.mubr.bf16.mxu0 0
    %670 = vmatmul.mubr.bf16.gmra.mrb[0].mxu0 %v611
    %v671 = vpop.f32.mrb[0].mxu0
    %v672 = vadd.f32 0.0, %v671
    %v673 = vpop.f32.mrb[0].mxu0
    %v674 = vpop.f32.mrb[0].mxu0
    %v675 = vadd.f32 0.0, %v674
    %v676 = vpop.f32.mrb[0].mxu0
    %677 = vdwg.mxu0
    %v678 = vld [vmem:[%s2] sm:$0xff]
    %v679 = vld [vmem:[%s2 + $0x8] sm:$0xff]
    %v680 = vld [vmem:[%s2 + $0x10] sm:$0xff]
    %v681 = vld [vmem:[%s2 + $0x18] sm:$0xff]
    %v682 = vld [vmem:[%s2 + $0x20] sm:$0xff]
    %v683 = vld [vmem:[%s2 + $0x28] sm:$0xff]
    %v684 = vld [vmem:[%s2 + $0x30] sm:$0xff]
    %v685 = vld [vmem:[%s2 + $0x38] sm:$0xff]
    %687 = vset.pattern.permute.xlu0 0
    %688 = vperm.xlu0 %687, %v678
    %v689 = vpop.permute.xlu0 %688
    %692 = vset.pattern.permute.xlu0 0
    %693 = vperm.xlu0 %692, %v679
    %v694 = vpop.permute.xlu0 %693
    %697 = vset.pattern.permute.xlu0 0
    %698 = vperm.xlu0 %697, %v680
    %v699 = vpop.permute.xlu0 %698
    %702 = vset.pattern.permute.xlu0 0
    %703 = vperm.xlu0 %702, %v681
    %v704 = vpop.permute.xlu0 %703
    %707 = vset.pattern.permute.xlu0 0
    %708 = vperm.xlu0 %707, %v682
    %v709 = vpop.permute.xlu0 %708
    %712 = vset.pattern.permute.xlu0 0
    %713 = vperm.xlu0 %712, %v683
    %v714 = vpop.permute.xlu0 %713
    %717 = vset.pattern.permute.xlu0 0
    %718 = vperm.xlu0 %717, %v684
    %v719 = vpop.permute.xlu0 %718
    %722 = vset.pattern.permute.xlu0 0
    %723 = vperm.xlu0 %722, %v685
    %v724 = vpop.permute.xlu0 %723
    %v726 = vmul.f32 %v648, %v689
    %v727 = vmul.f32 %v651, %v694
    %v728 = vmul.f32 %v656, %v699
    %v729 = vmul.f32 %v659, %v704
    %v730 = vmul.f32 %v664, %v709
    %v731 = vmul.f32 %v667, %v714
    %v732 = vmul.f32 %v672, %v719
    %v733 = vmul.f32 %v675, %v724
    %s734 = scalar_lea.vmem [#allocation6], 256
    %v735 = vld [vmem:[%s734] sm:$0xff]
    %v736 = vld [vmem:[%s734 + $0x8] sm:$0xff]
    %v737 = vld [vmem:[%s734 + $0x10] sm:$0xff]
    %v738 = vld [vmem:[%s734 + $0x18] sm:$0xff]
    %v739 = vld [vmem:[%s734 + $0x20] sm:$0xff]
    %v740 = vld [vmem:[%s734 + $0x28] sm:$0xff]
    %v741 = vld [vmem:[%s734 + $0x30] sm:$0xff]
    %v742 = vld [vmem:[%s734 + $0x38] sm:$0xff]
    %v743 = vld [vmem:[%s734 + $0x40] sm:$0xff]
    %v744 = vld [vmem:[%s734 + $0x48] sm:$0xff]
    %v745 = vld [vmem:[%s734 + $0x50] sm:$0xff]
    %v746 = vld [vmem:[%s734 + $0x58] sm:$0xff]
    %v747 = vld [vmem:[%s734 + $0x60] sm:$0xff]
    %v748 = vld [vmem:[%s734 + $0x68] sm:$0xff]
    %v749 = vld [vmem:[%s734 + $0x70] sm:$0xff]
    %v750 = vld [vmem:[%s734 + $0x78] sm:$0xff]
    %v751 = vld [vmem:[%s734 + $0x80] sm:$0xff]
    %v752 = vld [vmem:[%s734 + $0x88] sm:$0xff]
    %v753 = vld [vmem:[%s734 + $0x90] sm:$0xff]
    %v754 = vld [vmem:[%s734 + $0x98] sm:$0xff]
    %v755 = vld [vmem:[%s734 + $0xa0] sm:$0xff]
    %v756 = vld [vmem:[%s734 + $0xa8] sm:$0xff]
    %v757 = vld [vmem:[%s734 + $0xb0] sm:$0xff]
    %v758 = vld [vmem:[%s734 + $0xb8] sm:$0xff]
    %v759 = vld [vmem:[%s734 + $0xc0] sm:$0xff]
    %v760 = vld [vmem:[%s734 + $0xc8] sm:$0xff]
    %v761 = vld [vmem:[%s734 + $0xd0] sm:$0xff]
    %v762 = vld [vmem:[%s734 + $0xd8] sm:$0xff]
    %v763 = vld [vmem:[%s734 + $0xe0] sm:$0xff]
    %v764 = vld [vmem:[%s734 + $0xe8] sm:$0xff]
    %v765 = vld [vmem:[%s734 + $0xf0] sm:$0xff]
    %v766 = vld [vmem:[%s734 + $0xf8] sm:$0xff]
    %767 = vmatprep.subr.mxu0 0.0
    %768 = vmatpush1.msra.mxu0 %v751
    %769 = vmatprep.subr.mxu0 0.0
    %770 = vmatpush1.msra.mxu0 %v752
    %771 = vmatprep.subr.mxu0 0.0
    %772 = vmatpush1.msra.mxu0 %v753
    %773 = vmatprep.subr.mxu0 0.0
    %774 = vmatpush1.msra.mxu0 %v754
    %775 = vmatprep.subr.mxu0 0.0
    %776 = vmatpush1.msra.mxu0 %v755
    %777 = vmatprep.subr.mxu0 0.0
    %778 = vmatpush1.msra.mxu0 %v756
    %779 = vmatprep.subr.mxu0 0.0
    %780 = vmatpush1.msra.mxu0 %v757
    %781 = vmatprep.subr.mxu0 0.0
    %782 = vmatpush1.msra.mxu0 %v758
    %783 = vmatprep.subr.mxu0 0.0
    %784 = vmatpush1.msra.mxu0 %v759
    %785 = vmatprep.subr.mxu0 0.0
    %786 = vmatpush1.msra.mxu0 %v760
    %787 = vmatprep.subr.mxu0 0.0
    %788 = vmatpush1.msra.mxu0 %v761
    %789 = vmatprep.subr.mxu0 0.0
    %790 = vmatpush1.msra.mxu0 %v762
    %791 = vmatprep.subr.mxu0 0.0
    %792 = vmatpush1.msra.mxu0 %v763
    %793 = vmatprep.subr.mxu0 0.0
    %794 = vmatpush1.msra.mxu0 %v764
    %795 = vmatprep.subr.mxu0 0.0
    %796 = vmatpush1.msra.mxu0 %v765
    %797 = vmatprep.subr.mxu0 0.0
    %798 = vmatpush1.msra.mxu0 %v766
    %799 = vmatprep.subr.mxu0 0.0
    %800 = vmatpush1.msra.mxu0 0.0
    %801 = vmatprep.subr.mxu0 0.0
    %802 = vmatpush1.msra.mxu0 0.0
    %803 = vmatprep.subr.mxu0 0.0
    %804 = vmatpush1.msra.mxu0 0.0
    %805 = vmatprep.subr.mxu0 0.0
    %806 = vmatpush1.msra.mxu0 0.0
    %807 = vmatprep.subr.mxu0 0.0
    %808 = vmatpush1.msra.mxu0 0.0
    %809 = vmatprep.subr.mxu0 0.0
    %810 = vmatpush1.msra.mxu0 0.0
    %811 = vmatprep.subr.mxu0 0.0
    %812 = vmatpush1.msra.mxu0 0.0
    %813 = vmatprep.subr.mxu0 0.0
    %814 = vmatpush1.msra.mxu0 0.0
    %815 = vmatprep.subr.mxu0 0.0
    %816 = vmatpush1.msra.mxu0 0.0
    %817 = vmatprep.subr.mxu0 0.0
    %818 = vmatpush1.msra.mxu0 0.0
    %819 = vmatprep.subr.mxu0 0.0
    %820 = vmatpush1.msra.mxu0 0.0
    %821 = vmatprep.subr.mxu0 0.0
    %822 = vmatpush1.msra.mxu0 0.0
    %823 = vmatprep.subr.mxu0 0.0
    %824 = vmatpush1.msra.mxu0 0.0
    %825 = vmatprep.subr.mxu0 0.0
    %826 = vmatpush1.msra.mxu0 0.0
    %827 = vmatprep.subr.mxu0 0.0
    %828 = vmatpush1.msra.mxu0 0.0
    %829 = vmatprep.subr.mxu0 0.0
    %830 = vmatpush1.msra.mxu0 0.0
    %831 = vmatprep.mubr.f32.mxu0 0.0
    %832 = vmatmul.mubr.f32.gmra.mrb[0].mxu0 %v726
    %v833 = vpop.f32.mrb[0].mxu0
    %v834 = vadd.f32 0.0, %v833
    %v835 = vpop.f32.mrb[0].mxu0
    %836 = vmatprep.mubr.f32.mxu0 0.0
    %837 = vmatmul.mubr.f32.gmra.mrb[0].mxu0 %v727
    %v838 = vpop.f32.mrb[0].mxu0
    %v839 = vadd.f32 0.0, %v838
    %v840 = vpop.f32.mrb[0].mxu0
    %841 = vmatprep.mubr.f32.mxu0 0.0
    %842 = vmatmul.mubr.f32.gmra.mrb[0].mxu0 %v728
    %v843 = vpop.f32.mrb[0].mxu0
    %v844 = vadd.f32 0.0, %v843
    %v845 = vpop.f32.mrb[0].mxu0
    %846 = vmatprep.mubr.f32.mxu0 0.0
    %847 = vmatmul.mubr.f32.gmra.mrb[0].mxu0 %v729
    %v848 = vpop.f32.mrb[0].mxu0
    %v849 = vadd.f32 0.0, %v848
    %v850 = vpop.f32.mrb[0].mxu0
    %851 = vmatprep.mubr.f32.mxu0 0.0
    %852 = vmatmul.mubr.f32.gmra.mrb[0].mxu0 %v730
    %v853 = vpop.f32.mrb[0].mxu0
    %v854 = vadd.f32 0.0, %v853
    %v855 = vpop.f32.mrb[0].mxu0
    %856 = vmatprep.mubr.f32.mxu0 0.0
    %857 = vmatmul.mubr.f32.gmra.mrb[0].mxu0 %v731
    %v858 = vpop.f32.mrb[0].mxu0
    %v859 = vadd.f32 0.0, %v858
    %v860 = vpop.f32.mrb[0].mxu0
    %861 = vmatprep.mubr.f32.mxu0 0.0
    %862 = vmatmul.mubr.f32.gmra.mrb[0].mxu0 %v732
    %v863 = vpop.f32.mrb[0].mxu0
    %v864 = vadd.f32 0.0, %v863
    %v865 = vpop.f32.mrb[0].mxu0
    %866 = vmatprep.mubr.f32.mxu0 0.0
    %867 = vmatmul.mubr.f32.gmra.mrb[0].mxu0 %v733
    %v868 = vpop.f32.mrb[0].mxu0
    %v869 = vadd.f32 0.0, %v868
    %v870 = vpop.f32.mrb[0].mxu0
    %871 = vdwg.mxu0
    %872 = vmatprep.subr.mxu0 0.0
    %873 = vmatpush1.msra.mxu0 %v735
    %874 = vmatprep.subr.mxu0 0.0
    %875 = vmatpush1.msra.mxu0 %v736
    %876 = vmatprep.subr.mxu0 0.0
    %877 = vmatpush1.msra.mxu0 %v737
    %878 = vmatprep.subr.mxu0 0.0
    %879 = vmatpush1.msra.mxu0 %v738
    %880 = vmatprep.subr.mxu0 0.0
    %881 = vmatpush1.msra.mxu0 %v739
    %882 = vmatprep.subr.mxu0 0.0
    %883 = vmatpush1.msra.mxu0 %v740
    %884 = vmatprep.subr.mxu0 0.0
    %885 = vmatpush1.msra.mxu0 %v741
    %886 = vmatprep.subr.mxu0 0.0
    %887 = vmatpush1.msra.mxu0 %v742
    %888 = vmatprep.subr.mxu0 0.0
    %889 = vmatpush1.msra.mxu0 %v743
    %890 = vmatprep.subr.mxu0 0.0
    %891 = vmatpush1.msra.mxu0 %v744
    %892 = vmatprep.subr.mxu0 0.0
    %893 = vmatpush1.msra.mxu0 %v745
    %894 = vmatprep.subr.mxu0 0.0
    %895 = vmatpush1.msra.mxu0 %v746
    %896 = vmatprep.subr.mxu0 0.0
    %897 = vmatpush1.msra.mxu0 %v747
    %898 = vmatprep.subr.mxu0 0.0
    %899 = vmatpush1.msra.mxu0 %v748
    %900 = vmatprep.subr.mxu0 0.0
    %901 = vmatpush1.msra.mxu0 %v749
    %902 = vmatprep.subr.mxu0 0.0
    %903 = vmatpush1.msra.mxu0 %v750
    %904 = vmatprep.subr.mxu0 0.0
    %905 = vmatpush1.msra.mxu0 0.0
    %906 = vmatprep.subr.mxu0 0.0
    %907 = vmatpush1.msra.mxu0 0.0
    %908 = vmatprep.subr.mxu0 0.0
    %909 = vmatpush1.msra.mxu0 0.0
    %910 = vmatprep.subr.mxu0 0.0
    %911 = vmatpush1.msra.mxu0 0.0
    %912 = vmatprep.subr.mxu0 0.0
    %913 = vmatpush1.msra.mxu0 0.0
    %914 = vmatprep.subr.mxu0 0.0
    %915 = vmatpush1.msra.mxu0 0.0
    %916 = vmatprep.subr.mxu0 0.0
    %917 = vmatpush1.msra.mxu0 0.0
    %918 = vmatprep.subr.mxu0 0.0
    %919 = vmatpush1.msra.mxu0 0.0
    %920 = vmatprep.subr.mxu0 0.0
    %921 = vmatpush1.msra.mxu0 0.0
    %922 = vmatprep.subr.mxu0 0.0
    %923 = vmatpush1.msra.mxu0 0.0
    %924 = vmatprep.subr.mxu0 0.0
    %925 = vmatpush1.msra.mxu0 0.0
    %926 = vmatprep.subr.mxu0 0.0
    %927 = vmatpush1.msra.mxu0 0.0
    %928 = vmatprep.subr.mxu0 0.0
    %929 = vmatpush1.msra.mxu0 0.0
    %930 = vmatprep.subr.mxu0 0.0
    %931 = vmatpush1.msra.mxu0 0.0
    %932 = vmatprep.subr.mxu0 0.0
    %933 = vmatpush1.msra.mxu0 0.0
    %934 = vmatprep.subr.mxu0 0.0
    %935 = vmatpush1.msra.mxu0 0.0
    %936 = vmatprep.mubr.f32.mxu0 0.0
    %937 = vmatmul.mubr.f32.gmra.mrb[0].mxu0 %v561
    %v938 = vpop.f32.mrb[0].mxu0
    %v939 = vadd.f32 %v834, %v938
    %v940 = vpop.f32.mrb[0].mxu0
    %941 = vmatprep.mubr.f32.mxu0 0.0
    %942 = vmatmul.mubr.f32.gmra.mrb[0].mxu0 %v562
    %v943 = vpop.f32.mrb[0].mxu0
    %v944 = vadd.f32 %v839, %v943
    %v945 = vpop.f32.mrb[0].mxu0
    %946 = vmatprep.mubr.f32.mxu0 0.0
    %947 = vmatmul.mubr.f32.gmra.mrb[0].mxu0 %v563
    %v948 = vpop.f32.mrb[0].mxu0
    %v949 = vadd.f32 %v844, %v948
    %v950 = vpop.f32.mrb[0].mxu0
    %951 = vmatprep.mubr.f32.mxu0 0.0
    %952 = vmatmul.mubr.f32.gmra.mrb[0].mxu0 %v564
    %v953 = vpop.f32.mrb[0].mxu0
    %v954 = vadd.f32 %v849, %v953
    %v955 = vpop.f32.mrb[0].mxu0
    %956 = vmatprep.mubr.f32.mxu0 0.0
    %957 = vmatmul.mubr.f32.gmra.mrb[0].mxu0 %v565
    %v958 = vpop.f32.mrb[0].mxu0
    %v959 = vadd.f32 %v854, %v958
    %v960 = vpop.f32.mrb[0].mxu0
    %961 = vmatprep.mubr.f32.mxu0 0.0
    %962 = vmatmul.mubr.f32.gmra.mrb[0].mxu0 %v566
    %v963 = vpop.f32.mrb[0].mxu0
    %v964 = vadd.f32 %v859, %v963
    %v965 = vpop.f32.mrb[0].mxu0
    %966 = vmatprep.mubr.f32.mxu0 0.0
    %967 = vmatmul.mubr.f32.gmra.mrb[0].mxu0 %v567
    %v968 = vpop.f32.mrb[0].mxu0
    %v969 = vadd.f32 %v864, %v968
    %v970 = vpop.f32.mrb[0].mxu0
    %971 = vmatprep.mubr.f32.mxu0 0.0
    %972 = vmatmul.mubr.f32.gmra.mrb[0].mxu0 %v568
    %v973 = vpop.f32.mrb[0].mxu0
    %v974 = vadd.f32 %v869, %v973
    %v975 = vpop.f32.mrb[0].mxu0
    %976 = vdwg.mxu0
    %s977 = scalar_lea.vmem %s4, 1
    %v978 = vld [vmem:[%s977] sm:$0x1]
    %v980 = vlaneseq
    %v981 = vshrl.u32 %v980, 7
    %v982 = vsub.s32 0, %v981
    %v983 = vrot.slane %v978, %v982
    %v985 = vadd.f32 %v939, %v983
    %v986 = vadd.f32 %v944, %v983
    %v987 = vadd.f32 %v949, %v983
    %v988 = vadd.f32 %v954, %v983
    %v989 = vadd.f32 %v959, %v983
    %v990 = vadd.f32 %v964, %v983
    %v991 = vadd.f32 %v969, %v983
    %v992 = vadd.f32 %v974, %v983
    %v993 = vmax.f32 %v985, 0.0
    %v994 = vmax.f32 %v986, 0.0
    %v995 = vmax.f32 %v987, 0.0
    %v996 = vmax.f32 %v988, 0.0
    %v997 = vmax.f32 %v989, 0.0
    %v998 = vmax.f32 %v990, 0.0
    %v999 = vmax.f32 %v991, 0.0
    %v1000 = vmax.f32 %v992, 0.0
    %v1001 = vmul.f32 %v993, %v993
    %v1002 = vmul.f32 %v994, %v994
    %v1003 = vmul.f32 %v995, %v995
    %v1004 = vmul.f32 %v996, %v996
    %v1005 = vmul.f32 %v997, %v997
    %v1006 = vmul.f32 %v998, %v998
    %v1007 = vmul.f32 %v999, %v999
    %v1008 = vmul.f32 %v1000, %v1000
    %1009 = vadd.xlane.f32.xlu0 %v1001
    %v1010 = vpop.xlane.xlu0 %1009
    %1011 = vadd.xlane.f32.xlu0 %v1002
    %v1012 = vpop.xlane.xlu0 %1011
    %1013 = vadd.xlane.f32.xlu0 %v1003
    %v1014 = vpop.xlane.xlu0 %1013
    %1015 = vadd.xlane.f32.xlu0 %v1004
    %v1016 = vpop.xlane.xlu0 %1015
    %1017 = vadd.xlane.f32.xlu0 %v1005
    %v1018 = vpop.xlane.xlu0 %1017
    %1019 = vadd.xlane.f32.xlu0 %v1006
    %v1020 = vpop.xlane.xlu0 %1019
    %1021 = vadd.xlane.f32.xlu0 %v1007
    %v1022 = vpop.xlane.xlu0 %1021
    %1023 = vadd.xlane.f32.xlu0 %v1008
    %v1024 = vpop.xlane.xlu0 %1023
    %v1025 = vmax.f32 %v1010, 1e-24
    %v1026 = vmax.f32 %v1012, 1e-24
    %v1027 = vmax.f32 %v1014, 1e-24
    %v1028 = vmax.f32 %v1016, 1e-24
    %v1029 = vmax.f32 %v1018, 1e-24
    %v1030 = vmax.f32 %v1020, 1e-24
    %v1031 = vmax.f32 %v1022, 1e-24
    %v1032 = vmax.f32 %v1024, 1e-24
    %v1033 = vrsqrt.pop %v1025
    %v1034 = vrsqrt.pop %v1026
    %v1035 = vrsqrt.pop %v1027
    %v1036 = vrsqrt.pop %v1028
    %v1037 = vrsqrt.pop %v1029
    %v1038 = vrsqrt.pop %v1030
    %v1039 = vrsqrt.pop %v1031
    %v1040 = vrsqrt.pop %v1032
    %v1041 = vmul.f32 %v993, %v1033
    %v1042 = vmul.f32 %v994, %v1034
    %v1043 = vmul.f32 %v995, %v1035
    %v1044 = vmul.f32 %v996, %v1036
    %v1045 = vmul.f32 %v997, %v1037
    %v1046 = vmul.f32 %v998, %v1038
    %v1047 = vmul.f32 %v999, %v1039
    %v1048 = vmul.f32 %v1000, %v1040
    %1049 = vst [vmem:[#allocation2] sm:$0xff] %v1041
    %1050 = vst [vmem:[#allocation2 + $0x8] sm:$0xff] %v1042
    %1051 = vst [vmem:[#allocation2 + $0x10] sm:$0xff] %v1043
    %1052 = vst [vmem:[#allocation2 + $0x18] sm:$0xff] %v1044
    %1053 = vst [vmem:[#allocation2 + $0x20] sm:$0xff] %v1045
    %1054 = vst [vmem:[#allocation2 + $0x28] sm:$0xff] %v1046
    %1055 = vst [vmem:[#allocation2 + $0x30] sm:$0xff] %v1047
    %1056 = vst [vmem:[#allocation2 + $0x38] sm:$0xff] %v1048
    %v1057 = vld [vmem:[#allocation2] sm:$0xff]
    %v1058 = vld [vmem:[#allocation2 + $0x8] sm:$0xff]
    %v1059 = vld [vmem:[#allocation2 + $0x10] sm:$0xff]
    %v1060 = vld [vmem:[#allocation2 + $0x18] sm:$0xff]
    %v1061 = vld [vmem:[#allocation2 + $0x20] sm:$0xff]
    %v1062 = vld [vmem:[#allocation2 + $0x28] sm:$0xff]
    %v1063 = vld [vmem:[#allocation2 + $0x30] sm:$0xff]
    %v1064 = vld [vmem:[#allocation2 + $0x38] sm:$0xff]
    %v1065 = vld [vmem:[#allocation3] sm:$0xf]
    %v1066 = vld [vmem:[#allocation3 + $0x4] sm:$0xf]
    %v1067 = vld [vmem:[#allocation3 + $0x8] sm:$0xf]
    %v1068 = vld [vmem:[#allocation3 + $0xc] sm:$0xf]
    %v1069 = vld [vmem:[#allocation3 + $0x10] sm:$0xf]
    %v1070 = vld [vmem:[#allocation3 + $0x14] sm:$0xf]
    %v1071 = vld [vmem:[#allocation3 + $0x18] sm:$0xf]
    %v1072 = vld [vmem:[#allocation3 + $0x1c] sm:$0xf]
    %v1073 = vpack.c.bf16 %v1058, %v1057
    %v1074 = vpack.c.bf16 %v1060, %v1059
    %v1075 = vpack.c.bf16 %v1062, %v1061
    %v1076 = vpack.c.bf16 %v1064, %v1063
    %v1085 = vunpack.c.l.b16 %v1065
    %v1086 = vunpack.c.l.b16 %v1066
    %v1087 = vunpack.c.l.b16 %v1067
    %v1088 = vunpack.c.l.b16 %v1068
    %v1089 = vunpack.c.l.b16 %v1069
    %v1090 = vunpack.c.l.b16 %v1070
    %v1091 = vunpack.c.l.b16 %v1071
    %v1092 = vunpack.c.l.b16 %v1072
    %v1093 = vpack.c.b16 %v1086, %v1085
    %v1094 = vpack.c.b16 %v1088, %v1087
    %v1095 = vpack.c.b16 %v1090, %v1089
    %v1096 = vpack.c.b16 %v1092, %v1091
    %v1098 = vsel %vm106, %v1093, 0
    %v1101 = vsel %vm106, %v1094, 0
    %v1104 = vsel %vm106, %v1095, 0
    %v1107 = vsel %vm106, %v1096, 0
    %1109 = vmatprep.subr.bf16.mxu0 0
    %1110 = vmatpush1.bf16.msra.mxu0 %v1073
    %1111 = vmatprep.subr.bf16.mxu0 0
    %1112 = vmatpush1.bf16.msra.mxu0 %v1074
    %1113 = vmatprep.subr.bf16.mxu0 0
    %1114 = vmatpush1.bf16.msra.mxu0 %v1075
    %1115 = vmatprep.subr.bf16.mxu0 0
    %1116 = vmatpush1.bf16.msra.mxu0 %v1076
    %1117 = vmatprep.subr.bf16.mxu0 0
    %1118 = vmatpush1.bf16.msra.mxu0 0
    %1119 = vmatprep.subr.bf16.mxu0 0
    %1120 = vmatpush1.bf16.msra.mxu0 0
    %1121 = vmatprep.subr.bf16.mxu0 0
    %1122 = vmatpush1.bf16.msra.mxu0 0
    %1123 = vmatprep.subr.bf16.mxu0 0
    %1124 = vmatpush1.bf16.msra.mxu0 0
    %1125 = vmatprep.subr.bf16.mxu0 0
    %1126 = vmatpush1.bf16.msra.mxu0 0
    %1127 = vmatprep.subr.bf16.mxu0 0
    %1128 = vmatpush1.bf16.msra.mxu0 0
    %1129 = vmatprep.subr.bf16.mxu0 0
    %1130 = vmatpush1.bf16.msra.mxu0 0
    %1131 = vmatprep.subr.bf16.mxu0 0
    %1132 = vmatpush1.bf16.msra.mxu0 0
    %1133 = vmatprep.subr.bf16.mxu0 0
    %1134 = vmatpush1.bf16.msra.mxu0 0
    %1135 = vmatprep.subr.bf16.mxu0 0
    %1136 = vmatpush1.bf16.msra.mxu0 0
    %1137 = vmatprep.subr.bf16.mxu0 0
    %1138 = vmatpush1.bf16.msra.mxu0 0
    %1139 = vmatprep.subr.bf16.mxu0 0
    %1140 = vmatpush1.bf16.msra.mxu0 0
    %1141 = vmatprep.mubr.bf16.mxu0 0
    %1142 = vmatmul.mubr.bf16.gmra.mrb[0].mxu0 %v1098
    %v1143 = vpop.f32.mrb[0].mxu0
    %v1144 = vadd.f32 0.0, %v1143
    %v1145 = vpop.f32.mrb[0].mxu0
    %v1146 = vpop.f32.mrb[0].mxu0
    %v1147 = vadd.f32 0.0, %v1146
    %v1148 = vpop.f32.mrb[0].mxu0
    %1149 = vmatprep.mubr.bf16.mxu0 0
    %1150 = vmatmul.mubr.bf16.gmra.mrb[0].mxu0 %v1101
    %v1151 = vpop.f32.mrb[0].mxu0
    %v1152 = vadd.f32 0.0, %v1151
    %v1153 = vpop.f32.mrb[0].mxu0
    %v1154 = vpop.f32.mrb[0].mxu0
    %v1155 = vadd.f32 0.0, %v1154
    %v1156 = vpop.f32.mrb[0].mxu0
    %1157 = vmatprep.mubr.bf16.mxu0 0
    %1158 = vmatmul.mubr.bf16.gmra.mrb[0].mxu0 %v1104
    %v1159 = vpop.f32.mrb[0].mxu0
    %v1160 = vadd.f32 0.0, %v1159
    %v1161 = vpop.f32.mrb[0].mxu0
    %v1162 = vpop.f32.mrb[0].mxu0
    %v1163 = vadd.f32 0.0, %v1162
    %v1164 = vpop.f32.mrb[0].mxu0
    %1165 = vmatprep.mubr.bf16.mxu0 0
    %1166 = vmatmul.mubr.bf16.gmra.mrb[0].mxu0 %v1107
    %v1167 = vpop.f32.mrb[0].mxu0
    %v1168 = vadd.f32 0.0, %v1167
    %v1169 = vpop.f32.mrb[0].mxu0
    %v1170 = vpop.f32.mrb[0].mxu0
    %v1171 = vadd.f32 0.0, %v1170
    %v1172 = vpop.f32.mrb[0].mxu0
    %1173 = vdwg.mxu0
    %v1174 = vld [vmem:[%s2] sm:$0xff]
    %v1175 = vld [vmem:[%s2 + $0x8] sm:$0xff]
    %v1176 = vld [vmem:[%s2 + $0x10] sm:$0xff]
    %v1177 = vld [vmem:[%s2 + $0x18] sm:$0xff]
    %v1178 = vld [vmem:[%s2 + $0x20] sm:$0xff]
    %v1179 = vld [vmem:[%s2 + $0x28] sm:$0xff]
    %v1180 = vld [vmem:[%s2 + $0x30] sm:$0xff]
    %v1181 = vld [vmem:[%s2 + $0x38] sm:$0xff]
    %1183 = vset.pattern.permute.xlu0 0
    %1184 = vperm.xlu0 %1183, %v1174
    %v1185 = vpop.permute.xlu0 %1184
    %1188 = vset.pattern.permute.xlu0 0
    %1189 = vperm.xlu0 %1188, %v1175
    %v1190 = vpop.permute.xlu0 %1189
    %1193 = vset.pattern.permute.xlu0 0
    %1194 = vperm.xlu0 %1193, %v1176
    %v1195 = vpop.permute.xlu0 %1194
    %1198 = vset.pattern.permute.xlu0 0
    %1199 = vperm.xlu0 %1198, %v1177
    %v1200 = vpop.permute.xlu0 %1199
    %1203 = vset.pattern.permute.xlu0 0
    %1204 = vperm.xlu0 %1203, %v1178
    %v1205 = vpop.permute.xlu0 %1204
    %1208 = vset.pattern.permute.xlu0 0
    %1209 = vperm.xlu0 %1208, %v1179
    %v1210 = vpop.permute.xlu0 %1209
    %1213 = vset.pattern.permute.xlu0 0
    %1214 = vperm.xlu0 %1213, %v1180
    %v1215 = vpop.permute.xlu0 %1214
    %1218 = vset.pattern.permute.xlu0 0
    %1219 = vperm.xlu0 %1218, %v1181
    %v1220 = vpop.permute.xlu0 %1219
    %v1222 = vmul.f32 %v1144, %v1185
    %v1223 = vmul.f32 %v1147, %v1190
    %v1224 = vmul.f32 %v1152, %v1195
    %v1225 = vmul.f32 %v1155, %v1200
    %v1226 = vmul.f32 %v1160, %v1205
    %v1227 = vmul.f32 %v1163, %v1210
    %v1228 = vmul.f32 %v1168, %v1215
    %v1229 = vmul.f32 %v1171, %v1220
    %s1230 = scalar_lea.vmem [#allocation6], 512
    %v1231 = vld [vmem:[%s1230] sm:$0xff]
    %v1232 = vld [vmem:[%s1230 + $0x8] sm:$0xff]
    %v1233 = vld [vmem:[%s1230 + $0x10] sm:$0xff]
    %v1234 = vld [vmem:[%s1230 + $0x18] sm:$0xff]
    %v1235 = vld [vmem:[%s1230 + $0x20] sm:$0xff]
    %v1236 = vld [vmem:[%s1230 + $0x28] sm:$0xff]
    %v1237 = vld [vmem:[%s1230 + $0x30] sm:$0xff]
    %v1238 = vld [vmem:[%s1230 + $0x38] sm:$0xff]
    %v1239 = vld [vmem:[%s1230 + $0x40] sm:$0xff]
    %v1240 = vld [vmem:[%s1230 + $0x48] sm:$0xff]
    %v1241 = vld [vmem:[%s1230 + $0x50] sm:$0xff]
    %v1242 = vld [vmem:[%s1230 + $0x58] sm:$0xff]
    %v1243 = vld [vmem:[%s1230 + $0x60] sm:$0xff]
    %v1244 = vld [vmem:[%s1230 + $0x68] sm:$0xff]
    %v1245 = vld [vmem:[%s1230 + $0x70] sm:$0xff]
    %v1246 = vld [vmem:[%s1230 + $0x78] sm:$0xff]
    %v1247 = vld [vmem:[%s1230 + $0x80] sm:$0xff]
    %v1248 = vld [vmem:[%s1230 + $0x88] sm:$0xff]
    %v1249 = vld [vmem:[%s1230 + $0x90] sm:$0xff]
    %v1250 = vld [vmem:[%s1230 + $0x98] sm:$0xff]
    %v1251 = vld [vmem:[%s1230 + $0xa0] sm:$0xff]
    %v1252 = vld [vmem:[%s1230 + $0xa8] sm:$0xff]
    %v1253 = vld [vmem:[%s1230 + $0xb0] sm:$0xff]
    %v1254 = vld [vmem:[%s1230 + $0xb8] sm:$0xff]
    %v1255 = vld [vmem:[%s1230 + $0xc0] sm:$0xff]
    %v1256 = vld [vmem:[%s1230 + $0xc8] sm:$0xff]
    %v1257 = vld [vmem:[%s1230 + $0xd0] sm:$0xff]
    %v1258 = vld [vmem:[%s1230 + $0xd8] sm:$0xff]
    %v1259 = vld [vmem:[%s1230 + $0xe0] sm:$0xff]
    %v1260 = vld [vmem:[%s1230 + $0xe8] sm:$0xff]
    %v1261 = vld [vmem:[%s1230 + $0xf0] sm:$0xff]
    %v1262 = vld [vmem:[%s1230 + $0xf8] sm:$0xff]
    %1263 = vmatprep.subr.mxu0 0.0
    %1264 = vmatpush1.msra.mxu0 %v1247
    %1265 = vmatprep.subr.mxu0 0.0
    %1266 = vmatpush1.msra.mxu0 %v1248
    %1267 = vmatprep.subr.mxu0 0.0
    %1268 = vmatpush1.msra.mxu0 %v1249
    %1269 = vmatprep.subr.mxu0 0.0
    %1270 = vmatpush1.msra.mxu0 %v1250
    %1271 = vmatprep.subr.mxu0 0.0
    %1272 = vmatpush1.msra.mxu0 %v1251
    %1273 = vmatprep.subr.mxu0 0.0
    %1274 = vmatpush1.msra.mxu0 %v1252
    %1275 = vmatprep.subr.mxu0 0.0
    %1276 = vmatpush1.msra.mxu0 %v1253
    %1277 = vmatprep.subr.mxu0 0.0
    %1278 = vmatpush1.msra.mxu0 %v1254
    %1279 = vmatprep.subr.mxu0 0.0
    %1280 = vmatpush1.msra.mxu0 %v1255
    %1281 = vmatprep.subr.mxu0 0.0
    %1282 = vmatpush1.msra.mxu0 %v1256
    %1283 = vmatprep.subr.mxu0 0.0
    %1284 = vmatpush1.msra.mxu0 %v1257
    %1285 = vmatprep.subr.mxu0 0.0
    %1286 = vmatpush1.msra.mxu0 %v1258
    %1287 = vmatprep.subr.mxu0 0.0
    %1288 = vmatpush1.msra.mxu0 %v1259
    %1289 = vmatprep.subr.mxu0 0.0
    %1290 = vmatpush1.msra.mxu0 %v1260
    %1291 = vmatprep.subr.mxu0 0.0
    %1292 = vmatpush1.msra.mxu0 %v1261
    %1293 = vmatprep.subr.mxu0 0.0
    %1294 = vmatpush1.msra.mxu0 %v1262
    %1295 = vmatprep.subr.mxu0 0.0
    %1296 = vmatpush1.msra.mxu0 0.0
    %1297 = vmatprep.subr.mxu0 0.0
    %1298 = vmatpush1.msra.mxu0 0.0
    %1299 = vmatprep.subr.mxu0 0.0
    %1300 = vmatpush1.msra.mxu0 0.0
    %1301 = vmatprep.subr.mxu0 0.0
    %1302 = vmatpush1.msra.mxu0 0.0
    %1303 = vmatprep.subr.mxu0 0.0
    %1304 = vmatpush1.msra.mxu0 0.0
    %1305 = vmatprep.subr.mxu0 0.0
    %1306 = vmatpush1.msra.mxu0 0.0
    %1307 = vmatprep.subr.mxu0 0.0
    %1308 = vmatpush1.msra.mxu0 0.0
    %1309 = vmatprep.subr.mxu0 0.0
    %1310 = vmatpush1.msra.mxu0 0.0
    %1311 = vmatprep.subr.mxu0 0.0
    %1312 = vmatpush1.msra.mxu0 0.0
    %1313 = vmatprep.subr.mxu0 0.0
    %1314 = vmatpush1.msra.mxu0 0.0
    %1315 = vmatprep.subr.mxu0 0.0
    %1316 = vmatpush1.msra.mxu0 0.0
    %1317 = vmatprep.subr.mxu0 0.0
    %1318 = vmatpush1.msra.mxu0 0.0
    %1319 = vmatprep.subr.mxu0 0.0
    %1320 = vmatpush1.msra.mxu0 0.0
    %1321 = vmatprep.subr.mxu0 0.0
    %1322 = vmatpush1.msra.mxu0 0.0
    %1323 = vmatprep.subr.mxu0 0.0
    %1324 = vmatpush1.msra.mxu0 0.0
    %1325 = vmatprep.subr.mxu0 0.0
    %1326 = vmatpush1.msra.mxu0 0.0
    %1327 = vmatprep.mubr.f32.mxu0 0.0
    %1328 = vmatmul.mubr.f32.gmra.mrb[0].mxu0 %v1222
    %v1329 = vpop.f32.mrb[0].mxu0
    %v1330 = vadd.f32 0.0, %v1329
    %v1331 = vpop.f32.mrb[0].mxu0
    %1332 = vmatprep.mubr.f32.mxu0 0.0
    %1333 = vmatmul.mubr.f32.gmra.mrb[0].mxu0 %v1223
    %v1334 = vpop.f32.mrb[0].mxu0
    %v1335 = vadd.f32 0.0, %v1334
    %v1336 = vpop.f32.mrb[0].mxu0
    %1337 = vmatprep.mubr.f32.mxu0 0.0
    %1338 = vmatmul.mubr.f32.gmra.mrb[0].mxu0 %v1224
    %v1339 = vpop.f32.mrb[0].mxu0
    %v1340 = vadd.f32 0.0, %v1339
    %v1341 = vpop.f32.mrb[0].mxu0
    %1342 = vmatprep.mubr.f32.mxu0 0.0
    %1343 = vmatmul.mubr.f32.gmra.mrb[0].mxu0 %v1225
    %v1344 = vpop.f32.mrb[0].mxu0
    %v1345 = vadd.f32 0.0, %v1344
    %v1346 = vpop.f32.mrb[0].mxu0
    %1347 = vmatprep.mubr.f32.mxu0 0.0
    %1348 = vmatmul.mubr.f32.gmra.mrb[0].mxu0 %v1226
    %v1349 = vpop.f32.mrb[0].mxu0
    %v1350 = vadd.f32 0.0, %v1349
    %v1351 = vpop.f32.mrb[0].mxu0
    %1352 = vmatprep.mubr.f32.mxu0 0.0
    %1353 = vmatmul.mubr.f32.gmra.mrb[0].mxu0 %v1227
    %v1354 = vpop.f32.mrb[0].mxu0
    %v1355 = vadd.f32 0.0, %v1354
    %v1356 = vpop.f32.mrb[0].mxu0
    %1357 = vmatprep.mubr.f32.mxu0 0.0
    %1358 = vmatmul.mubr.f32.gmra.mrb[0].mxu0 %v1228
    %v1359 = vpop.f32.mrb[0].mxu0
    %v1360 = vadd.f32 0.0, %v1359
    %v1361 = vpop.f32.mrb[0].mxu0
    %1362 = vmatprep.mubr.f32.mxu0 0.0
    %1363 = vmatmul.mubr.f32.gmra.mrb[0].mxu0 %v1229
    %v1364 = vpop.f32.mrb[0].mxu0
    %v1365 = vadd.f32 0.0, %v1364
    %v1366 = vpop.f32.mrb[0].mxu0
    %1367 = vdwg.mxu0
    %1368 = vmatprep.subr.mxu0 0.0
    %1369 = vmatpush1.msra.mxu0 %v1231
    %1370 = vmatprep.subr.mxu0 0.0
    %1371 = vmatpush1.msra.mxu0 %v1232
    %1372 = vmatprep.subr.mxu0 0.0
    %1373 = vmatpush1.msra.mxu0 %v1233
    %1374 = vmatprep.subr.mxu0 0.0
    %1375 = vmatpush1.msra.mxu0 %v1234
    %1376 = vmatprep.subr.mxu0 0.0
    %1377 = vmatpush1.msra.mxu0 %v1235
    %1378 = vmatprep.subr.mxu0 0.0
    %1379 = vmatpush1.msra.mxu0 %v1236
    %1380 = vmatprep.subr.mxu0 0.0
    %1381 = vmatpush1.msra.mxu0 %v1237
    %1382 = vmatprep.subr.mxu0 0.0
    %1383 = vmatpush1.msra.mxu0 %v1238
    %1384 = vmatprep.subr.mxu0 0.0
    %1385 = vmatpush1.msra.mxu0 %v1239
    %1386 = vmatprep.subr.mxu0 0.0
    %1387 = vmatpush1.msra.mxu0 %v1240
    %1388 = vmatprep.subr.mxu0 0.0
    %1389 = vmatpush1.msra.mxu0 %v1241
    %1390 = vmatprep.subr.mxu0 0.0
    %1391 = vmatpush1.msra.mxu0 %v1242
    %1392 = vmatprep.subr.mxu0 0.0
    %1393 = vmatpush1.msra.mxu0 %v1243
    %1394 = vmatprep.subr.mxu0 0.0
    %1395 = vmatpush1.msra.mxu0 %v1244
    %1396 = vmatprep.subr.mxu0 0.0
    %1397 = vmatpush1.msra.mxu0 %v1245
    %1398 = vmatprep.subr.mxu0 0.0
    %1399 = vmatpush1.msra.mxu0 %v1246
    %1400 = vmatprep.subr.mxu0 0.0
    %1401 = vmatpush1.msra.mxu0 0.0
    %1402 = vmatprep.subr.mxu0 0.0
    %1403 = vmatpush1.msra.mxu0 0.0
    %1404 = vmatprep.subr.mxu0 0.0
    %1405 = vmatpush1.msra.mxu0 0.0
    %1406 = vmatprep.subr.mxu0 0.0
    %1407 = vmatpush1.msra.mxu0 0.0
    %1408 = vmatprep.subr.mxu0 0.0
    %1409 = vmatpush1.msra.mxu0 0.0
    %1410 = vmatprep.subr.mxu0 0.0
    %1411 = vmatpush1.msra.mxu0 0.0
    %1412 = vmatprep.subr.mxu0 0.0
    %1413 = vmatpush1.msra.mxu0 0.0
    %1414 = vmatprep.subr.mxu0 0.0
    %1415 = vmatpush1.msra.mxu0 0.0
    %1416 = vmatprep.subr.mxu0 0.0
    %1417 = vmatpush1.msra.mxu0 0.0
    %1418 = vmatprep.subr.mxu0 0.0
    %1419 = vmatpush1.msra.mxu0 0.0
    %1420 = vmatprep.subr.mxu0 0.0
    %1421 = vmatpush1.msra.mxu0 0.0
    %1422 = vmatprep.subr.mxu0 0.0
    %1423 = vmatpush1.msra.mxu0 0.0
    %1424 = vmatprep.subr.mxu0 0.0
    %1425 = vmatpush1.msra.mxu0 0.0
    %1426 = vmatprep.subr.mxu0 0.0
    %1427 = vmatpush1.msra.mxu0 0.0
    %1428 = vmatprep.subr.mxu0 0.0
    %1429 = vmatpush1.msra.mxu0 0.0
    %1430 = vmatprep.subr.mxu0 0.0
    %1431 = vmatpush1.msra.mxu0 0.0
    %1432 = vmatprep.mubr.f32.mxu0 0.0
    %1433 = vmatmul.mubr.f32.gmra.mrb[0].mxu0 %v1057
    %v1434 = vpop.f32.mrb[0].mxu0
    %v1435 = vadd.f32 %v1330, %v1434
    %v1436 = vpop.f32.mrb[0].mxu0
    %1437 = vmatprep.mubr.f32.mxu0 0.0
    %1438 = vmatmul.mubr.f32.gmra.mrb[0].mxu0 %v1058
    %v1439 = vpop.f32.mrb[0].mxu0
    %v1440 = vadd.f32 %v1335, %v1439
    %v1441 = vpop.f32.mrb[0].mxu0
    %1442 = vmatprep.mubr.f32.mxu0 0.0
    %1443 = vmatmul.mubr.f32.gmra.mrb[0].mxu0 %v1059
    %v1444 = vpop.f32.mrb[0].mxu0
    %v1445 = vadd.f32 %v1340, %v1444
    %v1446 = vpop.f32.mrb[0].mxu0
    %1447 = vmatprep.mubr.f32.mxu0 0.0
    %1448 = vmatmul.mubr.f32.gmra.mrb[0].mxu0 %v1060
    %v1449 = vpop.f32.mrb[0].mxu0
    %v1450 = vadd.f32 %v1345, %v1449
    %v1451 = vpop.f32.mrb[0].mxu0
    %1452 = vmatprep.mubr.f32.mxu0 0.0
    %1453 = vmatmul.mubr.f32.gmra.mrb[0].mxu0 %v1061
    %v1454 = vpop.f32.mrb[0].mxu0
    %v1455 = vadd.f32 %v1350, %v1454
    %v1456 = vpop.f32.mrb[0].mxu0
    %1457 = vmatprep.mubr.f32.mxu0 0.0
    %1458 = vmatmul.mubr.f32.gmra.mrb[0].mxu0 %v1062
    %v1459 = vpop.f32.mrb[0].mxu0
    %v1460 = vadd.f32 %v1355, %v1459
    %v1461 = vpop.f32.mrb[0].mxu0
    %1462 = vmatprep.mubr.f32.mxu0 0.0
    %1463 = vmatmul.mubr.f32.gmra.mrb[0].mxu0 %v1063
    %v1464 = vpop.f32.mrb[0].mxu0
    %v1465 = vadd.f32 %v1360, %v1464
    %v1466 = vpop.f32.mrb[0].mxu0
    %1467 = vmatprep.mubr.f32.mxu0 0.0
    %1468 = vmatmul.mubr.f32.gmra.mrb[0].mxu0 %v1064
    %v1469 = vpop.f32.mrb[0].mxu0
    %v1470 = vadd.f32 %v1365, %v1469
    %v1471 = vpop.f32.mrb[0].mxu0
    %1472 = vdwg.mxu0
    %s1473 = scalar_lea.vmem %s4, 2
    %v1474 = vld [vmem:[%s1473] sm:$0x1]
    %v1476 = vlaneseq
    %v1477 = vshrl.u32 %v1476, 7
    %v1478 = vsub.s32 0, %v1477
    %v1479 = vrot.slane %v1474, %v1478
    %v1481 = vadd.f32 %v1435, %v1479
    %v1482 = vadd.f32 %v1440, %v1479
    %v1483 = vadd.f32 %v1445, %v1479
    %v1484 = vadd.f32 %v1450, %v1479
    %v1485 = vadd.f32 %v1455, %v1479
    %v1486 = vadd.f32 %v1460, %v1479
    %v1487 = vadd.f32 %v1465, %v1479
    %v1488 = vadd.f32 %v1470, %v1479
    %v1489 = vmax.f32 %v1481, 0.0
    %v1490 = vmax.f32 %v1482, 0.0
    %v1491 = vmax.f32 %v1483, 0.0
    %v1492 = vmax.f32 %v1484, 0.0
    %v1493 = vmax.f32 %v1485, 0.0
    %v1494 = vmax.f32 %v1486, 0.0
    %v1495 = vmax.f32 %v1487, 0.0
    %v1496 = vmax.f32 %v1488, 0.0
    %v1497 = vmul.f32 %v1489, %v1489
    %v1498 = vmul.f32 %v1490, %v1490
    %v1499 = vmul.f32 %v1491, %v1491
    %v1500 = vmul.f32 %v1492, %v1492
    %v1501 = vmul.f32 %v1493, %v1493
    %v1502 = vmul.f32 %v1494, %v1494
    %v1503 = vmul.f32 %v1495, %v1495
    %v1504 = vmul.f32 %v1496, %v1496
    %1505 = vadd.xlane.f32.xlu0 %v1497
    %v1506 = vpop.xlane.xlu0 %1505
    %1507 = vadd.xlane.f32.xlu0 %v1498
    %v1508 = vpop.xlane.xlu0 %1507
    %1509 = vadd.xlane.f32.xlu0 %v1499
    %v1510 = vpop.xlane.xlu0 %1509
    %1511 = vadd.xlane.f32.xlu0 %v1500
    %v1512 = vpop.xlane.xlu0 %1511
    %1513 = vadd.xlane.f32.xlu0 %v1501
    %v1514 = vpop.xlane.xlu0 %1513
    %1515 = vadd.xlane.f32.xlu0 %v1502
    %v1516 = vpop.xlane.xlu0 %1515
    %1517 = vadd.xlane.f32.xlu0 %v1503
    %v1518 = vpop.xlane.xlu0 %1517
    %1519 = vadd.xlane.f32.xlu0 %v1504
    %v1520 = vpop.xlane.xlu0 %1519
    %v1521 = vmax.f32 %v1506, 1e-24
    %v1522 = vmax.f32 %v1508, 1e-24
    %v1523 = vmax.f32 %v1510, 1e-24
    %v1524 = vmax.f32 %v1512, 1e-24
    %v1525 = vmax.f32 %v1514, 1e-24
    %v1526 = vmax.f32 %v1516, 1e-24
    %v1527 = vmax.f32 %v1518, 1e-24
    %v1528 = vmax.f32 %v1520, 1e-24
    %v1529 = vrsqrt.pop %v1521
    %v1530 = vrsqrt.pop %v1522
    %v1531 = vrsqrt.pop %v1523
    %v1532 = vrsqrt.pop %v1524
    %v1533 = vrsqrt.pop %v1525
    %v1534 = vrsqrt.pop %v1526
    %v1535 = vrsqrt.pop %v1527
    %v1536 = vrsqrt.pop %v1528
    %v1537 = vmul.f32 %v1489, %v1529
    %v1538 = vmul.f32 %v1490, %v1530
    %v1539 = vmul.f32 %v1491, %v1531
    %v1540 = vmul.f32 %v1492, %v1532
    %v1541 = vmul.f32 %v1493, %v1533
    %v1542 = vmul.f32 %v1494, %v1534
    %v1543 = vmul.f32 %v1495, %v1535
    %v1544 = vmul.f32 %v1496, %v1536
    %1545 = vst [vmem:[#allocation2] sm:$0xff] %v1537
    %1546 = vst [vmem:[#allocation2 + $0x8] sm:$0xff] %v1538
    %1547 = vst [vmem:[#allocation2 + $0x10] sm:$0xff] %v1539
    %1548 = vst [vmem:[#allocation2 + $0x18] sm:$0xff] %v1540
    %1549 = vst [vmem:[#allocation2 + $0x20] sm:$0xff] %v1541
    %1550 = vst [vmem:[#allocation2 + $0x28] sm:$0xff] %v1542
    %1551 = vst [vmem:[#allocation2 + $0x30] sm:$0xff] %v1543
    %1552 = vst [vmem:[#allocation2 + $0x38] sm:$0xff] %v1544
    %v1553 = vld [vmem:[#allocation2] sm:$0xff]
    %v1554 = vld [vmem:[#allocation2 + $0x8] sm:$0xff]
    %v1555 = vld [vmem:[#allocation2 + $0x10] sm:$0xff]
    %v1556 = vld [vmem:[#allocation2 + $0x18] sm:$0xff]
    %v1557 = vld [vmem:[#allocation2 + $0x20] sm:$0xff]
    %v1558 = vld [vmem:[#allocation2 + $0x28] sm:$0xff]
    %v1559 = vld [vmem:[#allocation2 + $0x30] sm:$0xff]
    %v1560 = vld [vmem:[#allocation2 + $0x38] sm:$0xff]
    %v1561 = vld [vmem:[#allocation3] sm:$0xf]
    %v1562 = vld [vmem:[#allocation3 + $0x4] sm:$0xf]
    %v1563 = vld [vmem:[#allocation3 + $0x8] sm:$0xf]
    %v1564 = vld [vmem:[#allocation3 + $0xc] sm:$0xf]
    %v1565 = vld [vmem:[#allocation3 + $0x10] sm:$0xf]
    %v1566 = vld [vmem:[#allocation3 + $0x14] sm:$0xf]
    %v1567 = vld [vmem:[#allocation3 + $0x18] sm:$0xf]
    %v1568 = vld [vmem:[#allocation3 + $0x1c] sm:$0xf]
    %v1569 = vpack.c.bf16 %v1554, %v1553
    %v1570 = vpack.c.bf16 %v1556, %v1555
    %v1571 = vpack.c.bf16 %v1558, %v1557
    %v1572 = vpack.c.bf16 %v1560, %v1559
    %v1581 = vunpack.c.l.b16 %v1561
    %v1582 = vunpack.c.l.b16 %v1562
    %v1583 = vunpack.c.l.b16 %v1563
    %v1584 = vunpack.c.l.b16 %v1564
    %v1585 = vunpack.c.l.b16 %v1565
    %v1586 = vunpack.c.l.b16 %v1566
    %v1587 = vunpack.c.l.b16 %v1567
    %v1588 = vunpack.c.l.b16 %v1568
    %v1589 = vpack.c.b16 %v1582, %v1581
    %v1590 = vpack.c.b16 %v1584, %v1583
    %v1591 = vpack.c.b16 %v1586, %v1585
    %v1592 = vpack.c.b16 %v1588, %v1587
    %v1594 = vsel %vm106, %v1589, 0
    %v1597 = vsel %vm106, %v1590, 0
    %v1600 = vsel %vm106, %v1591, 0
    %v1603 = vsel %vm106, %v1592, 0
    %1605 = vmatprep.subr.bf16.mxu0 0
    %1606 = vmatpush1.bf16.msra.mxu0 %v1569
    %1607 = vmatprep.subr.bf16.mxu0 0
    %1608 = vmatpush1.bf16.msra.mxu0 %v1570
    %1609 = vmatprep.subr.bf16.mxu0 0
    %1610 = vmatpush1.bf16.msra.mxu0 %v1571
    %1611 = vmatprep.subr.bf16.mxu0 0
    %1612 = vmatpush1.bf16.msra.mxu0 %v1572
    %1613 = vmatprep.subr.bf16.mxu0 0
    %1614 = vmatpush1.bf16.msra.mxu0 0
    %1615 = vmatprep.subr.bf16.mxu0 0
    %1616 = vmatpush1.bf16.msra.mxu0 0
    %1617 = vmatprep.subr.bf16.mxu0 0
    %1618 = vmatpush1.bf16.msra.mxu0 0
    %1619 = vmatprep.subr.bf16.mxu0 0
    %1620 = vmatpush1.bf16.msra.mxu0 0
    %1621 = vmatprep.subr.bf16.mxu0 0
    %1622 = vmatpush1.bf16.msra.mxu0 0
    %1623 = vmatprep.subr.bf16.mxu0 0
    %1624 = vmatpush1.bf16.msra.mxu0 0
    %1625 = vmatprep.subr.bf16.mxu0 0
    %1626 = vmatpush1.bf16.msra.mxu0 0
    %1627 = vmatprep.subr.bf16.mxu0 0
    %1628 = vmatpush1.bf16.msra.mxu0 0
    %1629 = vmatprep.subr.bf16.mxu0 0
    %1630 = vmatpush1.bf16.msra.mxu0 0
    %1631 = vmatprep.subr.bf16.mxu0 0
    %1632 = vmatpush1.bf16.msra.mxu0 0
    %1633 = vmatprep.subr.bf16.mxu0 0
    %1634 = vmatpush1.bf16.msra.mxu0 0
    %1635 = vmatprep.subr.bf16.mxu0 0
    %1636 = vmatpush1.bf16.msra.mxu0 0
    %1637 = vmatprep.mubr.bf16.mxu0 0
    %1638 = vmatmul.mubr.bf16.gmra.mrb[0].mxu0 %v1594
    %v1639 = vpop.f32.mrb[0].mxu0
    %v1640 = vadd.f32 0.0, %v1639
    %v1641 = vpop.f32.mrb[0].mxu0
    %v1642 = vpop.f32.mrb[0].mxu0
    %v1643 = vadd.f32 0.0, %v1642
    %v1644 = vpop.f32.mrb[0].mxu0
    %1645 = vmatprep.mubr.bf16.mxu0 0
    %1646 = vmatmul.mubr.bf16.gmra.mrb[0].mxu0 %v1597
    %v1647 = vpop.f32.mrb[0].mxu0
    %v1648 = vadd.f32 0.0, %v1647
    %v1649 = vpop.f32.mrb[0].mxu0
    %v1650 = vpop.f32.mrb[0].mxu0
    %v1651 = vadd.f32 0.0, %v1650
    %v1652 = vpop.f32.mrb[0].mxu0
    %1653 = vmatprep.mubr.bf16.mxu0 0
    %1654 = vmatmul.mubr.bf16.gmra.mrb[0].mxu0 %v1600
    %v1655 = vpop.f32.mrb[0].mxu0
    %v1656 = vadd.f32 0.0, %v1655
    %v1657 = vpop.f32.mrb[0].mxu0
    %v1658 = vpop.f32.mrb[0].mxu0
    %v1659 = vadd.f32 0.0, %v1658
    %v1660 = vpop.f32.mrb[0].mxu0
    %1661 = vmatprep.mubr.bf16.mxu0 0
    %1662 = vmatmul.mubr.bf16.gmra.mrb[0].mxu0 %v1603
    %v1663 = vpop.f32.mrb[0].mxu0
    %v1664 = vadd.f32 0.0, %v1663
    %v1665 = vpop.f32.mrb[0].mxu0
    %v1666 = vpop.f32.mrb[0].mxu0
    %v1667 = vadd.f32 0.0, %v1666
    %v1668 = vpop.f32.mrb[0].mxu0
    %1669 = vdwg.mxu0
    %v1670 = vld [vmem:[%s2] sm:$0xff]
    %v1671 = vld [vmem:[%s2 + $0x8] sm:$0xff]
    %v1672 = vld [vmem:[%s2 + $0x10] sm:$0xff]
    %v1673 = vld [vmem:[%s2 + $0x18] sm:$0xff]
    %v1674 = vld [vmem:[%s2 + $0x20] sm:$0xff]
    %v1675 = vld [vmem:[%s2 + $0x28] sm:$0xff]
    %v1676 = vld [vmem:[%s2 + $0x30] sm:$0xff]
    %v1677 = vld [vmem:[%s2 + $0x38] sm:$0xff]
    %1679 = vset.pattern.permute.xlu0 0
    %1680 = vperm.xlu0 %1679, %v1670
    %v1681 = vpop.permute.xlu0 %1680
    %1684 = vset.pattern.permute.xlu0 0
    %1685 = vperm.xlu0 %1684, %v1671
    %v1686 = vpop.permute.xlu0 %1685
    %1689 = vset.pattern.permute.xlu0 0
    %1690 = vperm.xlu0 %1689, %v1672
    %v1691 = vpop.permute.xlu0 %1690
    %1694 = vset.pattern.permute.xlu0 0
    %1695 = vperm.xlu0 %1694, %v1673
    %v1696 = vpop.permute.xlu0 %1695
    %1699 = vset.pattern.permute.xlu0 0
    %1700 = vperm.xlu0 %1699, %v1674
    %v1701 = vpop.permute.xlu0 %1700
    %1704 = vset.pattern.permute.xlu0 0
    %1705 = vperm.xlu0 %1704, %v1675
    %v1706 = vpop.permute.xlu0 %1705
    %1709 = vset.pattern.permute.xlu0 0
    %1710 = vperm.xlu0 %1709, %v1676
    %v1711 = vpop.permute.xlu0 %1710
    %1714 = vset.pattern.permute.xlu0 0
    %1715 = vperm.xlu0 %1714, %v1677
    %v1716 = vpop.permute.xlu0 %1715
    %v1718 = vmul.f32 %v1640, %v1681
    %v1719 = vmul.f32 %v1643, %v1686
    %v1720 = vmul.f32 %v1648, %v1691
    %v1721 = vmul.f32 %v1651, %v1696
    %v1722 = vmul.f32 %v1656, %v1701
    %v1723 = vmul.f32 %v1659, %v1706
    %v1724 = vmul.f32 %v1664, %v1711
    %v1725 = vmul.f32 %v1667, %v1716
    %s1726 = scalar_lea.vmem [#allocation6], 768
    %v1727 = vld [vmem:[%s1726] sm:$0xff]
    %v1728 = vld [vmem:[%s1726 + $0x8] sm:$0xff]
    %v1729 = vld [vmem:[%s1726 + $0x10] sm:$0xff]
    %v1730 = vld [vmem:[%s1726 + $0x18] sm:$0xff]
    %v1731 = vld [vmem:[%s1726 + $0x20] sm:$0xff]
    %v1732 = vld [vmem:[%s1726 + $0x28] sm:$0xff]
    %v1733 = vld [vmem:[%s1726 + $0x30] sm:$0xff]
    %v1734 = vld [vmem:[%s1726 + $0x38] sm:$0xff]
    %v1735 = vld [vmem:[%s1726 + $0x40] sm:$0xff]
    %v1736 = vld [vmem:[%s1726 + $0x48] sm:$0xff]
    %v1737 = vld [vmem:[%s1726 + $0x50] sm:$0xff]
    %v1738 = vld [vmem:[%s1726 + $0x58] sm:$0xff]
    %v1739 = vld [vmem:[%s1726 + $0x60] sm:$0xff]
    %v1740 = vld [vmem:[%s1726 + $0x68] sm:$0xff]
    %v1741 = vld [vmem:[%s1726 + $0x70] sm:$0xff]
    %v1742 = vld [vmem:[%s1726 + $0x78] sm:$0xff]
    %v1743 = vld [vmem:[%s1726 + $0x80] sm:$0xff]
    %v1744 = vld [vmem:[%s1726 + $0x88] sm:$0xff]
    %v1745 = vld [vmem:[%s1726 + $0x90] sm:$0xff]
    %v1746 = vld [vmem:[%s1726 + $0x98] sm:$0xff]
    %v1747 = vld [vmem:[%s1726 + $0xa0] sm:$0xff]
    %v1748 = vld [vmem:[%s1726 + $0xa8] sm:$0xff]
    %v1749 = vld [vmem:[%s1726 + $0xb0] sm:$0xff]
    %v1750 = vld [vmem:[%s1726 + $0xb8] sm:$0xff]
    %v1751 = vld [vmem:[%s1726 + $0xc0] sm:$0xff]
    %v1752 = vld [vmem:[%s1726 + $0xc8] sm:$0xff]
    %v1753 = vld [vmem:[%s1726 + $0xd0] sm:$0xff]
    %v1754 = vld [vmem:[%s1726 + $0xd8] sm:$0xff]
    %v1755 = vld [vmem:[%s1726 + $0xe0] sm:$0xff]
    %v1756 = vld [vmem:[%s1726 + $0xe8] sm:$0xff]
    %v1757 = vld [vmem:[%s1726 + $0xf0] sm:$0xff]
    %v1758 = vld [vmem:[%s1726 + $0xf8] sm:$0xff]
    %1759 = vmatprep.subr.mxu0 0.0
    %1760 = vmatpush1.msra.mxu0 %v1743
    %1761 = vmatprep.subr.mxu0 0.0
    %1762 = vmatpush1.msra.mxu0 %v1744
    %1763 = vmatprep.subr.mxu0 0.0
    %1764 = vmatpush1.msra.mxu0 %v1745
    %1765 = vmatprep.subr.mxu0 0.0
    %1766 = vmatpush1.msra.mxu0 %v1746
    %1767 = vmatprep.subr.mxu0 0.0
    %1768 = vmatpush1.msra.mxu0 %v1747
    %1769 = vmatprep.subr.mxu0 0.0
    %1770 = vmatpush1.msra.mxu0 %v1748
    %1771 = vmatprep.subr.mxu0 0.0
    %1772 = vmatpush1.msra.mxu0 %v1749
    %1773 = vmatprep.subr.mxu0 0.0
    %1774 = vmatpush1.msra.mxu0 %v1750
    %1775 = vmatprep.subr.mxu0 0.0
    %1776 = vmatpush1.msra.mxu0 %v1751
    %1777 = vmatprep.subr.mxu0 0.0
    %1778 = vmatpush1.msra.mxu0 %v1752
    %1779 = vmatprep.subr.mxu0 0.0
    %1780 = vmatpush1.msra.mxu0 %v1753
    %1781 = vmatprep.subr.mxu0 0.0
    %1782 = vmatpush1.msra.mxu0 %v1754
    %1783 = vmatprep.subr.mxu0 0.0
    %1784 = vmatpush1.msra.mxu0 %v1755
    %1785 = vmatprep.subr.mxu0 0.0
    %1786 = vmatpush1.msra.mxu0 %v1756
    %1787 = vmatprep.subr.mxu0 0.0
    %1788 = vmatpush1.msra.mxu0 %v1757
    %1789 = vmatprep.subr.mxu0 0.0
    %1790 = vmatpush1.msra.mxu0 %v1758
    %1791 = vmatprep.subr.mxu0 0.0
    %1792 = vmatpush1.msra.mxu0 0.0
    %1793 = vmatprep.subr.mxu0 0.0
    %1794 = vmatpush1.msra.mxu0 0.0
    %1795 = vmatprep.subr.mxu0 0.0
    %1796 = vmatpush1.msra.mxu0 0.0
    %1797 = vmatprep.subr.mxu0 0.0
    %1798 = vmatpush1.msra.mxu0 0.0
    %1799 = vmatprep.subr.mxu0 0.0
    %1800 = vmatpush1.msra.mxu0 0.0
    %1801 = vmatprep.subr.mxu0 0.0
    %1802 = vmatpush1.msra.mxu0 0.0
    %1803 = vmatprep.subr.mxu0 0.0
    %1804 = vmatpush1.msra.mxu0 0.0
    %1805 = vmatprep.subr.mxu0 0.0
    %1806 = vmatpush1.msra.mxu0 0.0
    %1807 = vmatprep.subr.mxu0 0.0
    %1808 = vmatpush1.msra.mxu0 0.0
    %1809 = vmatprep.subr.mxu0 0.0
    %1810 = vmatpush1.msra.mxu0 0.0
    %1811 = vmatprep.subr.mxu0 0.0
    %1812 = vmatpush1.msra.mxu0 0.0
    %1813 = vmatprep.subr.mxu0 0.0
    %1814 = vmatpush1.msra.mxu0 0.0
    %1815 = vmatprep.subr.mxu0 0.0
    %1816 = vmatpush1.msra.mxu0 0.0
    %1817 = vmatprep.subr.mxu0 0.0
    %1818 = vmatpush1.msra.mxu0 0.0
    %1819 = vmatprep.subr.mxu0 0.0
    %1820 = vmatpush1.msra.mxu0 0.0
    %1821 = vmatprep.subr.mxu0 0.0
    %1822 = vmatpush1.msra.mxu0 0.0
    %1823 = vmatprep.mubr.f32.mxu0 0.0
    %1824 = vmatmul.mubr.f32.gmra.mrb[0].mxu0 %v1718
    %v1825 = vpop.f32.mrb[0].mxu0
    %v1826 = vadd.f32 0.0, %v1825
    %v1827 = vpop.f32.mrb[0].mxu0
    %1828 = vmatprep.mubr.f32.mxu0 0.0
    %1829 = vmatmul.mubr.f32.gmra.mrb[0].mxu0 %v1719
    %v1830 = vpop.f32.mrb[0].mxu0
    %v1831 = vadd.f32 0.0, %v1830
    %v1832 = vpop.f32.mrb[0].mxu0
    %1833 = vmatprep.mubr.f32.mxu0 0.0
    %1834 = vmatmul.mubr.f32.gmra.mrb[0].mxu0 %v1720
    %v1835 = vpop.f32.mrb[0].mxu0
    %v1836 = vadd.f32 0.0, %v1835
    %v1837 = vpop.f32.mrb[0].mxu0
    %1838 = vmatprep.mubr.f32.mxu0 0.0
    %1839 = vmatmul.mubr.f32.gmra.mrb[0].mxu0 %v1721
    %v1840 = vpop.f32.mrb[0].mxu0
    %v1841 = vadd.f32 0.0, %v1840
    %v1842 = vpop.f32.mrb[0].mxu0
    %1843 = vmatprep.mubr.f32.mxu0 0.0
    %1844 = vmatmul.mubr.f32.gmra.mrb[0].mxu0 %v1722
    %v1845 = vpop.f32.mrb[0].mxu0
    %v1846 = vadd.f32 0.0, %v1845
    %v1847 = vpop.f32.mrb[0].mxu0
    %1848 = vmatprep.mubr.f32.mxu0 0.0
    %1849 = vmatmul.mubr.f32.gmra.mrb[0].mxu0 %v1723
    %v1850 = vpop.f32.mrb[0].mxu0
    %v1851 = vadd.f32 0.0, %v1850
    %v1852 = vpop.f32.mrb[0].mxu0
    %1853 = vmatprep.mubr.f32.mxu0 0.0
    %1854 = vmatmul.mubr.f32.gmra.mrb[0].mxu0 %v1724
    %v1855 = vpop.f32.mrb[0].mxu0
    %v1856 = vadd.f32 0.0, %v1855
    %v1857 = vpop.f32.mrb[0].mxu0
    %1858 = vmatprep.mubr.f32.mxu0 0.0
    %1859 = vmatmul.mubr.f32.gmra.mrb[0].mxu0 %v1725
    %v1860 = vpop.f32.mrb[0].mxu0
    %v1861 = vadd.f32 0.0, %v1860
    %v1862 = vpop.f32.mrb[0].mxu0
    %1863 = vdwg.mxu0
    %1864 = vmatprep.subr.mxu0 0.0
    %1865 = vmatpush1.msra.mxu0 %v1727
    %1866 = vmatprep.subr.mxu0 0.0
    %1867 = vmatpush1.msra.mxu0 %v1728
    %1868 = vmatprep.subr.mxu0 0.0
    %1869 = vmatpush1.msra.mxu0 %v1729
    %1870 = vmatprep.subr.mxu0 0.0
    %1871 = vmatpush1.msra.mxu0 %v1730
    %1872 = vmatprep.subr.mxu0 0.0
    %1873 = vmatpush1.msra.mxu0 %v1731
    %1874 = vmatprep.subr.mxu0 0.0
    %1875 = vmatpush1.msra.mxu0 %v1732
    %1876 = vmatprep.subr.mxu0 0.0
    %1877 = vmatpush1.msra.mxu0 %v1733
    %1878 = vmatprep.subr.mxu0 0.0
    %1879 = vmatpush1.msra.mxu0 %v1734
    %1880 = vmatprep.subr.mxu0 0.0
    %1881 = vmatpush1.msra.mxu0 %v1735
    %1882 = vmatprep.subr.mxu0 0.0
    %1883 = vmatpush1.msra.mxu0 %v1736
    %1884 = vmatprep.subr.mxu0 0.0
    %1885 = vmatpush1.msra.mxu0 %v1737
    %1886 = vmatprep.subr.mxu0 0.0
    %1887 = vmatpush1.msra.mxu0 %v1738
    %1888 = vmatprep.subr.mxu0 0.0
    %1889 = vmatpush1.msra.mxu0 %v1739
    %1890 = vmatprep.subr.mxu0 0.0
    %1891 = vmatpush1.msra.mxu0 %v1740
    %1892 = vmatprep.subr.mxu0 0.0
    %1893 = vmatpush1.msra.mxu0 %v1741
    %1894 = vmatprep.subr.mxu0 0.0
    %1895 = vmatpush1.msra.mxu0 %v1742
    %1896 = vmatprep.subr.mxu0 0.0
    %1897 = vmatpush1.msra.mxu0 0.0
    %1898 = vmatprep.subr.mxu0 0.0
    %1899 = vmatpush1.msra.mxu0 0.0
    %1900 = vmatprep.subr.mxu0 0.0
    %1901 = vmatpush1.msra.mxu0 0.0
    %1902 = vmatprep.subr.mxu0 0.0
    %1903 = vmatpush1.msra.mxu0 0.0
    %1904 = vmatprep.subr.mxu0 0.0
    %1905 = vmatpush1.msra.mxu0 0.0
    %1906 = vmatprep.subr.mxu0 0.0
    %1907 = vmatpush1.msra.mxu0 0.0
    %1908 = vmatprep.subr.mxu0 0.0
    %1909 = vmatpush1.msra.mxu0 0.0
    %1910 = vmatprep.subr.mxu0 0.0
    %1911 = vmatpush1.msra.mxu0 0.0
    %1912 = vmatprep.subr.mxu0 0.0
    %1913 = vmatpush1.msra.mxu0 0.0
    %1914 = vmatprep.subr.mxu0 0.0
    %1915 = vmatpush1.msra.mxu0 0.0
    %1916 = vmatprep.subr.mxu0 0.0
    %1917 = vmatpush1.msra.mxu0 0.0
    %1918 = vmatprep.subr.mxu0 0.0
    %1919 = vmatpush1.msra.mxu0 0.0
    %1920 = vmatprep.subr.mxu0 0.0
    %1921 = vmatpush1.msra.mxu0 0.0
    %1922 = vmatprep.subr.mxu0 0.0
    %1923 = vmatpush1.msra.mxu0 0.0
    %1924 = vmatprep.subr.mxu0 0.0
    %1925 = vmatpush1.msra.mxu0 0.0
    %1926 = vmatprep.subr.mxu0 0.0
    %1927 = vmatpush1.msra.mxu0 0.0
    %1928 = vmatprep.mubr.f32.mxu0 0.0
    %1929 = vmatmul.mubr.f32.gmra.mrb[0].mxu0 %v1553
    %v1930 = vpop.f32.mrb[0].mxu0
    %v1931 = vadd.f32 %v1826, %v1930
    %v1932 = vpop.f32.mrb[0].mxu0
    %1933 = vmatprep.mubr.f32.mxu0 0.0
    %1934 = vmatmul.mubr.f32.gmra.mrb[0].mxu0 %v1554
    %v1935 = vpop.f32.mrb[0].mxu0
    %v1936 = vadd.f32 %v1831, %v1935
    %v1937 = vpop.f32.mrb[0].mxu0
    %1938 = vmatprep.mubr.f32.mxu0 0.0
    %1939 = vmatmul.mubr.f32.gmra.mrb[0].mxu0 %v1555
    %v1940 = vpop.f32.mrb[0].mxu0
    %v1941 = vadd.f32 %v1836, %v1940
    %v1942 = vpop.f32.mrb[0].mxu0
    %1943 = vmatprep.mubr.f32.mxu0 0.0
    %1944 = vmatmul.mubr.f32.gmra.mrb[0].mxu0 %v1556
    %v1945 = vpop.f32.mrb[0].mxu0
    %v1946 = vadd.f32 %v1841, %v1945
    %v1947 = vpop.f32.mrb[0].mxu0
    %1948 = vmatprep.mubr.f32.mxu0 0.0
    %1949 = vmatmul.mubr.f32.gmra.mrb[0].mxu0 %v1557
    %v1950 = vpop.f32.mrb[0].mxu0
    %v1951 = vadd.f32 %v1846, %v1950
    %v1952 = vpop.f32.mrb[0].mxu0
    %1953 = vmatprep.mubr.f32.mxu0 0.0
    %1954 = vmatmul.mubr.f32.gmra.mrb[0].mxu0 %v1558
    %v1955 = vpop.f32.mrb[0].mxu0
    %v1956 = vadd.f32 %v1851, %v1955
    %v1957 = vpop.f32.mrb[0].mxu0
    %1958 = vmatprep.mubr.f32.mxu0 0.0
    %1959 = vmatmul.mubr.f32.gmra.mrb[0].mxu0 %v1559
    %v1960 = vpop.f32.mrb[0].mxu0
    %v1961 = vadd.f32 %v1856, %v1960
    %v1962 = vpop.f32.mrb[0].mxu0
    %1963 = vmatprep.mubr.f32.mxu0 0.0
    %1964 = vmatmul.mubr.f32.gmra.mrb[0].mxu0 %v1560
    %v1965 = vpop.f32.mrb[0].mxu0
    %v1966 = vadd.f32 %v1861, %v1965
    %v1967 = vpop.f32.mrb[0].mxu0
    %1968 = vdwg.mxu0
    %s1969 = scalar_lea.vmem %s4, 3
    %v1970 = vld [vmem:[%s1969] sm:$0x1]
    %v1972 = vlaneseq
    %v1973 = vshrl.u32 %v1972, 7
    %v1974 = vsub.s32 0, %v1973
    %v1975 = vrot.slane %v1970, %v1974
    %v1977 = vadd.f32 %v1931, %v1975
    %v1978 = vadd.f32 %v1936, %v1975
    %v1979 = vadd.f32 %v1941, %v1975
    %v1980 = vadd.f32 %v1946, %v1975
    %v1981 = vadd.f32 %v1951, %v1975
    %v1982 = vadd.f32 %v1956, %v1975
    %v1983 = vadd.f32 %v1961, %v1975
    %v1984 = vadd.f32 %v1966, %v1975
    %1985 = vst [vmem:[#allocation8] sm:$0xff] %v1977
    %1986 = vst [vmem:[#allocation8 + $0x8] sm:$0xff] %v1978
    %1987 = vst [vmem:[#allocation8 + $0x10] sm:$0xff] %v1979
    %1988 = vst [vmem:[#allocation8 + $0x18] sm:$0xff] %v1980
    %1989 = vst [vmem:[#allocation8 + $0x20] sm:$0xff] %v1981
    %1990 = vst [vmem:[#allocation8 + $0x28] sm:$0xff] %v1982
    %1991 = vst [vmem:[#allocation8 + $0x30] sm:$0xff] %v1983
    %1992 = vst [vmem:[#allocation8 + $0x38] sm:$0xff] %v1984
    // Predicated region
    $region30: #{tpu_custom_call.1} parent=1 // pred_check
      _
    $region31: #{tpu_custom_call.1} parent=1 // pred_check_branch
      %1994 = sbr.rel (0) target = $region33
    $region32: #{tpu_custom_call.1} parent=1 // pred_region
      %s1996 = ssub.s32 1024, 1024
      %1997 = vsyncadd [#allocation5], %s1996
      %s1998 = sshll.u32 [#allocation8], 4
      %s1999 = int_to_ptr.vmem [resolvable:$true] %s1998
      %2004 = dma.vmem_to_hbm [thread:$0]  %s1999, 1024, %s5, [#allocation5], 128, 128, 8
    $region33: #{tpu_custom_call.1} parent=1 // pred_fallthru
      _
    // Predicated region
    $region34: #{tpu_custom_call.1} parent=1 // pred_check
      _
    $region35: #{tpu_custom_call.1} parent=1 // pred_check_branch
      %2006 = sbr.rel (0) target = $region37
    $region36: #{tpu_custom_call.1} parent=1 // pred_region
      %2007 = dma.done [#allocation5], 1024
    $region37: #{tpu_custom_call.1} parent=1 // pred_fallthru
      _
    %2008 = vsyncpa [#allocation4], 1
    %2009 = vsyncpa [#allocation7], 1
    %2010 = vsyncpa [#allocation5], 1

// kernel: tpu_custom_call.1
$region0: #{tpu_custom_call.1}
  #allocation0 [shape = 'u32[]', space=smem, size = 0x4, offset = 0x4, fixed_abs, tag = 'smem constant byte address 0x4 - core index']
  #allocation1 [shape = 'u32[144,128]{1,0:T(1,128)}', space=vmem, size = 0x12000, scoped, tag = 'internal scratch']
  #allocation2 [shape = 'f32[64,128]{1,0:T(8,128)}', space=vmem, size = 0x8000, scoped, tag = 'scratch operand']
  %s0 = inlined_call_operand.hbm [shape: bf16[64,64], index: 0, kind: input, shape index: {}]
  %s1 = inlined_call_operand.vmem [shape: f32[64,128], index: 1, kind: input, shape index: {}]
  %s2 = inlined_call_operand.vmem [shape: f32[64,1], index: 2, kind: input, shape index: {}]
  %s3 = inlined_call_operand.hbm [shape: f32[4,256,128], index: 3, kind: input, shape index: {}]
  %s4 = inlined_call_operand.vmem [shape: f32[4,1,128], index: 4, kind: input, shape index: {}]
  %s5 = inlined_call_operand.hbm [shape: f32[64,128], index: 5, kind: output, shape index: {}]
  %s6 = sld [smem:[#allocation0]]
  $region38: #{tpu_custom_call.1} parent=0
    _
  %s8 = ssub.s32 1, %s6
  %s9 = scalar_select 0, %s8, %s6
  $region1: #{tpu_custom_call.1} parent=0
    #allocation3 [shape = 'u8[16384]{0}', space=vmem, size = 0x4000, scoped, tag = 'input window, operand 0, single buffered']
    #allocation4 [shape = 's32[1]{0}', space=sflag, size = 0x4, scoped, tag = 'scoped memory for tpu_custom_call.1']
    #allocation5 [shape = 's32[1]{0}', space=sflag, size = 0x4, scoped, tag = 'scoped memory for tpu_custom_call.1']
    #allocation6 [shape = 'u8[524288]{0}', space=vmem, size = 0x80000, scoped, tag = 'input window, operand 3, single buffered']
    #allocation7 [shape = 's32[1]{0}', space=sflag, size = 0x4, scoped, tag = 'scoped memory for tpu_custom_call.1']
    #allocation8 [shape = 'u8[32768]{0}', space=vmem, size = 0x8000, scoped, tag = 'output window, operand 0, single buffered']
    %10 = vsyncpa [#allocation4], 0
    %11 = vsyncpa [#allocation7], 0
    %12 = vsyncpa [#allocation5], 0
    // Predicated region
    $region2: #{tpu_custom_call.1} parent=1 // pred_check
      _
    $region3: #{tpu_custom_call.1} parent=1 // pred_check_branch
      %14 = sbr.rel (0) target = $region5
    $region4: #{tpu_custom_call.1} parent=1 // pred_region
      %s16 = ssub.s32 512, 512
      %17 = vsyncadd [#allocation4], %s16
      %s18 = sshll.u32 [#allocation3], 4
      %s19 = int_to_ptr.vmem [resolvable:$true] %s18
      %24 = dma.hbm_to_vmem [thread:$0]  %s0, 512, %s19, [#allocation4], 64, 64, 4
    $region5: #{tpu_custom_call.1} parent=1 // pred_fallthru
      _
    // Predicated region
    $region6: #{tpu_custom_call.1} parent=1 // pred_check
      _
    $region7: #{tpu_custom_call.1} parent=1 // pred_check_branch
      %26 = sbr.rel (0) target = $region9
    $region8: #{tpu_custom_call.1} parent=1 // pred_region
      _
    $region9: #{tpu_custom_call.1} parent=1 // pred_fallthru
      _
    // Predicated region
    $region10: #{tpu_custom_call.1} parent=1 // pred_check
      _
    $region11: #{tpu_custom_call.1} parent=1 // pred_check_branch
      %28 = sbr.rel (0) target = $region13
    $region12: #{tpu_custom_call.1} parent=1 // pred_region
      _
    $region13: #{tpu_custom_call.1} parent=1 // pred_fallthru
      _
    // Predicated region
    $region14: #{tpu_custom_call.1} parent=1 // pred_check
      _
    $region15: #{tpu_custom_call.1} parent=1 // pred_check_branch
      %30 = sbr.rel (0) target = $region17
    $region16: #{tpu_custom_call.1} parent=1 // pred_region
      %s32 = ssub.s32 16384, 16384
      %33 = vsyncadd [#allocation7], %s32
      %s34 = sshll.u32 [#allocation6], 4
      %s35 = int_to_ptr.vmem [resolvable:$true] %s34
      %40 = dma.hbm_to_vmem [thread:$0]  %s3, 16384, %s35, [#allocation7], 128, 128, 8
    $region17: #{tpu_custom_call.1} parent=1 // pred_fallthru
      _
    // Predicated region
    $region18: #{tpu_custom_call.1} parent=1 // pred_check
      _
    $region19: #{tpu_custom_call.1} parent=1 // pred_check_branch
      %42 = sbr.rel (0) target = $region21
    $region20: #{tpu_custom_call.1} parent=1 // pred_region
      _
    $region21: #{tpu_custom_call.1} parent=1 // pred_fallthru
      _
    // Predicated region
    $region22: #{tpu_custom_call.1} parent=1 // pred_check
      _
    $region23: #{tpu_custom_call.1} parent=1 // pred_check_branch
      %44 = sbr.rel (0) target = $region25
    $region24: #{tpu_custom_call.1} parent=1 // pred_region
      %45 = dma.done [#allocation4], 512
    $region25: #{tpu_custom_call.1} parent=1 // pred_fallthru
      _
    // Predicated region
    $region26: #{tpu_custom_call.1} parent=1 // pred_check
      _
    $region27: #{tpu_custom_call.1} parent=1 // pred_check_branch
      %47 = sbr.rel (0) target = $region29
    $region28: #{tpu_custom_call.1} parent=1 // pred_region
      %48 = dma.done [#allocation7], 16384
    $region29: #{tpu_custom_call.1} parent=1 // pred_fallthru
      _
    %v50 = vld [vmem:[%s1] sm:$0xff]
    %v51 = vld [vmem:[%s1 + $0x8] sm:$0xff]
    %v52 = vld [vmem:[%s1 + $0x10] sm:$0xff]
    %v53 = vld [vmem:[%s1 + $0x18] sm:$0xff]
    %v54 = vld [vmem:[%s1 + $0x20] sm:$0xff]
    %v55 = vld [vmem:[%s1 + $0x28] sm:$0xff]
    %v56 = vld [vmem:[%s1 + $0x30] sm:$0xff]
    %v57 = vld [vmem:[%s1 + $0x38] sm:$0xff]
    %58 = vst [vmem:[#allocation2] sm:$0xff] %v50
    %59 = vst [vmem:[#allocation2 + $0x8] sm:$0xff] %v51
    %60 = vst [vmem:[#allocation2 + $0x10] sm:$0xff] %v52
    %61 = vst [vmem:[#allocation2 + $0x18] sm:$0xff] %v53
    %62 = vst [vmem:[#allocation2 + $0x20] sm:$0xff] %v54
    %63 = vst [vmem:[#allocation2 + $0x28] sm:$0xff] %v55
    %64 = vst [vmem:[#allocation2 + $0x30] sm:$0xff] %v56
    %65 = vst [vmem:[#allocation2 + $0x38] sm:$0xff] %v57
    %v66 = vld [vmem:[#allocation2] sm:$0xff]
    %v67 = vld [vmem:[#allocation2 + $0x8] sm:$0xff]
    %v68 = vld [vmem:[#allocation2 + $0x10] sm:$0xff]
    %v69 = vld [vmem:[#allocation2 + $0x18] sm:$0xff]
    %v70 = vld [vmem:[#allocation2 + $0x20] sm:$0xff]
    %v71 = vld [vmem:[#allocation2 + $0x28] sm:$0xff]
    %v72 = vld [vmem:[#allocation2 + $0x30] sm:$0xff]
    %v73 = vld [vmem:[#allocation2 + $0x38] sm:$0xff]
    %v74 = vld [vmem:[#allocation3] sm:$0xf]
    %v75 = vld [vmem:[#allocation3 + $0x4] sm:$0xf]
    %v76 = vld [vmem:[#allocation3 + $0x8] sm:$0xf]
    %v77 = vld [vmem:[#allocation3 + $0xc] sm:$0xf]
    %v78 = vld [vmem:[#allocation3 + $0x10] sm:$0xf]
    %v79 = vld [vmem:[#allocation3 + $0x14] sm:$0xf]
    %v80 = vld [vmem:[#allocation3 + $0x18] sm:$0xf]
    %v81 = vld [vmem:[#allocation3 + $0x1c] sm:$0xf]
    %v82 = vpack.c.bf16 %v67, %v66
    %v83 = vpack.c.bf16 %v69, %v68
    %v84 = vpack.c.bf16 %v71, %v70
    %v85 = vpack.c.bf16 %v73, %v72
    %v94 = vunpack.c.l.b16 %v74
    %v95 = vunpack.c.l.b16 %v75
    %v96 = vunpack.c.l.b16 %v76
    %v97 = vunpack.c.l.b16 %v77
    %v98 = vunpack.c.l.b16 %v78
    %v99 = vunpack.c.l.b16 %v79
    %v100 = vunpack.c.l.b16 %v80
    %v101 = vunpack.c.l.b16 %v81
    %v102 = vpack.c.b16 %v95, %v94
    %v103 = vpack.c.b16 %v97, %v96
    %v104 = vpack.c.b16 %v99, %v98
    %v105 = vpack.c.b16 %v101, %v100
    %vm106 = vcmask 523264
    %v108 = vsel %vm106, %v102, 0
    %v111 = vsel %vm106, %v103, 0
    %v114 = vsel %vm106, %v104, 0
    %v117 = vsel %vm106, %v105, 0
    %119 = vmatprep.subr.bf16.mxu0 0
    %120 = vmatpush1.bf16.msra.mxu0 %v82
    %121 = vmatprep.subr.bf16.mxu0 0
    %122 = vmatpush1.bf16.msra.mxu0 %v83
    %123 = vmatprep.subr.bf16.mxu0 0
    %124 = vmatpush1.bf16.msra.mxu0 %v84
    %125 = vmatprep.subr.bf16.mxu0 0
    %126 = vmatpush1.bf16.msra.mxu0 %v85
    %127 = vmatprep.subr.bf16.mxu0 0
    %128 = vmatpush1.bf16.msra.mxu0 0
    %129 = vmatprep.subr.bf16.mxu0 0
    %130 = vmatpush1.bf16.msra.mxu0 0
    %131 = vmatprep.subr.bf16.mxu0 0
    %132 = vmatpush1.bf16.msra.mxu0 0
    %133 = vmatprep.subr.bf16.mxu0 0
    %134 = vmatpush1.bf16.msra.mxu0 0
    %135 = vmatprep.subr.bf16.mxu0 0
    %136 = vmatpush1.bf16.msra.mxu0 0
    %137 = vmatprep.subr.bf16.mxu0 0
    %138 = vmatpush1.bf16.msra.mxu0 0
    %139 = vmatprep.subr.bf16.mxu0 0
    %140 = vmatpush1.bf16.msra.mxu0 0
    %141 = vmatprep.subr.bf16.mxu0 0
    %142 = vmatpush1.bf16.msra.mxu0 0
    %143 = vmatprep.subr.bf16.mxu0 0
    %144 = vmatpush1.bf16.msra.mxu0 0
    %145 = vmatprep.subr.bf16.mxu0 0
    %146 = vmatpush1.bf16.msra.mxu0 0
    %147 = vmatprep.subr.bf16.mxu0 0
    %148 = vmatpush1.bf16.msra.mxu0 0
    %149 = vmatprep.subr.bf16.mxu0 0
    %150 = vmatpush1.bf16.msra.mxu0 0
    %151 = vmatprep.mubr.bf16.mxu0 0
    %152 = vmatmul.mubr.bf16.gmra.mrb[0].mxu0 %v108
    %v153 = vpop.f32.mrb[0].mxu0
    %v154 = vadd.f32 0.0, %v153
    %v155 = vpop.f32.mrb[0].mxu0
    %v156 = vpop.f32.mrb[0].mxu0
    %v157 = vadd.f32 0.0, %v156
    %v158 = vpop.f32.mrb[0].mxu0
    %159 = vmatprep.mubr.bf16.mxu0 0
    %160 = vmatmul.mubr.bf16.gmra.mrb[0].mxu0 %v111
    %v161 = vpop.f32.mrb[0].mxu0
    %v162 = vadd.f32 0.0, %v161
    %v163 = vpop.f32.mrb[0].mxu0
    %v164 = vpop.f32.mrb[0].mxu0
    %v165 = vadd.f32 0.0, %v164
    %v166 = vpop.f32.mrb[0].mxu0
    %167 = vmatprep.mubr.bf16.mxu0 0
    %168 = vmatmul.mubr.bf16.gmra.mrb[0].mxu0 %v114
    %v169 = vpop.f32.mrb[0].mxu0
    %v170 = vadd.f32 0.0, %v169
    %v171 = vpop.f32.mrb[0].mxu0
    %v172 = vpop.f32.mrb[0].mxu0
    %v173 = vadd.f32 0.0, %v172
    %v174 = vpop.f32.mrb[0].mxu0
    %175 = vmatprep.mubr.bf16.mxu0 0
    %176 = vmatmul.mubr.bf16.gmra.mrb[0].mxu0 %v117
    %v177 = vpop.f32.mrb[0].mxu0
    %v178 = vadd.f32 0.0, %v177
    %v179 = vpop.f32.mrb[0].mxu0
    %v180 = vpop.f32.mrb[0].mxu0
    %v181 = vadd.f32 0.0, %v180
    %v182 = vpop.f32.mrb[0].mxu0
    %183 = vdwg.mxu0
    %v184 = vld [vmem:[%s2] sm:$0xff]
    %v185 = vld [vmem:[%s2 + $0x8] sm:$0xff]
    %v186 = vld [vmem:[%s2 + $0x10] sm:$0xff]
    %v187 = vld [vmem:[%s2 + $0x18] sm:$0xff]
    %v188 = vld [vmem:[%s2 + $0x20] sm:$0xff]
    %v189 = vld [vmem:[%s2 + $0x28] sm:$0xff]
    %v190 = vld [vmem:[%s2 + $0x30] sm:$0xff]
    %v191 = vld [vmem:[%s2 + $0x38] sm:$0xff]
    %193 = vset.pattern.permute.xlu0 0
    %194 = vperm.xlu0 %193, %v184
    %v195 = vpop.permute.xlu0 %194
    %198 = vset.pattern.permute.xlu0 0
    %199 = vperm.xlu0 %198, %v185
    %v200 = vpop.permute.xlu0 %199
    %203 = vset.pattern.permute.xlu0 0
    %204 = vperm.xlu0 %203, %v186
    %v205 = vpop.permute.xlu0 %204
    %208 = vset.pattern.permute.xlu0 0
    %209 = vperm.xlu0 %208, %v187
    %v210 = vpop.permute.xlu0 %209
    %213 = vset.pattern.permute.xlu0 0
    %214 = vperm.xlu0 %213, %v188
    %v215 = vpop.permute.xlu0 %214
    %218 = vset.pattern.permute.xlu0 0
    %219 = vperm.xlu0 %218, %v189
    %v220 = vpop.permute.xlu0 %219
    %223 = vset.pattern.permute.xlu0 0
    %224 = vperm.xlu0 %223, %v190
    %v225 = vpop.permute.xlu0 %224
    %228 = vset.pattern.permute.xlu0 0
    %229 = vperm.xlu0 %228, %v191
    %v230 = vpop.permute.xlu0 %229
    %v232 = vmul.f32 %v154, %v195
    %v233 = vmul.f32 %v157, %v200
    %v234 = vmul.f32 %v162, %v205
    %v235 = vmul.f32 %v165, %v210
    %v236 = vmul.f32 %v170, %v215
    %v237 = vmul.f32 %v173, %v220
    %v238 = vmul.f32 %v178, %v225
    %v239 = vmul.f32 %v181, %v230
    %v240 = vld [vmem:[#allocation6] sm:$0xff]
    %v241 = vld [vmem:[#allocation6 + $0x8] sm:$0xff]
    %v242 = vld [vmem:[#allocation6 + $0x10] sm:$0xff]
    %v243 = vld [vmem:[#allocation6 + $0x18] sm:$0xff]
    %v244 = vld [vmem:[#allocation6 + $0x20] sm:$0xff]
    %v245 = vld [vmem:[#allocation6 + $0x28] sm:$0xff]
    %v246 = vld [vmem:[#allocation6 + $0x30] sm:$0xff]
    %v247 = vld [vmem:[#allocation6 + $0x38] sm:$0xff]
    %v248 = vld [vmem:[#allocation6 + $0x40] sm:$0xff]
    %v249 = vld [vmem:[#allocation6 + $0x48] sm:$0xff]
    %v250 = vld [vmem:[#allocation6 + $0x50] sm:$0xff]
    %v251 = vld [vmem:[#allocation6 + $0x58] sm:$0xff]
    %v252 = vld [vmem:[#allocation6 + $0x60] sm:$0xff]
    %v253 = vld [vmem:[#allocation6 + $0x68] sm:$0xff]
    %v254 = vld [vmem:[#allocation6 + $0x70] sm:$0xff]
    %v255 = vld [vmem:[#allocation6 + $0x78] sm:$0xff]
    %v256 = vld [vmem:[#allocation6 + $0x80] sm:$0xff]
    %v257 = vld [vmem:[#allocation6 + $0x88] sm:$0xff]
    %v258 = vld [vmem:[#allocation6 + $0x90] sm:$0xff]
    %v259 = vld [vmem:[#allocation6 + $0x98] sm:$0xff]
    %v260 = vld [vmem:[#allocation6 + $0xa0] sm:$0xff]
    %v261 = vld [vmem:[#allocation6 + $0xa8] sm:$0xff]
    %v262 = vld [vmem:[#allocation6 + $0xb0] sm:$0xff]
    %v263 = vld [vmem:[#allocation6 + $0xb8] sm:$0xff]
    %v264 = vld [vmem:[#allocation6 + $0xc0] sm:$0xff]
    %v265 = vld [vmem:[#allocation6 + $0xc8] sm:$0xff]
    %v266 = vld [vmem:[#allocation6 + $0xd0] sm:$0xff]
    %v267 = vld [vmem:[#allocation6 + $0xd8] sm:$0xff]
    %v268 = vld [vmem:[#allocation6 + $0xe0] sm:$0xff]
    %v269 = vld [vmem:[#allocation6 + $0xe8] sm:$0xff]
    %v270 = vld [vmem:[#allocation6 + $0xf0] sm:$0xff]
    %v271 = vld [vmem:[#allocation6 + $0xf8] sm:$0xff]
    %272 = vmatprep.subr.mxu0 0.0
    %273 = vmatpush1.msra.mxu0 %v256
    %274 = vmatprep.subr.mxu0 0.0
    %275 = vmatpush1.msra.mxu0 %v257
    %276 = vmatprep.subr.mxu0 0.0
    %277 = vmatpush1.msra.mxu0 %v258
    %278 = vmatprep.subr.mxu0 0.0
    %279 = vmatpush1.msra.mxu0 %v259
    %280 = vmatprep.subr.mxu0 0.0
    %281 = vmatpush1.msra.mxu0 %v260
    %282 = vmatprep.subr.mxu0 0.0
    %283 = vmatpush1.msra.mxu0 %v261
    %284 = vmatprep.subr.mxu0 0.0
    %285 = vmatpush1.msra.mxu0 %v262
    %286 = vmatprep.subr.mxu0 0.0
    %287 = vmatpush1.msra.mxu0 %v263
    %288 = vmatprep.subr.mxu0 0.0
    %289 = vmatpush1.msra.mxu0 %v264
    %290 = vmatprep.subr.mxu0 0.0
    %291 = vmatpush1.msra.mxu0 %v265
    %292 = vmatprep.subr.mxu0 0.0
    %293 = vmatpush1.msra.mxu0 %v266
    %294 = vmatprep.subr.mxu0 0.0
    %295 = vmatpush1.msra.mxu0 %v267
    %296 = vmatprep.subr.mxu0 0.0
    %297 = vmatpush1.msra.mxu0 %v268
    %298 = vmatprep.subr.mxu0 0.0
    %299 = vmatpush1.msra.mxu0 %v269
    %300 = vmatprep.subr.mxu0 0.0
    %301 = vmatpush1.msra.mxu0 %v270
    %302 = vmatprep.subr.mxu0 0.0
    %303 = vmatpush1.msra.mxu0 %v271
    %304 = vmatprep.subr.mxu0 0.0
    %305 = vmatpush1.msra.mxu0 0.0
    %306 = vmatprep.subr.mxu0 0.0
    %307 = vmatpush1.msra.mxu0 0.0
    %308 = vmatprep.subr.mxu0 0.0
    %309 = vmatpush1.msra.mxu0 0.0
    %310 = vmatprep.subr.mxu0 0.0
    %311 = vmatpush1.msra.mxu0 0.0
    %312 = vmatprep.subr.mxu0 0.0
    %313 = vmatpush1.msra.mxu0 0.0
    %314 = vmatprep.subr.mxu0 0.0
    %315 = vmatpush1.msra.mxu0 0.0
    %316 = vmatprep.subr.mxu0 0.0
    %317 = vmatpush1.msra.mxu0 0.0
    %318 = vmatprep.subr.mxu0 0.0
    %319 = vmatpush1.msra.mxu0 0.0
    %320 = vmatprep.subr.mxu0 0.0
    %321 = vmatpush1.msra.mxu0 0.0
    %322 = vmatprep.subr.mxu0 0.0
    %323 = vmatpush1.msra.mxu0 0.0
    %324 = vmatprep.subr.mxu0 0.0
    %325 = vmatpush1.msra.mxu0 0.0
    %326 = vmatprep.subr.mxu0 0.0
    %327 = vmatpush1.msra.mxu0 0.0
    %328 = vmatprep.subr.mxu0 0.0
    %329 = vmatpush1.msra.mxu0 0.0
    %330 = vmatprep.subr.mxu0 0.0
    %331 = vmatpush1.msra.mxu0 0.0
    %332 = vmatprep.subr.mxu0 0.0
    %333 = vmatpush1.msra.mxu0 0.0
    %334 = vmatprep.subr.mxu0 0.0
    %335 = vmatpush1.msra.mxu0 0.0
    %336 = vmatprep.mubr.f32.mxu0 0.0
    %337 = vmatmul.mubr.f32.gmra.mrb[0].mxu0 %v232
    %v338 = vpop.f32.mrb[0].mxu0
    %v339 = vadd.f32 0.0, %v338
    %v340 = vpop.f32.mrb[0].mxu0
    %341 = vmatprep.mubr.f32.mxu0 0.0
    %342 = vmatmul.mubr.f32.gmra.mrb[0].mxu0 %v233
    %v343 = vpop.f32.mrb[0].mxu0
    %v344 = vadd.f32 0.0, %v343
    %v345 = vpop.f32.mrb[0].mxu0
    %346 = vmatprep.mubr.f32.mxu0 0.0
    %347 = vmatmul.mubr.f32.gmra.mrb[0].mxu0 %v234
    %v348 = vpop.f32.mrb[0].mxu0
    %v349 = vadd.f32 0.0, %v348
    %v350 = vpop.f32.mrb[0].mxu0
    %351 = vmatprep.mubr.f32.mxu0 0.0
    %352 = vmatmul.mubr.f32.gmra.mrb[0].mxu0 %v235
    %v353 = vpop.f32.mrb[0].mxu0
    %v354 = vadd.f32 0.0, %v353
    %v355 = vpop.f32.mrb[0].mxu0
    %356 = vmatprep.mubr.f32.mxu0 0.0
    %357 = vmatmul.mubr.f32.gmra.mrb[0].mxu0 %v236
    %v358 = vpop.f32.mrb[0].mxu0
    %v359 = vadd.f32 0.0, %v358
    %v360 = vpop.f32.mrb[0].mxu0
    %361 = vmatprep.mubr.f32.mxu0 0.0
    %362 = vmatmul.mubr.f32.gmra.mrb[0].mxu0 %v237
    %v363 = vpop.f32.mrb[0].mxu0
    %v364 = vadd.f32 0.0, %v363
    %v365 = vpop.f32.mrb[0].mxu0
    %366 = vmatprep.mubr.f32.mxu0 0.0
    %367 = vmatmul.mubr.f32.gmra.mrb[0].mxu0 %v238
    %v368 = vpop.f32.mrb[0].mxu0
    %v369 = vadd.f32 0.0, %v368
    %v370 = vpop.f32.mrb[0].mxu0
    %371 = vmatprep.mubr.f32.mxu0 0.0
    %372 = vmatmul.mubr.f32.gmra.mrb[0].mxu0 %v239
    %v373 = vpop.f32.mrb[0].mxu0
    %v374 = vadd.f32 0.0, %v373
    %v375 = vpop.f32.mrb[0].mxu0
    %376 = vdwg.mxu0
    %377 = vmatprep.subr.mxu0 0.0
    %378 = vmatpush1.msra.mxu0 %v240
    %379 = vmatprep.subr.mxu0 0.0
    %380 = vmatpush1.msra.mxu0 %v241
    %381 = vmatprep.subr.mxu0 0.0
    %382 = vmatpush1.msra.mxu0 %v242
    %383 = vmatprep.subr.mxu0 0.0
    %384 = vmatpush1.msra.mxu0 %v243
    %385 = vmatprep.subr.mxu0 0.0
    %386 = vmatpush1.msra.mxu0 %v244
    %387 = vmatprep.subr.mxu0 0.0
    %388 = vmatpush1.msra.mxu0 %v245
    %389 = vmatprep.subr.mxu0 0.0
    %390 = vmatpush1.msra.mxu0 %v246
    %391 = vmatprep.subr.mxu0 0.0
    %392 = vmatpush1.msra.mxu0 %v247
    %393 = vmatprep.subr.mxu0 0.0
    %394 = vmatpush1.msra.mxu0 %v248
    %395 = vmatprep.subr.mxu0 0.0
    %396 = vmatpush1.msra.mxu0 %v249
    %397 = vmatprep.subr.mxu0 0.0
    %398 = vmatpush1.msra.mxu0 %v250
    %399 = vmatprep.subr.mxu0 0.0
    %400 = vmatpush1.msra.mxu0 %v251
    %401 = vmatprep.subr.mxu0 0.0
    %402 = vmatpush1.msra.mxu0 %v252
    %403 = vmatprep.subr.mxu0 0.0
    %404 = vmatpush1.msra.mxu0 %v253
    %405 = vmatprep.subr.mxu0 0.0
    %406 = vmatpush1.msra.mxu0 %v254
    %407 = vmatprep.subr.mxu0 0.0
    %408 = vmatpush1.msra.mxu0 %v255
    %409 = vmatprep.subr.mxu0 0.0
    %410 = vmatpush1.msra.mxu0 0.0
    %411 = vmatprep.subr.mxu0 0.0
    %412 = vmatpush1.msra.mxu0 0.0
    %413 = vmatprep.subr.mxu0 0.0
    %414 = vmatpush1.msra.mxu0 0.0
    %415 = vmatprep.subr.mxu0 0.0
    %416 = vmatpush1.msra.mxu0 0.0
    %417 = vmatprep.subr.mxu0 0.0
    %418 = vmatpush1.msra.mxu0 0.0
    %419 = vmatprep.subr.mxu0 0.0
    %420 = vmatpush1.msra.mxu0 0.0
    %421 = vmatprep.subr.mxu0 0.0
    %422 = vmatpush1.msra.mxu0 0.0
    %423 = vmatprep.subr.mxu0 0.0
    %424 = vmatpush1.msra.mxu0 0.0
    %425 = vmatprep.subr.mxu0 0.0
    %426 = vmatpush1.msra.mxu0 0.0
    %427 = vmatprep.subr.mxu0 0.0
    %428 = vmatpush1.msra.mxu0 0.0
    %429 = vmatprep.subr.mxu0 0.0
    %430 = vmatpush1.msra.mxu0 0.0
    %431 = vmatprep.subr.mxu0 0.0
    %432 = vmatpush1.msra.mxu0 0.0
    %433 = vmatprep.subr.mxu0 0.0
    %434 = vmatpush1.msra.mxu0 0.0
    %435 = vmatprep.subr.mxu0 0.0
    %436 = vmatpush1.msra.mxu0 0.0
    %437 = vmatprep.subr.mxu0 0.0
    %438 = vmatpush1.msra.mxu0 0.0
    %439 = vmatprep.subr.mxu0 0.0
    %440 = vmatpush1.msra.mxu0 0.0
    %441 = vmatprep.mubr.f32.mxu0 0.0
    %442 = vmatmul.mubr.f32.gmra.mrb[0].mxu0 %v66
    %v443 = vpop.f32.mrb[0].mxu0
    %v444 = vadd.f32 %v339, %v443
    %v445 = vpop.f32.mrb[0].mxu0
    %446 = vmatprep.mubr.f32.mxu0 0.0
    %447 = vmatmul.mubr.f32.gmra.mrb[0].mxu0 %v67
    %v448 = vpop.f32.mrb[0].mxu0
    %v449 = vadd.f32 %v344, %v448
    %v450 = vpop.f32.mrb[0].mxu0
    %451 = vmatprep.mubr.f32.mxu0 0.0
    %452 = vmatmul.mubr.f32.gmra.mrb[0].mxu0 %v68
    %v453 = vpop.f32.mrb[0].mxu0
    %v454 = vadd.f32 %v349, %v453
    %v455 = vpop.f32.mrb[0].mxu0
    %456 = vmatprep.mubr.f32.mxu0 0.0
    %457 = vmatmul.mubr.f32.gmra.mrb[0].mxu0 %v69
    %v458 = vpop.f32.mrb[0].mxu0
    %v459 = vadd.f32 %v354, %v458
    %v460 = vpop.f32.mrb[0].mxu0
    %461 = vmatprep.mubr.f32.mxu0 0.0
    %462 = vmatmul.mubr.f32.gmra.mrb[0].mxu0 %v70
    %v463 = vpop.f32.mrb[0].mxu0
    %v464 = vadd.f32 %v359, %v463
    %v465 = vpop.f32.mrb[0].mxu0
    %466 = vmatprep.mubr.f32.mxu0 0.0
    %467 = vmatmul.mubr.f32.gmra.mrb[0].mxu0 %v71
    %v468 = vpop.f32.mrb[0].mxu0
    %v469 = vadd.f32 %v364, %v468
    %v470 = vpop.f32.mrb[0].mxu0
    %471 = vmatprep.mubr.f32.mxu0 0.0
    %472 = vmatmul.mubr.f32.gmra.mrb[0].mxu0 %v72
    %v473 = vpop.f32.mrb[0].mxu0
    %v474 = vadd.f32 %v369, %v473
    %v475 = vpop.f32.mrb[0].mxu0
    %476 = vmatprep.mubr.f32.mxu0 0.0
    %477 = vmatmul.mubr.f32.gmra.mrb[0].mxu0 %v73
    %v478 = vpop.f32.mrb[0].mxu0
    %v479 = vadd.f32 %v374, %v478
    %v480 = vpop.f32.mrb[0].mxu0
    %481 = vdwg.mxu0
    %v482 = vld [vmem:[%s4] sm:$0x1]
    %v484 = vlaneseq
    %v485 = vshrl.u32 %v484, 7
    %v486 = vsub.s32 0, %v485
    %v487 = vrot.slane %v482, %v486
    %v489 = vadd.f32 %v444, %v487
    %v490 = vadd.f32 %v449, %v487
    %v491 = vadd.f32 %v454, %v487
    %v492 = vadd.f32 %v459, %v487
    %v493 = vadd.f32 %v464, %v487
    %v494 = vadd.f32 %v469, %v487
    %v495 = vadd.f32 %v474, %v487
    %v496 = vadd.f32 %v479, %v487
    %v497 = vmax.f32 %v489, 0.0
    %v498 = vmax.f32 %v490, 0.0
    %v499 = vmax.f32 %v491, 0.0
    %v500 = vmax.f32 %v492, 0.0
    %v501 = vmax.f32 %v493, 0.0
    %v502 = vmax.f32 %v494, 0.0
    %v503 = vmax.f32 %v495, 0.0
    %v504 = vmax.f32 %v496, 0.0
    %v505 = vmul.f32 %v497, %v497
    %v506 = vmul.f32 %v498, %v498
    %v507 = vmul.f32 %v499, %v499
    %v508 = vmul.f32 %v500, %v500
    %v509 = vmul.f32 %v501, %v501
    %v510 = vmul.f32 %v502, %v502
    %v511 = vmul.f32 %v503, %v503
    %v512 = vmul.f32 %v504, %v504
    %513 = vadd.xlane.f32.xlu0 %v505
    %v514 = vpop.xlane.xlu0 %513
    %515 = vadd.xlane.f32.xlu0 %v506
    %v516 = vpop.xlane.xlu0 %515
    %517 = vadd.xlane.f32.xlu0 %v507
    %v518 = vpop.xlane.xlu0 %517
    %519 = vadd.xlane.f32.xlu0 %v508
    %v520 = vpop.xlane.xlu0 %519
    %521 = vadd.xlane.f32.xlu0 %v509
    %v522 = vpop.xlane.xlu0 %521
    %523 = vadd.xlane.f32.xlu0 %v510
    %v524 = vpop.xlane.xlu0 %523
    %525 = vadd.xlane.f32.xlu0 %v511
    %v526 = vpop.xlane.xlu0 %525
    %527 = vadd.xlane.f32.xlu0 %v512
    %v528 = vpop.xlane.xlu0 %527
    %v529 = vmax.f32 %v514, 1e-24
    %v530 = vmax.f32 %v516, 1e-24
    %v531 = vmax.f32 %v518, 1e-24
    %v532 = vmax.f32 %v520, 1e-24
    %v533 = vmax.f32 %v522, 1e-24
    %v534 = vmax.f32 %v524, 1e-24
    %v535 = vmax.f32 %v526, 1e-24
    %v536 = vmax.f32 %v528, 1e-24
    %v537 = vrsqrt.pop %v529
    %v538 = vrsqrt.pop %v530
    %v539 = vrsqrt.pop %v531
    %v540 = vrsqrt.pop %v532
    %v541 = vrsqrt.pop %v533
    %v542 = vrsqrt.pop %v534
    %v543 = vrsqrt.pop %v535
    %v544 = vrsqrt.pop %v536
    %v545 = vmul.f32 %v497, %v537
    %v546 = vmul.f32 %v498, %v538
    %v547 = vmul.f32 %v499, %v539
    %v548 = vmul.f32 %v500, %v540
    %v549 = vmul.f32 %v501, %v541
    %v550 = vmul.f32 %v502, %v542
    %v551 = vmul.f32 %v503, %v543
    %v552 = vmul.f32 %v504, %v544
    %553 = vst [vmem:[#allocation2] sm:$0xff] %v545
    %554 = vst [vmem:[#allocation2 + $0x8] sm:$0xff] %v546
    %555 = vst [vmem:[#allocation2 + $0x10] sm:$0xff] %v547
    %556 = vst [vmem:[#allocation2 + $0x18] sm:$0xff] %v548
    %557 = vst [vmem:[#allocation2 + $0x20] sm:$0xff] %v549
    %558 = vst [vmem:[#allocation2 + $0x28] sm:$0xff] %v550
    %559 = vst [vmem:[#allocation2 + $0x30] sm:$0xff] %v551
    %560 = vst [vmem:[#allocation2 + $0x38] sm:$0xff] %v552
    %v561 = vld [vmem:[#allocation2] sm:$0xff]
    %v562 = vld [vmem:[#allocation2 + $0x8] sm:$0xff]
    %v563 = vld [vmem:[#allocation2 + $0x10] sm:$0xff]
    %v564 = vld [vmem:[#allocation2 + $0x18] sm:$0xff]
    %v565 = vld [vmem:[#allocation2 + $0x20] sm:$0xff]
    %v566 = vld [vmem:[#allocation2 + $0x28] sm:$0xff]
    %v567 = vld [vmem:[#allocation2 + $0x30] sm:$0xff]
    %v568 = vld [vmem:[#allocation2 + $0x38] sm:$0xff]
    %v569 = vld [vmem:[#allocation3] sm:$0xf]
    %v570 = vld [vmem:[#allocation3 + $0x4] sm:$0xf]
    %v571 = vld [vmem:[#allocation3 + $0x8] sm:$0xf]
    %v572 = vld [vmem:[#allocation3 + $0xc] sm:$0xf]
    %v573 = vld [vmem:[#allocation3 + $0x10] sm:$0xf]
    %v574 = vld [vmem:[#allocation3 + $0x14] sm:$0xf]
    %v575 = vld [vmem:[#allocation3 + $0x18] sm:$0xf]
    %v576 = vld [vmem:[#allocation3 + $0x1c] sm:$0xf]
    %v577 = vpack.c.bf16 %v562, %v561
    %v578 = vpack.c.bf16 %v564, %v563
    %v579 = vpack.c.bf16 %v566, %v565
    %v580 = vpack.c.bf16 %v568, %v567
    %v589 = vunpack.c.l.b16 %v569
    %v590 = vunpack.c.l.b16 %v570
    %v591 = vunpack.c.l.b16 %v571
    %v592 = vunpack.c.l.b16 %v572
    %v593 = vunpack.c.l.b16 %v573
    %v594 = vunpack.c.l.b16 %v574
    %v595 = vunpack.c.l.b16 %v575
    %v596 = vunpack.c.l.b16 %v576
    %v597 = vpack.c.b16 %v590, %v589
    %v598 = vpack.c.b16 %v592, %v591
    %v599 = vpack.c.b16 %v594, %v593
    %v600 = vpack.c.b16 %v596, %v595
    %v602 = vsel %vm106, %v597, 0
    %v605 = vsel %vm106, %v598, 0
    %v608 = vsel %vm106, %v599, 0
    %v611 = vsel %vm106, %v600, 0
    %613 = vmatprep.subr.bf16.mxu0 0
    %614 = vmatpush1.bf16.msra.mxu0 %v577
    %615 = vmatprep.subr.bf16.mxu0 0
    %616 = vmatpush1.bf16.msra.mxu0 %v578
    %617 = vmatprep.subr.bf16.mxu0 0
    %618 = vmatpush1.bf16.msra.mxu0 %v579
    %619 = vmatprep.subr.bf16.mxu0 0
    %620 = vmatpush1.bf16.msra.mxu0 %v580
    %621 = vmatprep.subr.bf16.mxu0 0
    %622 = vmatpush1.bf16.msra.mxu0 0
    %623 = vmatprep.subr.bf16.mxu0 0
    %624 = vmatpush1.bf16.msra.mxu0 0
    %625 = vmatprep.subr.bf16.mxu0 0
    %626 = vmatpush1.bf16.msra.mxu0 0
    %627 = vmatprep.subr.bf16.mxu0 0
    %628 = vmatpush1.bf16.msra.mxu0 0
    %629 = vmatprep.subr.bf16.mxu0 0
    %630 = vmatpush1.bf16.msra.mxu0 0
    %631 = vmatprep.subr.bf16.mxu0 0
    %632 = vmatpush1.bf16.msra.mxu0 0
    %633 = vmatprep.subr.bf16.mxu0 0
    %634 = vmatpush1.bf16.msra.mxu0 0
    %635 = vmatprep.subr.bf16.mxu0 0
    %636 = vmatpush1.bf16.msra.mxu0 0
    %637 = vmatprep.subr.bf16.mxu0 0
    %638 = vmatpush1.bf16.msra.mxu0 0
    %639 = vmatprep.subr.bf16.mxu0 0
    %640 = vmatpush1.bf16.msra.mxu0 0
    %641 = vmatprep.subr.bf16.mxu0 0
    %642 = vmatpush1.bf16.msra.mxu0 0
    %643 = vmatprep.subr.bf16.mxu0 0
    %644 = vmatpush1.bf16.msra.mxu0 0
    %645 = vmatprep.mubr.bf16.mxu0 0
    %646 = vmatmul.mubr.bf16.gmra.mrb[0].mxu0 %v602
    %v647 = vpop.f32.mrb[0].mxu0
    %v648 = vadd.f32 0.0, %v647
    %v649 = vpop.f32.mrb[0].mxu0
    %v650 = vpop.f32.mrb[0].mxu0
    %v651 = vadd.f32 0.0, %v650
    %v652 = vpop.f32.mrb[0].mxu0
    %653 = vmatprep.mubr.bf16.mxu0 0
    %654 = vmatmul.mubr.bf16.gmra.mrb[0].mxu0 %v605
    %v655 = vpop.f32.mrb[0].mxu0
    %v656 = vadd.f32 0.0, %v655
    %v657 = vpop.f32.mrb[0].mxu0
    %v658 = vpop.f32.mrb[0].mxu0
    %v659 = vadd.f32 0.0, %v658
    %v660 = vpop.f32.mrb[0].mxu0
    %661 = vmatprep.mubr.bf16.mxu0 0
    %662 = vmatmul.mubr.bf16.gmra.mrb[0].mxu0 %v608
    %v663 = vpop.f32.mrb[0].mxu0
    %v664 = vadd.f32 0.0, %v663
    %v665 = vpop.f32.mrb[0].mxu0
    %v666 = vpop.f32.mrb[0].mxu0
    %v667 = vadd.f32 0.0, %v666
    %v668 = vpop.f32.mrb[0].mxu0
    %669 = vmatprep.mubr.bf16.mxu0 0
    %670 = vmatmul.mubr.bf16.gmra.mrb[0].mxu0 %v611
    %v671 = vpop.f32.mrb[0].mxu0
    %v672 = vadd.f32 0.0, %v671
    %v673 = vpop.f32.mrb[0].mxu0
    %v674 = vpop.f32.mrb[0].mxu0
    %v675 = vadd.f32 0.0, %v674
    %v676 = vpop.f32.mrb[0].mxu0
    %677 = vdwg.mxu0
    %v678 = vld [vmem:[%s2] sm:$0xff]
    %v679 = vld [vmem:[%s2 + $0x8] sm:$0xff]
    %v680 = vld [vmem:[%s2 + $0x10] sm:$0xff]
    %v681 = vld [vmem:[%s2 + $0x18] sm:$0xff]
    %v682 = vld [vmem:[%s2 + $0x20] sm:$0xff]
    %v683 = vld [vmem:[%s2 + $0x28] sm:$0xff]
    %v684 = vld [vmem:[%s2 + $0x30] sm:$0xff]
    %v685 = vld [vmem:[%s2 + $0x38] sm:$0xff]
    %687 = vset.pattern.permute.xlu0 0
    %688 = vperm.xlu0 %687, %v678
    %v689 = vpop.permute.xlu0 %688
    %692 = vset.pattern.permute.xlu0 0
    %693 = vperm.xlu0 %692, %v679
    %v694 = vpop.permute.xlu0 %693
    %697 = vset.pattern.permute.xlu0 0
    %698 = vperm.xlu0 %697, %v680
    %v699 = vpop.permute.xlu0 %698
    %702 = vset.pattern.permute.xlu0 0
    %703 = vperm.xlu0 %702, %v681
    %v704 = vpop.permute.xlu0 %703
    %707 = vset.pattern.permute.xlu0 0
    %708 = vperm.xlu0 %707, %v682
    %v709 = vpop.permute.xlu0 %708
    %712 = vset.pattern.permute.xlu0 0
    %713 = vperm.xlu0 %712, %v683
    %v714 = vpop.permute.xlu0 %713
    %717 = vset.pattern.permute.xlu0 0
    %718 = vperm.xlu0 %717, %v684
    %v719 = vpop.permute.xlu0 %718
    %722 = vset.pattern.permute.xlu0 0
    %723 = vperm.xlu0 %722, %v685
    %v724 = vpop.permute.xlu0 %723
    %v726 = vmul.f32 %v648, %v689
    %v727 = vmul.f32 %v651, %v694
    %v728 = vmul.f32 %v656, %v699
    %v729 = vmul.f32 %v659, %v704
    %v730 = vmul.f32 %v664, %v709
    %v731 = vmul.f32 %v667, %v714
    %v732 = vmul.f32 %v672, %v719
    %v733 = vmul.f32 %v675, %v724
    %s734 = scalar_lea.vmem [#allocation6], 256
    %v735 = vld [vmem:[%s734] sm:$0xff]
    %v736 = vld [vmem:[%s734 + $0x8] sm:$0xff]
    %v737 = vld [vmem:[%s734 + $0x10] sm:$0xff]
    %v738 = vld [vmem:[%s734 + $0x18] sm:$0xff]
    %v739 = vld [vmem:[%s734 + $0x20] sm:$0xff]
    %v740 = vld [vmem:[%s734 + $0x28] sm:$0xff]
    %v741 = vld [vmem:[%s734 + $0x30] sm:$0xff]
    %v742 = vld [vmem:[%s734 + $0x38] sm:$0xff]
    %v743 = vld [vmem:[%s734 + $0x40] sm:$0xff]
    %v744 = vld [vmem:[%s734 + $0x48] sm:$0xff]
    %v745 = vld [vmem:[%s734 + $0x50] sm:$0xff]
    %v746 = vld [vmem:[%s734 + $0x58] sm:$0xff]
    %v747 = vld [vmem:[%s734 + $0x60] sm:$0xff]
    %v748 = vld [vmem:[%s734 + $0x68] sm:$0xff]
    %v749 = vld [vmem:[%s734 + $0x70] sm:$0xff]
    %v750 = vld [vmem:[%s734 + $0x78] sm:$0xff]
    %v751 = vld [vmem:[%s734 + $0x80] sm:$0xff]
    %v752 = vld [vmem:[%s734 + $0x88] sm:$0xff]
    %v753 = vld [vmem:[%s734 + $0x90] sm:$0xff]
    %v754 = vld [vmem:[%s734 + $0x98] sm:$0xff]
    %v755 = vld [vmem:[%s734 + $0xa0] sm:$0xff]
    %v756 = vld [vmem:[%s734 + $0xa8] sm:$0xff]
    %v757 = vld [vmem:[%s734 + $0xb0] sm:$0xff]
    %v758 = vld [vmem:[%s734 + $0xb8] sm:$0xff]
    %v759 = vld [vmem:[%s734 + $0xc0] sm:$0xff]
    %v760 = vld [vmem:[%s734 + $0xc8] sm:$0xff]
    %v761 = vld [vmem:[%s734 + $0xd0] sm:$0xff]
    %v762 = vld [vmem:[%s734 + $0xd8] sm:$0xff]
    %v763 = vld [vmem:[%s734 + $0xe0] sm:$0xff]
    %v764 = vld [vmem:[%s734 + $0xe8] sm:$0xff]
    %v765 = vld [vmem:[%s734 + $0xf0] sm:$0xff]
    %v766 = vld [vmem:[%s734 + $0xf8] sm:$0xff]
    %767 = vmatprep.subr.mxu0 0.0
    %768 = vmatpush1.msra.mxu0 %v751
    %769 = vmatprep.subr.mxu0 0.0
    %770 = vmatpush1.msra.mxu0 %v752
    %771 = vmatprep.subr.mxu0 0.0
    %772 = vmatpush1.msra.mxu0 %v753
    %773 = vmatprep.subr.mxu0 0.0
    %774 = vmatpush1.msra.mxu0 %v754
    %775 = vmatprep.subr.mxu0 0.0
    %776 = vmatpush1.msra.mxu0 %v755
    %777 = vmatprep.subr.mxu0 0.0
    %778 = vmatpush1.msra.mxu0 %v756
    %779 = vmatprep.subr.mxu0 0.0
    %780 = vmatpush1.msra.mxu0 %v757
    %781 = vmatprep.subr.mxu0 0.0
    %782 = vmatpush1.msra.mxu0 %v758
    %783 = vmatprep.subr.mxu0 0.0
    %784 = vmatpush1.msra.mxu0 %v759
    %785 = vmatprep.subr.mxu0 0.0
    %786 = vmatpush1.msra.mxu0 %v760
    %787 = vmatprep.subr.mxu0 0.0
    %788 = vmatpush1.msra.mxu0 %v761
    %789 = vmatprep.subr.mxu0 0.0
    %790 = vmatpush1.msra.mxu0 %v762
    %791 = vmatprep.subr.mxu0 0.0
    %792 = vmatpush1.msra.mxu0 %v763
    %793 = vmatprep.subr.mxu0 0.0
    %794 = vmatpush1.msra.mxu0 %v764
    %795 = vmatprep.subr.mxu0 0.0
    %796 = vmatpush1.msra.mxu0 %v765
    %797 = vmatprep.subr.mxu0 0.0
    %798 = vmatpush1.msra.mxu0 %v766
    %799 = vmatprep.subr.mxu0 0.0
    %800 = vmatpush1.msra.mxu0 0.0
    %801 = vmatprep.subr.mxu0 0.0
    %802 = vmatpush1.msra.mxu0 0.0
    %803 = vmatprep.subr.mxu0 0.0
    %804 = vmatpush1.msra.mxu0 0.0
    %805 = vmatprep.subr.mxu0 0.0
    %806 = vmatpush1.msra.mxu0 0.0
    %807 = vmatprep.subr.mxu0 0.0
    %808 = vmatpush1.msra.mxu0 0.0
    %809 = vmatprep.subr.mxu0 0.0
    %810 = vmatpush1.msra.mxu0 0.0
    %811 = vmatprep.subr.mxu0 0.0
    %812 = vmatpush1.msra.mxu0 0.0
    %813 = vmatprep.subr.mxu0 0.0
    %814 = vmatpush1.msra.mxu0 0.0
    %815 = vmatprep.subr.mxu0 0.0
    %816 = vmatpush1.msra.mxu0 0.0
    %817 = vmatprep.subr.mxu0 0.0
    %818 = vmatpush1.msra.mxu0 0.0
    %819 = vmatprep.subr.mxu0 0.0
    %820 = vmatpush1.msra.mxu0 0.0
    %821 = vmatprep.subr.mxu0 0.0
    %822 = vmatpush1.msra.mxu0 0.0
    %823 = vmatprep.subr.mxu0 0.0
    %824 = vmatpush1.msra.mxu0 0.0
    %825 = vmatprep.subr.mxu0 0.0
    %826 = vmatpush1.msra.mxu0 0.0
    %827 = vmatprep.subr.mxu0 0.0
    %828 = vmatpush1.msra.mxu0 0.0
    %829 = vmatprep.subr.mxu0 0.0
    %830 = vmatpush1.msra.mxu0 0.0
    %831 = vmatprep.mubr.f32.mxu0 0.0
    %832 = vmatmul.mubr.f32.gmra.mrb[0].mxu0 %v726
    %v833 = vpop.f32.mrb[0].mxu0
    %v834 = vadd.f32 0.0, %v833
    %v835 = vpop.f32.mrb[0].mxu0
    %836 = vmatprep.mubr.f32.mxu0 0.0
    %837 = vmatmul.mubr.f32.gmra.mrb[0].mxu0 %v727
    %v838 = vpop.f32.mrb[0].mxu0
    %v839 = vadd.f32 0.0, %v838
    %v840 = vpop.f32.mrb[0].mxu0
    %841 = vmatprep.mubr.f32.mxu0 0.0
    %842 = vmatmul.mubr.f32.gmra.mrb[0].mxu0 %v728
    %v843 = vpop.f32.mrb[0].mxu0
    %v844 = vadd.f32 0.0, %v843
    %v845 = vpop.f32.mrb[0].mxu0
    %846 = vmatprep.mubr.f32.mxu0 0.0
    %847 = vmatmul.mubr.f32.gmra.mrb[0].mxu0 %v729
    %v848 = vpop.f32.mrb[0].mxu0
    %v849 = vadd.f32 0.0, %v848
    %v850 = vpop.f32.mrb[0].mxu0
    %851 = vmatprep.mubr.f32.mxu0 0.0
    %852 = vmatmul.mubr.f32.gmra.mrb[0].mxu0 %v730
    %v853 = vpop.f32.mrb[0].mxu0
    %v854 = vadd.f32 0.0, %v853
    %v855 = vpop.f32.mrb[0].mxu0
    %856 = vmatprep.mubr.f32.mxu0 0.0
    %857 = vmatmul.mubr.f32.gmra.mrb[0].mxu0 %v731
    %v858 = vpop.f32.mrb[0].mxu0
    %v859 = vadd.f32 0.0, %v858
    %v860 = vpop.f32.mrb[0].mxu0
    %861 = vmatprep.mubr.f32.mxu0 0.0
    %862 = vmatmul.mubr.f32.gmra.mrb[0].mxu0 %v732
    %v863 = vpop.f32.mrb[0].mxu0
    %v864 = vadd.f32 0.0, %v863
    %v865 = vpop.f32.mrb[0].mxu0
    %866 = vmatprep.mubr.f32.mxu0 0.0
    %867 = vmatmul.mubr.f32.gmra.mrb[0].mxu0 %v733
    %v868 = vpop.f32.mrb[0].mxu0
    %v869 = vadd.f32 0.0, %v868
    %v870 = vpop.f32.mrb[0].mxu0
    %871 = vdwg.mxu0
    %872 = vmatprep.subr.mxu0 0.0
    %873 = vmatpush1.msra.mxu0 %v735
    %874 = vmatprep.subr.mxu0 0.0
    %875 = vmatpush1.msra.mxu0 %v736
    %876 = vmatprep.subr.mxu0 0.0
    %877 = vmatpush1.msra.mxu0 %v737
    %878 = vmatprep.subr.mxu0 0.0
    %879 = vmatpush1.msra.mxu0 %v738
    %880 = vmatprep.subr.mxu0 0.0
    %881 = vmatpush1.msra.mxu0 %v739
    %882 = vmatprep.subr.mxu0 0.0
    %883 = vmatpush1.msra.mxu0 %v740
    %884 = vmatprep.subr.mxu0 0.0
    %885 = vmatpush1.msra.mxu0 %v741
    %886 = vmatprep.subr.mxu0 0.0
    %887 = vmatpush1.msra.mxu0 %v742
    %888 = vmatprep.subr.mxu0 0.0
    %889 = vmatpush1.msra.mxu0 %v743
    %890 = vmatprep.subr.mxu0 0.0
    %891 = vmatpush1.msra.mxu0 %v744
    %892 = vmatprep.subr.mxu0 0.0
    %893 = vmatpush1.msra.mxu0 %v745
    %894 = vmatprep.subr.mxu0 0.0
    %895 = vmatpush1.msra.mxu0 %v746
    %896 = vmatprep.subr.mxu0 0.0
    %897 = vmatpush1.msra.mxu0 %v747
    %898 = vmatprep.subr.mxu0 0.0
    %899 = vmatpush1.msra.mxu0 %v748
    %900 = vmatprep.subr.mxu0 0.0
    %901 = vmatpush1.msra.mxu0 %v749
    %902 = vmatprep.subr.mxu0 0.0
    %903 = vmatpush1.msra.mxu0 %v750
    %904 = vmatprep.subr.mxu0 0.0
    %905 = vmatpush1.msra.mxu0 0.0
    %906 = vmatprep.subr.mxu0 0.0
    %907 = vmatpush1.msra.mxu0 0.0
    %908 = vmatprep.subr.mxu0 0.0
    %909 = vmatpush1.msra.mxu0 0.0
    %910 = vmatprep.subr.mxu0 0.0
    %911 = vmatpush1.msra.mxu0 0.0
    %912 = vmatprep.subr.mxu0 0.0
    %913 = vmatpush1.msra.mxu0 0.0
    %914 = vmatprep.subr.mxu0 0.0
    %915 = vmatpush1.msra.mxu0 0.0
    %916 = vmatprep.subr.mxu0 0.0
    %917 = vmatpush1.msra.mxu0 0.0
    %918 = vmatprep.subr.mxu0 0.0
    %919 = vmatpush1.msra.mxu0 0.0
    %920 = vmatprep.subr.mxu0 0.0
    %921 = vmatpush1.msra.mxu0 0.0
    %922 = vmatprep.subr.mxu0 0.0
    %923 = vmatpush1.msra.mxu0 0.0
    %924 = vmatprep.subr.mxu0 0.0
    %925 = vmatpush1.msra.mxu0 0.0
    %926 = vmatprep.subr.mxu0 0.0
    %927 = vmatpush1.msra.mxu0 0.0
    %928 = vmatprep.subr.mxu0 0.0
    %929 = vmatpush1.msra.mxu0 0.0
    %930 = vmatprep.subr.mxu0 0.0
    %931 = vmatpush1.msra.mxu0 0.0
    %932 = vmatprep.subr.mxu0 0.0
    %933 = vmatpush1.msra.mxu0 0.0
    %934 = vmatprep.subr.mxu0 0.0
    %935 = vmatpush1.msra.mxu0 0.0
    %936 = vmatprep.mubr.f32.mxu0 0.0
    %937 = vmatmul.mubr.f32.gmra.mrb[0].mxu0 %v561
    %v938 = vpop.f32.mrb[0].mxu0
    %v939 = vadd.f32 %v834, %v938
    %v940 = vpop.f32.mrb[0].mxu0
    %941 = vmatprep.mubr.f32.mxu0 0.0
    %942 = vmatmul.mubr.f32.gmra.mrb[0].mxu0 %v562
    %v943 = vpop.f32.mrb[0].mxu0
    %v944 = vadd.f32 %v839, %v943
    %v945 = vpop.f32.mrb[0].mxu0
    %946 = vmatprep.mubr.f32.mxu0 0.0
    %947 = vmatmul.mubr.f32.gmra.mrb[0].mxu0 %v563
    %v948 = vpop.f32.mrb[0].mxu0
    %v949 = vadd.f32 %v844, %v948
    %v950 = vpop.f32.mrb[0].mxu0
    %951 = vmatprep.mubr.f32.mxu0 0.0
    %952 = vmatmul.mubr.f32.gmra.mrb[0].mxu0 %v564
    %v953 = vpop.f32.mrb[0].mxu0
    %v954 = vadd.f32 %v849, %v953
    %v955 = vpop.f32.mrb[0].mxu0
    %956 = vmatprep.mubr.f32.mxu0 0.0
    %957 = vmatmul.mubr.f32.gmra.mrb[0].mxu0 %v565
    %v958 = vpop.f32.mrb[0].mxu0
    %v959 = vadd.f32 %v854, %v958
    %v960 = vpop.f32.mrb[0].mxu0
    %961 = vmatprep.mubr.f32.mxu0 0.0
    %962 = vmatmul.mubr.f32.gmra.mrb[0].mxu0 %v566
    %v963 = vpop.f32.mrb[0].mxu0
    %v964 = vadd.f32 %v859, %v963
    %v965 = vpop.f32.mrb[0].mxu0
    %966 = vmatprep.mubr.f32.mxu0 0.0
    %967 = vmatmul.mubr.f32.gmra.mrb[0].mxu0 %v567
    %v968 = vpop.f32.mrb[0].mxu0
    %v969 = vadd.f32 %v864, %v968
    %v970 = vpop.f32.mrb[0].mxu0
    %971 = vmatprep.mubr.f32.mxu0 0.0
    %972 = vmatmul.mubr.f32.gmra.mrb[0].mxu0 %v568
    %v973 = vpop.f32.mrb[0].mxu0
    %v974 = vadd.f32 %v869, %v973
    %v975 = vpop.f32.mrb[0].mxu0
    %976 = vdwg.mxu0
    %s977 = scalar_lea.vmem %s4, 1
    %v978 = vld [vmem:[%s977] sm:$0x1]
    %v980 = vlaneseq
    %v981 = vshrl.u32 %v980, 7
    %v982 = vsub.s32 0, %v981
    %v983 = vrot.slane %v978, %v982
    %v985 = vadd.f32 %v939, %v983
    %v986 = vadd.f32 %v944, %v983
    %v987 = vadd.f32 %v949, %v983
    %v988 = vadd.f32 %v954, %v983
    %v989 = vadd.f32 %v959, %v983
    %v990 = vadd.f32 %v964, %v983
    %v991 = vadd.f32 %v969, %v983
    %v992 = vadd.f32 %v974, %v983
    %v993 = vmax.f32 %v985, 0.0
    %v994 = vmax.f32 %v986, 0.0
    %v995 = vmax.f32 %v987, 0.0
    %v996 = vmax.f32 %v988, 0.0
    %v997 = vmax.f32 %v989, 0.0
    %v998 = vmax.f32 %v990, 0.0
    %v999 = vmax.f32 %v991, 0.0
    %v1000 = vmax.f32 %v992, 0.0
    %v1001 = vmul.f32 %v993, %v993
    %v1002 = vmul.f32 %v994, %v994
    %v1003 = vmul.f32 %v995, %v995
    %v1004 = vmul.f32 %v996, %v996
    %v1005 = vmul.f32 %v997, %v997
    %v1006 = vmul.f32 %v998, %v998
    %v1007 = vmul.f32 %v999, %v999
    %v1008 = vmul.f32 %v1000, %v1000
    %1009 = vadd.xlane.f32.xlu0 %v1001
    %v1010 = vpop.xlane.xlu0 %1009
    %1011 = vadd.xlane.f32.xlu0 %v1002
    %v1012 = vpop.xlane.xlu0 %1011
    %1013 = vadd.xlane.f32.xlu0 %v1003
    %v1014 = vpop.xlane.xlu0 %1013
    %1015 = vadd.xlane.f32.xlu0 %v1004
    %v1016 = vpop.xlane.xlu0 %1015
    %1017 = vadd.xlane.f32.xlu0 %v1005
    %v1018 = vpop.xlane.xlu0 %1017
    %1019 = vadd.xlane.f32.xlu0 %v1006
    %v1020 = vpop.xlane.xlu0 %1019
    %1021 = vadd.xlane.f32.xlu0 %v1007
    %v1022 = vpop.xlane.xlu0 %1021
    %1023 = vadd.xlane.f32.xlu0 %v1008
    %v1024 = vpop.xlane.xlu0 %1023
    %v1025 = vmax.f32 %v1010, 1e-24
    %v1026 = vmax.f32 %v1012, 1e-24
    %v1027 = vmax.f32 %v1014, 1e-24
    %v1028 = vmax.f32 %v1016, 1e-24
    %v1029 = vmax.f32 %v1018, 1e-24
    %v1030 = vmax.f32 %v1020, 1e-24
    %v1031 = vmax.f32 %v1022, 1e-24
    %v1032 = vmax.f32 %v1024, 1e-24
    %v1033 = vrsqrt.pop %v1025
    %v1034 = vrsqrt.pop %v1026
    %v1035 = vrsqrt.pop %v1027
    %v1036 = vrsqrt.pop %v1028
    %v1037 = vrsqrt.pop %v1029
    %v1038 = vrsqrt.pop %v1030
    %v1039 = vrsqrt.pop %v1031
    %v1040 = vrsqrt.pop %v1032
    %v1041 = vmul.f32 %v993, %v1033
    %v1042 = vmul.f32 %v994, %v1034
    %v1043 = vmul.f32 %v995, %v1035
    %v1044 = vmul.f32 %v996, %v1036
    %v1045 = vmul.f32 %v997, %v1037
    %v1046 = vmul.f32 %v998, %v1038
    %v1047 = vmul.f32 %v999, %v1039
    %v1048 = vmul.f32 %v1000, %v1040
    %1049 = vst [vmem:[#allocation2] sm:$0xff] %v1041
    %1050 = vst [vmem:[#allocation2 + $0x8] sm:$0xff] %v1042
    %1051 = vst [vmem:[#allocation2 + $0x10] sm:$0xff] %v1043
    %1052 = vst [vmem:[#allocation2 + $0x18] sm:$0xff] %v1044
    %1053 = vst [vmem:[#allocation2 + $0x20] sm:$0xff] %v1045
    %1054 = vst [vmem:[#allocation2 + $0x28] sm:$0xff] %v1046
    %1055 = vst [vmem:[#allocation2 + $0x30] sm:$0xff] %v1047
    %1056 = vst [vmem:[#allocation2 + $0x38] sm:$0xff] %v1048
    %v1057 = vld [vmem:[#allocation2] sm:$0xff]
    %v1058 = vld [vmem:[#allocation2 + $0x8] sm:$0xff]
    %v1059 = vld [vmem:[#allocation2 + $0x10] sm:$0xff]
    %v1060 = vld [vmem:[#allocation2 + $0x18] sm:$0xff]
    %v1061 = vld [vmem:[#allocation2 + $0x20] sm:$0xff]
    %v1062 = vld [vmem:[#allocation2 + $0x28] sm:$0xff]
    %v1063 = vld [vmem:[#allocation2 + $0x30] sm:$0xff]
    %v1064 = vld [vmem:[#allocation2 + $0x38] sm:$0xff]
    %v1065 = vld [vmem:[#allocation3] sm:$0xf]
    %v1066 = vld [vmem:[#allocation3 + $0x4] sm:$0xf]
    %v1067 = vld [vmem:[#allocation3 + $0x8] sm:$0xf]
    %v1068 = vld [vmem:[#allocation3 + $0xc] sm:$0xf]
    %v1069 = vld [vmem:[#allocation3 + $0x10] sm:$0xf]
    %v1070 = vld [vmem:[#allocation3 + $0x14] sm:$0xf]
    %v1071 = vld [vmem:[#allocation3 + $0x18] sm:$0xf]
    %v1072 = vld [vmem:[#allocation3 + $0x1c] sm:$0xf]
    %v1073 = vpack.c.bf16 %v1058, %v1057
    %v1074 = vpack.c.bf16 %v1060, %v1059
    %v1075 = vpack.c.bf16 %v1062, %v1061
    %v1076 = vpack.c.bf16 %v1064, %v1063
    %v1085 = vunpack.c.l.b16 %v1065
    %v1086 = vunpack.c.l.b16 %v1066
    %v1087 = vunpack.c.l.b16 %v1067
    %v1088 = vunpack.c.l.b16 %v1068
    %v1089 = vunpack.c.l.b16 %v1069
    %v1090 = vunpack.c.l.b16 %v1070
    %v1091 = vunpack.c.l.b16 %v1071
    %v1092 = vunpack.c.l.b16 %v1072
    %v1093 = vpack.c.b16 %v1086, %v1085
    %v1094 = vpack.c.b16 %v1088, %v1087
    %v1095 = vpack.c.b16 %v1090, %v1089
    %v1096 = vpack.c.b16 %v1092, %v1091
    %v1098 = vsel %vm106, %v1093, 0
    %v1101 = vsel %vm106, %v1094, 0
    %v1104 = vsel %vm106, %v1095, 0
    %v1107 = vsel %vm106, %v1096, 0
    %1109 = vmatprep.subr.bf16.mxu0 0
    %1110 = vmatpush1.bf16.msra.mxu0 %v1073
    %1111 = vmatprep.subr.bf16.mxu0 0
    %1112 = vmatpush1.bf16.msra.mxu0 %v1074
    %1113 = vmatprep.subr.bf16.mxu0 0
    %1114 = vmatpush1.bf16.msra.mxu0 %v1075
    %1115 = vmatprep.subr.bf16.mxu0 0
    %1116 = vmatpush1.bf16.msra.mxu0 %v1076
    %1117 = vmatprep.subr.bf16.mxu0 0
    %1118 = vmatpush1.bf16.msra.mxu0 0
    %1119 = vmatprep.subr.bf16.mxu0 0
    %1120 = vmatpush1.bf16.msra.mxu0 0
    %1121 = vmatprep.subr.bf16.mxu0 0
    %1122 = vmatpush1.bf16.msra.mxu0 0
    %1123 = vmatprep.subr.bf16.mxu0 0
    %1124 = vmatpush1.bf16.msra.mxu0 0
    %1125 = vmatprep.subr.bf16.mxu0 0
    %1126 = vmatpush1.bf16.msra.mxu0 0
    %1127 = vmatprep.subr.bf16.mxu0 0
    %1128 = vmatpush1.bf16.msra.mxu0 0
    %1129 = vmatprep.subr.bf16.mxu0 0
    %1130 = vmatpush1.bf16.msra.mxu0 0
    %1131 = vmatprep.subr.bf16.mxu0 0
    %1132 = vmatpush1.bf16.msra.mxu0 0
    %1133 = vmatprep.subr.bf16.mxu0 0
    %1134 = vmatpush1.bf16.msra.mxu0 0
    %1135 = vmatprep.subr.bf16.mxu0 0
    %1136 = vmatpush1.bf16.msra.mxu0 0
    %1137 = vmatprep.subr.bf16.mxu0 0
    %1138 = vmatpush1.bf16.msra.mxu0 0
    %1139 = vmatprep.subr.bf16.mxu0 0
    %1140 = vmatpush1.bf16.msra.mxu0 0
    %1141 = vmatprep.mubr.bf16.mxu0 0
    %1142 = vmatmul.mubr.bf16.gmra.mrb[0].mxu0 %v1098
    %v1143 = vpop.f32.mrb[0].mxu0
    %v1144 = vadd.f32 0.0, %v1143
    %v1145 = vpop.f32.mrb[0].mxu0
    %v1146 = vpop.f32.mrb[0].mxu0
    %v1147 = vadd.f32 0.0, %v1146
    %v1148 = vpop.f32.mrb[0].mxu0
    %1149 = vmatprep.mubr.bf16.mxu0 0
    %1150 = vmatmul.mubr.bf16.gmra.mrb[0].mxu0 %v1101
    %v1151 = vpop.f32.mrb[0].mxu0
    %v1152 = vadd.f32 0.0, %v1151
    %v1153 = vpop.f32.mrb[0].mxu0
    %v1154 = vpop.f32.mrb[0].mxu0
    %v1155 = vadd.f32 0.0, %v1154
    %v1156 = vpop.f32.mrb[0].mxu0
    %1157 = vmatprep.mubr.bf16.mxu0 0
    %1158 = vmatmul.mubr.bf16.gmra.mrb[0].mxu0 %v1104
    %v1159 = vpop.f32.mrb[0].mxu0
    %v1160 = vadd.f32 0.0, %v1159
    %v1161 = vpop.f32.mrb[0].mxu0
    %v1162 = vpop.f32.mrb[0].mxu0
    %v1163 = vadd.f32 0.0, %v1162
    %v1164 = vpop.f32.mrb[0].mxu0
    %1165 = vmatprep.mubr.bf16.mxu0 0
    %1166 = vmatmul.mubr.bf16.gmra.mrb[0].mxu0 %v1107
    %v1167 = vpop.f32.mrb[0].mxu0
    %v1168 = vadd.f32 0.0, %v1167
    %v1169 = vpop.f32.mrb[0].mxu0
    %v1170 = vpop.f32.mrb[0].mxu0
    %v1171 = vadd.f32 0.0, %v1170
    %v1172 = vpop.f32.mrb[0].mxu0
    %1173 = vdwg.mxu0
    %v1174 = vld [vmem:[%s2] sm:$0xff]
    %v1175 = vld [vmem:[%s2 + $0x8] sm:$0xff]
    %v1176 = vld [vmem:[%s2 + $0x10] sm:$0xff]
    %v1177 = vld [vmem:[%s2 + $0x18] sm:$0xff]
    %v1178 = vld [vmem:[%s2 + $0x20] sm:$0xff]
    %v1179 = vld [vmem:[%s2 + $0x28] sm:$0xff]
    %v1180 = vld [vmem:[%s2 + $0x30] sm:$0xff]
    %v1181 = vld [vmem:[%s2 + $0x38] sm:$0xff]
    %1183 = vset.pattern.permute.xlu0 0
    %1184 = vperm.xlu0 %1183, %v1174
    %v1185 = vpop.permute.xlu0 %1184
    %1188 = vset.pattern.permute.xlu0 0
    %1189 = vperm.xlu0 %1188, %v1175
    %v1190 = vpop.permute.xlu0 %1189
    %1193 = vset.pattern.permute.xlu0 0
    %1194 = vperm.xlu0 %1193, %v1176
    %v1195 = vpop.permute.xlu0 %1194
    %1198 = vset.pattern.permute.xlu0 0
    %1199 = vperm.xlu0 %1198, %v1177
    %v1200 = vpop.permute.xlu0 %1199
    %1203 = vset.pattern.permute.xlu0 0
    %1204 = vperm.xlu0 %1203, %v1178
    %v1205 = vpop.permute.xlu0 %1204
    %1208 = vset.pattern.permute.xlu0 0
    %1209 = vperm.xlu0 %1208, %v1179
    %v1210 = vpop.permute.xlu0 %1209
    %1213 = vset.pattern.permute.xlu0 0
    %1214 = vperm.xlu0 %1213, %v1180
    %v1215 = vpop.permute.xlu0 %1214
    %1218 = vset.pattern.permute.xlu0 0
    %1219 = vperm.xlu0 %1218, %v1181
    %v1220 = vpop.permute.xlu0 %1219
    %v1222 = vmul.f32 %v1144, %v1185
    %v1223 = vmul.f32 %v1147, %v1190
    %v1224 = vmul.f32 %v1152, %v1195
    %v1225 = vmul.f32 %v1155, %v1200
    %v1226 = vmul.f32 %v1160, %v1205
    %v1227 = vmul.f32 %v1163, %v1210
    %v1228 = vmul.f32 %v1168, %v1215
    %v1229 = vmul.f32 %v1171, %v1220
    %s1230 = scalar_lea.vmem [#allocation6], 512
    %v1231 = vld [vmem:[%s1230] sm:$0xff]
    %v1232 = vld [vmem:[%s1230 + $0x8] sm:$0xff]
    %v1233 = vld [vmem:[%s1230 + $0x10] sm:$0xff]
    %v1234 = vld [vmem:[%s1230 + $0x18] sm:$0xff]
    %v1235 = vld [vmem:[%s1230 + $0x20] sm:$0xff]
    %v1236 = vld [vmem:[%s1230 + $0x28] sm:$0xff]
    %v1237 = vld [vmem:[%s1230 + $0x30] sm:$0xff]
    %v1238 = vld [vmem:[%s1230 + $0x38] sm:$0xff]
    %v1239 = vld [vmem:[%s1230 + $0x40] sm:$0xff]
    %v1240 = vld [vmem:[%s1230 + $0x48] sm:$0xff]
    %v1241 = vld [vmem:[%s1230 + $0x50] sm:$0xff]
    %v1242 = vld [vmem:[%s1230 + $0x58] sm:$0xff]
    %v1243 = vld [vmem:[%s1230 + $0x60] sm:$0xff]
    %v1244 = vld [vmem:[%s1230 + $0x68] sm:$0xff]
    %v1245 = vld [vmem:[%s1230 + $0x70] sm:$0xff]
    %v1246 = vld [vmem:[%s1230 + $0x78] sm:$0xff]
    %v1247 = vld [vmem:[%s1230 + $0x80] sm:$0xff]
    %v1248 = vld [vmem:[%s1230 + $0x88] sm:$0xff]
    %v1249 = vld [vmem:[%s1230 + $0x90] sm:$0xff]
    %v1250 = vld [vmem:[%s1230 + $0x98] sm:$0xff]
    %v1251 = vld [vmem:[%s1230 + $0xa0] sm:$0xff]
    %v1252 = vld [vmem:[%s1230 + $0xa8] sm:$0xff]
    %v1253 = vld [vmem:[%s1230 + $0xb0] sm:$0xff]
    %v1254 = vld [vmem:[%s1230 + $0xb8] sm:$0xff]
    %v1255 = vld [vmem:[%s1230 + $0xc0] sm:$0xff]
    %v1256 = vld [vmem:[%s1230 + $0xc8] sm:$0xff]
    %v1257 = vld [vmem:[%s1230 + $0xd0] sm:$0xff]
    %v1258 = vld [vmem:[%s1230 + $0xd8] sm:$0xff]
    %v1259 = vld [vmem:[%s1230 + $0xe0] sm:$0xff]
    %v1260 = vld [vmem:[%s1230 + $0xe8] sm:$0xff]
    %v1261 = vld [vmem:[%s1230 + $0xf0] sm:$0xff]
    %v1262 = vld [vmem:[%s1230 + $0xf8] sm:$0xff]
    %1263 = vmatprep.subr.mxu0 0.0
    %1264 = vmatpush1.msra.mxu0 %v1247
    %1265 = vmatprep.subr.mxu0 0.0
    %1266 = vmatpush1.msra.mxu0 %v1248
    %1267 = vmatprep.subr.mxu0 0.0
    %1268 = vmatpush1.msra.mxu0 %v1249
    %1269 = vmatprep.subr.mxu0 0.0
    %1270 = vmatpush1.msra.mxu0 %v1250
    %1271 = vmatprep.subr.mxu0 0.0
    %1272 = vmatpush1.msra.mxu0 %v1251
    %1273 = vmatprep.subr.mxu0 0.0
    %1274 = vmatpush1.msra.mxu0 %v1252
    %1275 = vmatprep.subr.mxu0 0.0
    %1276 = vmatpush1.msra.mxu0 %v1253
    %1277 = vmatprep.subr.mxu0 0.0
    %1278 = vmatpush1.msra.mxu0 %v1254
    %1279 = vmatprep.subr.mxu0 0.0
    %1280 = vmatpush1.msra.mxu0 %v1255
    %1281 = vmatprep.subr.mxu0 0.0
    %1282 = vmatpush1.msra.mxu0 %v1256
    %1283 = vmatprep.subr.mxu0 0.0
    %1284 = vmatpush1.msra.mxu0 %v1257
    %1285 = vmatprep.subr.mxu0 0.0
    %1286 = vmatpush1.msra.mxu0 %v1258
    %1287 = vmatprep.subr.mxu0 0.0
    %1288 = vmatpush1.msra.mxu0 %v1259
    %1289 = vmatprep.subr.mxu0 0.0
    %1290 = vmatpush1.msra.mxu0 %v1260
    %1291 = vmatprep.subr.mxu0 0.0
    %1292 = vmatpush1.msra.mxu0 %v1261
    %1293 = vmatprep.subr.mxu0 0.0
    %1294 = vmatpush1.msra.mxu0 %v1262
    %1295 = vmatprep.subr.mxu0 0.0
    %1296 = vmatpush1.msra.mxu0 0.0
    %1297 = vmatprep.subr.mxu0 0.0
    %1298 = vmatpush1.msra.mxu0 0.0
    %1299 = vmatprep.subr.mxu0 0.0
    %1300 = vmatpush1.msra.mxu0 0.0
    %1301 = vmatprep.subr.mxu0 0.0
    %1302 = vmatpush1.msra.mxu0 0.0
    %1303 = vmatprep.subr.mxu0 0.0
    %1304 = vmatpush1.msra.mxu0 0.0
    %1305 = vmatprep.subr.mxu0 0.0
    %1306 = vmatpush1.msra.mxu0 0.0
    %1307 = vmatprep.subr.mxu0 0.0
    %1308 = vmatpush1.msra.mxu0 0.0
    %1309 = vmatprep.subr.mxu0 0.0
    %1310 = vmatpush1.msra.mxu0 0.0
    %1311 = vmatprep.subr.mxu0 0.0
    %1312 = vmatpush1.msra.mxu0 0.0
    %1313 = vmatprep.subr.mxu0 0.0
    %1314 = vmatpush1.msra.mxu0 0.0
    %1315 = vmatprep.subr.mxu0 0.0
    %1316 = vmatpush1.msra.mxu0 0.0
    %1317 = vmatprep.subr.mxu0 0.0
    %1318 = vmatpush1.msra.mxu0 0.0
    %1319 = vmatprep.subr.mxu0 0.0
    %1320 = vmatpush1.msra.mxu0 0.0
    %1321 = vmatprep.subr.mxu0 0.0
    %1322 = vmatpush1.msra.mxu0 0.0
    %1323 = vmatprep.subr.mxu0 0.0
    %1324 = vmatpush1.msra.mxu0 0.0
    %1325 = vmatprep.subr.mxu0 0.0
    %1326 = vmatpush1.msra.mxu0 0.0
    %1327 = vmatprep.mubr.f32.mxu0 0.0
    %1328 = vmatmul.mubr.f32.gmra.mrb[0].mxu0 %v1222
    %v1329 = vpop.f32.mrb[0].mxu0
    %v1330 = vadd.f32 0.0, %v1329
    %v1331 = vpop.f32.mrb[0].mxu0
    %1332 = vmatprep.mubr.f32.mxu0 0.0
    %1333 = vmatmul.mubr.f32.gmra.mrb[0].mxu0 %v1223
    %v1334 = vpop.f32.mrb[0].mxu0
    %v1335 = vadd.f32 0.0, %v1334
    %v1336 = vpop.f32.mrb[0].mxu0
    %1337 = vmatprep.mubr.f32.mxu0 0.0
    %1338 = vmatmul.mubr.f32.gmra.mrb[0].mxu0 %v1224
    %v1339 = vpop.f32.mrb[0].mxu0
    %v1340 = vadd.f32 0.0, %v1339
    %v1341 = vpop.f32.mrb[0].mxu0
    %1342 = vmatprep.mubr.f32.mxu0 0.0
    %1343 = vmatmul.mubr.f32.gmra.mrb[0].mxu0 %v1225
    %v1344 = vpop.f32.mrb[0].mxu0
    %v1345 = vadd.f32 0.0, %v1344
    %v1346 = vpop.f32.mrb[0].mxu0
    %1347 = vmatprep.mubr.f32.mxu0 0.0
    %1348 = vmatmul.mubr.f32.gmra.mrb[0].mxu0 %v1226
    %v1349 = vpop.f32.mrb[0].mxu0
    %v1350 = vadd.f32 0.0, %v1349
    %v1351 = vpop.f32.mrb[0].mxu0
    %1352 = vmatprep.mubr.f32.mxu0 0.0
    %1353 = vmatmul.mubr.f32.gmra.mrb[0].mxu0 %v1227
    %v1354 = vpop.f32.mrb[0].mxu0
    %v1355 = vadd.f32 0.0, %v1354
    %v1356 = vpop.f32.mrb[0].mxu0
    %1357 = vmatprep.mubr.f32.mxu0 0.0
    %1358 = vmatmul.mubr.f32.gmra.mrb[0].mxu0 %v1228
    %v1359 = vpop.f32.mrb[0].mxu0
    %v1360 = vadd.f32 0.0, %v1359
    %v1361 = vpop.f32.mrb[0].mxu0
    %1362 = vmatprep.mubr.f32.mxu0 0.0
    %1363 = vmatmul.mubr.f32.gmra.mrb[0].mxu0 %v1229
    %v1364 = vpop.f32.mrb[0].mxu0
    %v1365 = vadd.f32 0.0, %v1364
    %v1366 = vpop.f32.mrb[0].mxu0
    %1367 = vdwg.mxu0
    %1368 = vmatprep.subr.mxu0 0.0
    %1369 = vmatpush1.msra.mxu0 %v1231
    %1370 = vmatprep.subr.mxu0 0.0
    %1371 = vmatpush1.msra.mxu0 %v1232
    %1372 = vmatprep.subr.mxu0 0.0
    %1373 = vmatpush1.msra.mxu0 %v1233
    %1374 = vmatprep.subr.mxu0 0.0
    %1375 = vmatpush1.msra.mxu0 %v1234
    %1376 = vmatprep.subr.mxu0 0.0
    %1377 = vmatpush1.msra.mxu0 %v1235
    %1378 = vmatprep.subr.mxu0 0.0
    %1379 = vmatpush1.msra.mxu0 %v1236
    %1380 = vmatprep.subr.mxu0 0.0
    %1381 = vmatpush1.msra.mxu0 %v1237
    %1382 = vmatprep.subr.mxu0 0.0
    %1383 = vmatpush1.msra.mxu0 %v1238
    %1384 = vmatprep.subr.mxu0 0.0
    %1385 = vmatpush1.msra.mxu0 %v1239
    %1386 = vmatprep.subr.mxu0 0.0
    %1387 = vmatpush1.msra.mxu0 %v1240
    %1388 = vmatprep.subr.mxu0 0.0
    %1389 = vmatpush1.msra.mxu0 %v1241
    %1390 = vmatprep.subr.mxu0 0.0
    %1391 = vmatpush1.msra.mxu0 %v1242
    %1392 = vmatprep.subr.mxu0 0.0
    %1393 = vmatpush1.msra.mxu0 %v1243
    %1394 = vmatprep.subr.mxu0 0.0
    %1395 = vmatpush1.msra.mxu0 %v1244
    %1396 = vmatprep.subr.mxu0 0.0
    %1397 = vmatpush1.msra.mxu0 %v1245
    %1398 = vmatprep.subr.mxu0 0.0
    %1399 = vmatpush1.msra.mxu0 %v1246
    %1400 = vmatprep.subr.mxu0 0.0
    %1401 = vmatpush1.msra.mxu0 0.0
    %1402 = vmatprep.subr.mxu0 0.0
    %1403 = vmatpush1.msra.mxu0 0.0
    %1404 = vmatprep.subr.mxu0 0.0
    %1405 = vmatpush1.msra.mxu0 0.0
    %1406 = vmatprep.subr.mxu0 0.0
    %1407 = vmatpush1.msra.mxu0 0.0
    %1408 = vmatprep.subr.mxu0 0.0
    %1409 = vmatpush1.msra.mxu0 0.0
    %1410 = vmatprep.subr.mxu0 0.0
    %1411 = vmatpush1.msra.mxu0 0.0
    %1412 = vmatprep.subr.mxu0 0.0
    %1413 = vmatpush1.msra.mxu0 0.0
    %1414 = vmatprep.subr.mxu0 0.0
    %1415 = vmatpush1.msra.mxu0 0.0
    %1416 = vmatprep.subr.mxu0 0.0
    %1417 = vmatpush1.msra.mxu0 0.0
    %1418 = vmatprep.subr.mxu0 0.0
    %1419 = vmatpush1.msra.mxu0 0.0
    %1420 = vmatprep.subr.mxu0 0.0
    %1421 = vmatpush1.msra.mxu0 0.0
    %1422 = vmatprep.subr.mxu0 0.0
    %1423 = vmatpush1.msra.mxu0 0.0
    %1424 = vmatprep.subr.mxu0 0.0
    %1425 = vmatpush1.msra.mxu0 0.0
    %1426 = vmatprep.subr.mxu0 0.0
    %1427 = vmatpush1.msra.mxu0 0.0
    %1428 = vmatprep.subr.mxu0 0.0
    %1429 = vmatpush1.msra.mxu0 0.0
    %1430 = vmatprep.subr.mxu0 0.0
    %1431 = vmatpush1.msra.mxu0 0.0
    %1432 = vmatprep.mubr.f32.mxu0 0.0
    %1433 = vmatmul.mubr.f32.gmra.mrb[0].mxu0 %v1057
    %v1434 = vpop.f32.mrb[0].mxu0
    %v1435 = vadd.f32 %v1330, %v1434
    %v1436 = vpop.f32.mrb[0].mxu0
    %1437 = vmatprep.mubr.f32.mxu0 0.0
    %1438 = vmatmul.mubr.f32.gmra.mrb[0].mxu0 %v1058
    %v1439 = vpop.f32.mrb[0].mxu0
    %v1440 = vadd.f32 %v1335, %v1439
    %v1441 = vpop.f32.mrb[0].mxu0
    %1442 = vmatprep.mubr.f32.mxu0 0.0
    %1443 = vmatmul.mubr.f32.gmra.mrb[0].mxu0 %v1059
    %v1444 = vpop.f32.mrb[0].mxu0
    %v1445 = vadd.f32 %v1340, %v1444
    %v1446 = vpop.f32.mrb[0].mxu0
    %1447 = vmatprep.mubr.f32.mxu0 0.0
    %1448 = vmatmul.mubr.f32.gmra.mrb[0].mxu0 %v1060
    %v1449 = vpop.f32.mrb[0].mxu0
    %v1450 = vadd.f32 %v1345, %v1449
    %v1451 = vpop.f32.mrb[0].mxu0
    %1452 = vmatprep.mubr.f32.mxu0 0.0
    %1453 = vmatmul.mubr.f32.gmra.mrb[0].mxu0 %v1061
    %v1454 = vpop.f32.mrb[0].mxu0
    %v1455 = vadd.f32 %v1350, %v1454
    %v1456 = vpop.f32.mrb[0].mxu0
    %1457 = vmatprep.mubr.f32.mxu0 0.0
    %1458 = vmatmul.mubr.f32.gmra.mrb[0].mxu0 %v1062
    %v1459 = vpop.f32.mrb[0].mxu0
    %v1460 = vadd.f32 %v1355, %v1459
    %v1461 = vpop.f32.mrb[0].mxu0
    %1462 = vmatprep.mubr.f32.mxu0 0.0
    %1463 = vmatmul.mubr.f32.gmra.mrb[0].mxu0 %v1063
    %v1464 = vpop.f32.mrb[0].mxu0
    %v1465 = vadd.f32 %v1360, %v1464
    %v1466 = vpop.f32.mrb[0].mxu0
    %1467 = vmatprep.mubr.f32.mxu0 0.0
    %1468 = vmatmul.mubr.f32.gmra.mrb[0].mxu0 %v1064
    %v1469 = vpop.f32.mrb[0].mxu0
    %v1470 = vadd.f32 %v1365, %v1469
    %v1471 = vpop.f32.mrb[0].mxu0
    %1472 = vdwg.mxu0
    %s1473 = scalar_lea.vmem %s4, 2
    %v1474 = vld [vmem:[%s1473] sm:$0x1]
    %v1476 = vlaneseq
    %v1477 = vshrl.u32 %v1476, 7
    %v1478 = vsub.s32 0, %v1477
    %v1479 = vrot.slane %v1474, %v1478
    %v1481 = vadd.f32 %v1435, %v1479
    %v1482 = vadd.f32 %v1440, %v1479
    %v1483 = vadd.f32 %v1445, %v1479
    %v1484 = vadd.f32 %v1450, %v1479
    %v1485 = vadd.f32 %v1455, %v1479
    %v1486 = vadd.f32 %v1460, %v1479
    %v1487 = vadd.f32 %v1465, %v1479
    %v1488 = vadd.f32 %v1470, %v1479
    %v1489 = vmax.f32 %v1481, 0.0
    %v1490 = vmax.f32 %v1482, 0.0
    %v1491 = vmax.f32 %v1483, 0.0
    %v1492 = vmax.f32 %v1484, 0.0
    %v1493 = vmax.f32 %v1485, 0.0
    %v1494 = vmax.f32 %v1486, 0.0
    %v1495 = vmax.f32 %v1487, 0.0
    %v1496 = vmax.f32 %v1488, 0.0
    %v1497 = vmul.f32 %v1489, %v1489
    %v1498 = vmul.f32 %v1490, %v1490
    %v1499 = vmul.f32 %v1491, %v1491
    %v1500 = vmul.f32 %v1492, %v1492
    %v1501 = vmul.f32 %v1493, %v1493
    %v1502 = vmul.f32 %v1494, %v1494
    %v1503 = vmul.f32 %v1495, %v1495
    %v1504 = vmul.f32 %v1496, %v1496
    %1505 = vadd.xlane.f32.xlu0 %v1497
    %v1506 = vpop.xlane.xlu0 %1505
    %1507 = vadd.xlane.f32.xlu0 %v1498
    %v1508 = vpop.xlane.xlu0 %1507
    %1509 = vadd.xlane.f32.xlu0 %v1499
    %v1510 = vpop.xlane.xlu0 %1509
    %1511 = vadd.xlane.f32.xlu0 %v1500
    %v1512 = vpop.xlane.xlu0 %1511
    %1513 = vadd.xlane.f32.xlu0 %v1501
    %v1514 = vpop.xlane.xlu0 %1513
    %1515 = vadd.xlane.f32.xlu0 %v1502
    %v1516 = vpop.xlane.xlu0 %1515
    %1517 = vadd.xlane.f32.xlu0 %v1503
    %v1518 = vpop.xlane.xlu0 %1517
    %1519 = vadd.xlane.f32.xlu0 %v1504
    %v1520 = vpop.xlane.xlu0 %1519
    %v1521 = vmax.f32 %v1506, 1e-24
    %v1522 = vmax.f32 %v1508, 1e-24
    %v1523 = vmax.f32 %v1510, 1e-24
    %v1524 = vmax.f32 %v1512, 1e-24
    %v1525 = vmax.f32 %v1514, 1e-24
    %v1526 = vmax.f32 %v1516, 1e-24
    %v1527 = vmax.f32 %v1518, 1e-24
    %v1528 = vmax.f32 %v1520, 1e-24
    %v1529 = vrsqrt.pop %v1521
    %v1530 = vrsqrt.pop %v1522
    %v1531 = vrsqrt.pop %v1523
    %v1532 = vrsqrt.pop %v1524
    %v1533 = vrsqrt.pop %v1525
    %v1534 = vrsqrt.pop %v1526
    %v1535 = vrsqrt.pop %v1527
    %v1536 = vrsqrt.pop %v1528
    %v1537 = vmul.f32 %v1489, %v1529
    %v1538 = vmul.f32 %v1490, %v1530
    %v1539 = vmul.f32 %v1491, %v1531
    %v1540 = vmul.f32 %v1492, %v1532
    %v1541 = vmul.f32 %v1493, %v1533
    %v1542 = vmul.f32 %v1494, %v1534
    %v1543 = vmul.f32 %v1495, %v1535
    %v1544 = vmul.f32 %v1496, %v1536
    %1545 = vst [vmem:[#allocation2] sm:$0xff] %v1537
    %1546 = vst [vmem:[#allocation2 + $0x8] sm:$0xff] %v1538
    %1547 = vst [vmem:[#allocation2 + $0x10] sm:$0xff] %v1539
    %1548 = vst [vmem:[#allocation2 + $0x18] sm:$0xff] %v1540
    %1549 = vst [vmem:[#allocation2 + $0x20] sm:$0xff] %v1541
    %1550 = vst [vmem:[#allocation2 + $0x28] sm:$0xff] %v1542
    %1551 = vst [vmem:[#allocation2 + $0x30] sm:$0xff] %v1543
    %1552 = vst [vmem:[#allocation2 + $0x38] sm:$0xff] %v1544
    %v1553 = vld [vmem:[#allocation2] sm:$0xff]
    %v1554 = vld [vmem:[#allocation2 + $0x8] sm:$0xff]
    %v1555 = vld [vmem:[#allocation2 + $0x10] sm:$0xff]
    %v1556 = vld [vmem:[#allocation2 + $0x18] sm:$0xff]
    %v1557 = vld [vmem:[#allocation2 + $0x20] sm:$0xff]
    %v1558 = vld [vmem:[#allocation2 + $0x28] sm:$0xff]
    %v1559 = vld [vmem:[#allocation2 + $0x30] sm:$0xff]
    %v1560 = vld [vmem:[#allocation2 + $0x38] sm:$0xff]
    %v1561 = vld [vmem:[#allocation3] sm:$0xf]
    %v1562 = vld [vmem:[#allocation3 + $0x4] sm:$0xf]
    %v1563 = vld [vmem:[#allocation3 + $0x8] sm:$0xf]
    %v1564 = vld [vmem:[#allocation3 + $0xc] sm:$0xf]
    %v1565 = vld [vmem:[#allocation3 + $0x10] sm:$0xf]
    %v1566 = vld [vmem:[#allocation3 + $0x14] sm:$0xf]
    %v1567 = vld [vmem:[#allocation3 + $0x18] sm:$0xf]
    %v1568 = vld [vmem:[#allocation3 + $0x1c] sm:$0xf]
    %v1569 = vpack.c.bf16 %v1554, %v1553
    %v1570 = vpack.c.bf16 %v1556, %v1555
    %v1571 = vpack.c.bf16 %v1558, %v1557
    %v1572 = vpack.c.bf16 %v1560, %v1559
    %v1581 = vunpack.c.l.b16 %v1561
    %v1582 = vunpack.c.l.b16 %v1562
    %v1583 = vunpack.c.l.b16 %v1563
    %v1584 = vunpack.c.l.b16 %v1564
    %v1585 = vunpack.c.l.b16 %v1565
    %v1586 = vunpack.c.l.b16 %v1566
    %v1587 = vunpack.c.l.b16 %v1567
    %v1588 = vunpack.c.l.b16 %v1568
    %v1589 = vpack.c.b16 %v1582, %v1581
    %v1590 = vpack.c.b16 %v1584, %v1583
    %v1591 = vpack.c.b16 %v1586, %v1585
    %v1592 = vpack.c.b16 %v1588, %v1587
    %v1594 = vsel %vm106, %v1589, 0
    %v1597 = vsel %vm106, %v1590, 0
    %v1600 = vsel %vm106, %v1591, 0
    %v1603 = vsel %vm106, %v1592, 0
    %1605 = vmatprep.subr.bf16.mxu0 0
    %1606 = vmatpush1.bf16.msra.mxu0 %v1569
    %1607 = vmatprep.subr.bf16.mxu0 0
    %1608 = vmatpush1.bf16.msra.mxu0 %v1570
    %1609 = vmatprep.subr.bf16.mxu0 0
    %1610 = vmatpush1.bf16.msra.mxu0 %v1571
    %1611 = vmatprep.subr.bf16.mxu0 0
    %1612 = vmatpush1.bf16.msra.mxu0 %v1572
    %1613 = vmatprep.subr.bf16.mxu0 0
    %1614 = vmatpush1.bf16.msra.mxu0 0
    %1615 = vmatprep.subr.bf16.mxu0 0
    %1616 = vmatpush1.bf16.msra.mxu0 0
    %1617 = vmatprep.subr.bf16.mxu0 0
    %1618 = vmatpush1.bf16.msra.mxu0 0
    %1619 = vmatprep.subr.bf16.mxu0 0
    %1620 = vmatpush1.bf16.msra.mxu0 0
    %1621 = vmatprep.subr.bf16.mxu0 0
    %1622 = vmatpush1.bf16.msra.mxu0 0
    %1623 = vmatprep.subr.bf16.mxu0 0
    %1624 = vmatpush1.bf16.msra.mxu0 0
    %1625 = vmatprep.subr.bf16.mxu0 0
    %1626 = vmatpush1.bf16.msra.mxu0 0
    %1627 = vmatprep.subr.bf16.mxu0 0
    %1628 = vmatpush1.bf16.msra.mxu0 0
    %1629 = vmatprep.subr.bf16.mxu0 0
    %1630 = vmatpush1.bf16.msra.mxu0 0
    %1631 = vmatprep.subr.bf16.mxu0 0
    %1632 = vmatpush1.bf16.msra.mxu0 0
    %1633 = vmatprep.subr.bf16.mxu0 0
    %1634 = vmatpush1.bf16.msra.mxu0 0
    %1635 = vmatprep.subr.bf16.mxu0 0
    %1636 = vmatpush1.bf16.msra.mxu0 0
    %1637 = vmatprep.mubr.bf16.mxu0 0
    %1638 = vmatmul.mubr.bf16.gmra.mrb[0].mxu0 %v1594
    %v1639 = vpop.f32.mrb[0].mxu0
    %v1640 = vadd.f32 0.0, %v1639
    %v1641 = vpop.f32.mrb[0].mxu0
    %v1642 = vpop.f32.mrb[0].mxu0
    %v1643 = vadd.f32 0.0, %v1642
    %v1644 = vpop.f32.mrb[0].mxu0
    %1645 = vmatprep.mubr.bf16.mxu0 0
    %1646 = vmatmul.mubr.bf16.gmra.mrb[0].mxu0 %v1597
    %v1647 = vpop.f32.mrb[0].mxu0
    %v1648 = vadd.f32 0.0, %v1647
    %v1649 = vpop.f32.mrb[0].mxu0
    %v1650 = vpop.f32.mrb[0].mxu0
    %v1651 = vadd.f32 0.0, %v1650
    %v1652 = vpop.f32.mrb[0].mxu0
    %1653 = vmatprep.mubr.bf16.mxu0 0
    %1654 = vmatmul.mubr.bf16.gmra.mrb[0].mxu0 %v1600
    %v1655 = vpop.f32.mrb[0].mxu0
    %v1656 = vadd.f32 0.0, %v1655
    %v1657 = vpop.f32.mrb[0].mxu0
    %v1658 = vpop.f32.mrb[0].mxu0
    %v1659 = vadd.f32 0.0, %v1658
    %v1660 = vpop.f32.mrb[0].mxu0
    %1661 = vmatprep.mubr.bf16.mxu0 0
    %1662 = vmatmul.mubr.bf16.gmra.mrb[0].mxu0 %v1603
    %v1663 = vpop.f32.mrb[0].mxu0
    %v1664 = vadd.f32 0.0, %v1663
    %v1665 = vpop.f32.mrb[0].mxu0
    %v1666 = vpop.f32.mrb[0].mxu0
    %v1667 = vadd.f32 0.0, %v1666
    %v1668 = vpop.f32.mrb[0].mxu0
    %1669 = vdwg.mxu0
    %v1670 = vld [vmem:[%s2] sm:$0xff]
    %v1671 = vld [vmem:[%s2 + $0x8] sm:$0xff]
    %v1672 = vld [vmem:[%s2 + $0x10] sm:$0xff]
    %v1673 = vld [vmem:[%s2 + $0x18] sm:$0xff]
    %v1674 = vld [vmem:[%s2 + $0x20] sm:$0xff]
    %v1675 = vld [vmem:[%s2 + $0x28] sm:$0xff]
    %v1676 = vld [vmem:[%s2 + $0x30] sm:$0xff]
    %v1677 = vld [vmem:[%s2 + $0x38] sm:$0xff]
    %1679 = vset.pattern.permute.xlu0 0
    %1680 = vperm.xlu0 %1679, %v1670
    %v1681 = vpop.permute.xlu0 %1680
    %1684 = vset.pattern.permute.xlu0 0
    %1685 = vperm.xlu0 %1684, %v1671
    %v1686 = vpop.permute.xlu0 %1685
    %1689 = vset.pattern.permute.xlu0 0
    %1690 = vperm.xlu0 %1689, %v1672
    %v1691 = vpop.permute.xlu0 %1690
    %1694 = vset.pattern.permute.xlu0 0
    %1695 = vperm.xlu0 %1694, %v1673
    %v1696 = vpop.permute.xlu0 %1695
    %1699 = vset.pattern.permute.xlu0 0
    %1700 = vperm.xlu0 %1699, %v1674
    %v1701 = vpop.permute.xlu0 %1700
    %1704 = vset.pattern.permute.xlu0 0
    %1705 = vperm.xlu0 %1704, %v1675
    %v1706 = vpop.permute.xlu0 %1705
    %1709 = vset.pattern.permute.xlu0 0
    %1710 = vperm.xlu0 %1709, %v1676
    %v1711 = vpop.permute.xlu0 %1710
    %1714 = vset.pattern.permute.xlu0 0
    %1715 = vperm.xlu0 %1714, %v1677
    %v1716 = vpop.permute.xlu0 %1715
    %v1718 = vmul.f32 %v1640, %v1681
    %v1719 = vmul.f32 %v1643, %v1686
    %v1720 = vmul.f32 %v1648, %v1691
    %v1721 = vmul.f32 %v1651, %v1696
    %v1722 = vmul.f32 %v1656, %v1701
    %v1723 = vmul.f32 %v1659, %v1706
    %v1724 = vmul.f32 %v1664, %v1711
    %v1725 = vmul.f32 %v1667, %v1716
    %s1726 = scalar_lea.vmem [#allocation6], 768
    %v1727 = vld [vmem:[%s1726] sm:$0xff]
    %v1728 = vld [vmem:[%s1726 + $0x8] sm:$0xff]
    %v1729 = vld [vmem:[%s1726 + $0x10] sm:$0xff]
    %v1730 = vld [vmem:[%s1726 + $0x18] sm:$0xff]
    %v1731 = vld [vmem:[%s1726 + $0x20] sm:$0xff]
    %v1732 = vld [vmem:[%s1726 + $0x28] sm:$0xff]
    %v1733 = vld [vmem:[%s1726 + $0x30] sm:$0xff]
    %v1734 = vld [vmem:[%s1726 + $0x38] sm:$0xff]
    %v1735 = vld [vmem:[%s1726 + $0x40] sm:$0xff]
    %v1736 = vld [vmem:[%s1726 + $0x48] sm:$0xff]
    %v1737 = vld [vmem:[%s1726 + $0x50] sm:$0xff]
    %v1738 = vld [vmem:[%s1726 + $0x58] sm:$0xff]
    %v1739 = vld [vmem:[%s1726 + $0x60] sm:$0xff]
    %v1740 = vld [vmem:[%s1726 + $0x68] sm:$0xff]
    %v1741 = vld [vmem:[%s1726 + $0x70] sm:$0xff]
    %v1742 = vld [vmem:[%s1726 + $0x78] sm:$0xff]
    %v1743 = vld [vmem:[%s1726 + $0x80] sm:$0xff]
    %v1744 = vld [vmem:[%s1726 + $0x88] sm:$0xff]
    %v1745 = vld [vmem:[%s1726 + $0x90] sm:$0xff]
    %v1746 = vld [vmem:[%s1726 + $0x98] sm:$0xff]
    %v1747 = vld [vmem:[%s1726 + $0xa0] sm:$0xff]
    %v1748 = vld [vmem:[%s1726 + $0xa8] sm:$0xff]
    %v1749 = vld [vmem:[%s1726 + $0xb0] sm:$0xff]
    %v1750 = vld [vmem:[%s1726 + $0xb8] sm:$0xff]
    %v1751 = vld [vmem:[%s1726 + $0xc0] sm:$0xff]
    %v1752 = vld [vmem:[%s1726 + $0xc8] sm:$0xff]
    %v1753 = vld [vmem:[%s1726 + $0xd0] sm:$0xff]
    %v1754 = vld [vmem:[%s1726 + $0xd8] sm:$0xff]
    %v1755 = vld [vmem:[%s1726 + $0xe0] sm:$0xff]
    %v1756 = vld [vmem:[%s1726 + $0xe8] sm:$0xff]
    %v1757 = vld [vmem:[%s1726 + $0xf0] sm:$0xff]
    %v1758 = vld [vmem:[%s1726 + $0xf8] sm:$0xff]
    %1759 = vmatprep.subr.mxu0 0.0
    %1760 = vmatpush1.msra.mxu0 %v1743
    %1761 = vmatprep.subr.mxu0 0.0
    %1762 = vmatpush1.msra.mxu0 %v1744
    %1763 = vmatprep.subr.mxu0 0.0
    %1764 = vmatpush1.msra.mxu0 %v1745
    %1765 = vmatprep.subr.mxu0 0.0
    %1766 = vmatpush1.msra.mxu0 %v1746
    %1767 = vmatprep.subr.mxu0 0.0
    %1768 = vmatpush1.msra.mxu0 %v1747
    %1769 = vmatprep.subr.mxu0 0.0
    %1770 = vmatpush1.msra.mxu0 %v1748
    %1771 = vmatprep.subr.mxu0 0.0
    %1772 = vmatpush1.msra.mxu0 %v1749
    %1773 = vmatprep.subr.mxu0 0.0
    %1774 = vmatpush1.msra.mxu0 %v1750
    %1775 = vmatprep.subr.mxu0 0.0
    %1776 = vmatpush1.msra.mxu0 %v1751
    %1777 = vmatprep.subr.mxu0 0.0
    %1778 = vmatpush1.msra.mxu0 %v1752
    %1779 = vmatprep.subr.mxu0 0.0
    %1780 = vmatpush1.msra.mxu0 %v1753
    %1781 = vmatprep.subr.mxu0 0.0
    %1782 = vmatpush1.msra.mxu0 %v1754
    %1783 = vmatprep.subr.mxu0 0.0
    %1784 = vmatpush1.msra.mxu0 %v1755
    %1785 = vmatprep.subr.mxu0 0.0
    %1786 = vmatpush1.msra.mxu0 %v1756
    %1787 = vmatprep.subr.mxu0 0.0
    %1788 = vmatpush1.msra.mxu0 %v1757
    %1789 = vmatprep.subr.mxu0 0.0
    %1790 = vmatpush1.msra.mxu0 %v1758
    %1791 = vmatprep.subr.mxu0 0.0
    %1792 = vmatpush1.msra.mxu0 0.0
    %1793 = vmatprep.subr.mxu0 0.0
    %1794 = vmatpush1.msra.mxu0 0.0
    %1795 = vmatprep.subr.mxu0 0.0
    %1796 = vmatpush1.msra.mxu0 0.0
    %1797 = vmatprep.subr.mxu0 0.0
    %1798 = vmatpush1.msra.mxu0 0.0
    %1799 = vmatprep.subr.mxu0 0.0
    %1800 = vmatpush1.msra.mxu0 0.0
    %1801 = vmatprep.subr.mxu0 0.0
    %1802 = vmatpush1.msra.mxu0 0.0
    %1803 = vmatprep.subr.mxu0 0.0
    %1804 = vmatpush1.msra.mxu0 0.0
    %1805 = vmatprep.subr.mxu0 0.0
    %1806 = vmatpush1.msra.mxu0 0.0
    %1807 = vmatprep.subr.mxu0 0.0
    %1808 = vmatpush1.msra.mxu0 0.0
    %1809 = vmatprep.subr.mxu0 0.0
    %1810 = vmatpush1.msra.mxu0 0.0
    %1811 = vmatprep.subr.mxu0 0.0
    %1812 = vmatpush1.msra.mxu0 0.0
    %1813 = vmatprep.subr.mxu0 0.0
    %1814 = vmatpush1.msra.mxu0 0.0
    %1815 = vmatprep.subr.mxu0 0.0
    %1816 = vmatpush1.msra.mxu0 0.0
    %1817 = vmatprep.subr.mxu0 0.0
    %1818 = vmatpush1.msra.mxu0 0.0
    %1819 = vmatprep.subr.mxu0 0.0
    %1820 = vmatpush1.msra.mxu0 0.0
    %1821 = vmatprep.subr.mxu0 0.0
    %1822 = vmatpush1.msra.mxu0 0.0
    %1823 = vmatprep.mubr.f32.mxu0 0.0
    %1824 = vmatmul.mubr.f32.gmra.mrb[0].mxu0 %v1718
    %v1825 = vpop.f32.mrb[0].mxu0
    %v1826 = vadd.f32 0.0, %v1825
    %v1827 = vpop.f32.mrb[0].mxu0
    %1828 = vmatprep.mubr.f32.mxu0 0.0
    %1829 = vmatmul.mubr.f32.gmra.mrb[0].mxu0 %v1719
    %v1830 = vpop.f32.mrb[0].mxu0
    %v1831 = vadd.f32 0.0, %v1830
    %v1832 = vpop.f32.mrb[0].mxu0
    %1833 = vmatprep.mubr.f32.mxu0 0.0
    %1834 = vmatmul.mubr.f32.gmra.mrb[0].mxu0 %v1720
    %v1835 = vpop.f32.mrb[0].mxu0
    %v1836 = vadd.f32 0.0, %v1835
    %v1837 = vpop.f32.mrb[0].mxu0
    %1838 = vmatprep.mubr.f32.mxu0 0.0
    %1839 = vmatmul.mubr.f32.gmra.mrb[0].mxu0 %v1721
    %v1840 = vpop.f32.mrb[0].mxu0
    %v1841 = vadd.f32 0.0, %v1840
    %v1842 = vpop.f32.mrb[0].mxu0
    %1843 = vmatprep.mubr.f32.mxu0 0.0
    %1844 = vmatmul.mubr.f32.gmra.mrb[0].mxu0 %v1722
    %v1845 = vpop.f32.mrb[0].mxu0
    %v1846 = vadd.f32 0.0, %v1845
    %v1847 = vpop.f32.mrb[0].mxu0
    %1848 = vmatprep.mubr.f32.mxu0 0.0
    %1849 = vmatmul.mubr.f32.gmra.mrb[0].mxu0 %v1723
    %v1850 = vpop.f32.mrb[0].mxu0
    %v1851 = vadd.f32 0.0, %v1850
    %v1852 = vpop.f32.mrb[0].mxu0
    %1853 = vmatprep.mubr.f32.mxu0 0.0
    %1854 = vmatmul.mubr.f32.gmra.mrb[0].mxu0 %v1724
    %v1855 = vpop.f32.mrb[0].mxu0
    %v1856 = vadd.f32 0.0, %v1855
    %v1857 = vpop.f32.mrb[0].mxu0
    %1858 = vmatprep.mubr.f32.mxu0 0.0
    %1859 = vmatmul.mubr.f32.gmra.mrb[0].mxu0 %v1725
    %v1860 = vpop.f32.mrb[0].mxu0
    %v1861 = vadd.f32 0.0, %v1860
    %v1862 = vpop.f32.mrb[0].mxu0
    %1863 = vdwg.mxu0
    %1864 = vmatprep.subr.mxu0 0.0
    %1865 = vmatpush1.msra.mxu0 %v1727
    %1866 = vmatprep.subr.mxu0 0.0
    %1867 = vmatpush1.msra.mxu0 %v1728
    %1868 = vmatprep.subr.mxu0 0.0
    %1869 = vmatpush1.msra.mxu0 %v1729
    %1870 = vmatprep.subr.mxu0 0.0
    %1871 = vmatpush1.msra.mxu0 %v1730
    %1872 = vmatprep.subr.mxu0 0.0
    %1873 = vmatpush1.msra.mxu0 %v1731
    %1874 = vmatprep.subr.mxu0 0.0
    %1875 = vmatpush1.msra.mxu0 %v1732
    %1876 = vmatprep.subr.mxu0 0.0
    %1877 = vmatpush1.msra.mxu0 %v1733
    %1878 = vmatprep.subr.mxu0 0.0
    %1879 = vmatpush1.msra.mxu0 %v1734
    %1880 = vmatprep.subr.mxu0 0.0
    %1881 = vmatpush1.msra.mxu0 %v1735
    %1882 = vmatprep.subr.mxu0 0.0
    %1883 = vmatpush1.msra.mxu0 %v1736
    %1884 = vmatprep.subr.mxu0 0.0
    %1885 = vmatpush1.msra.mxu0 %v1737
    %1886 = vmatprep.subr.mxu0 0.0
    %1887 = vmatpush1.msra.mxu0 %v1738
    %1888 = vmatprep.subr.mxu0 0.0
    %1889 = vmatpush1.msra.mxu0 %v1739
    %1890 = vmatprep.subr.mxu0 0.0
    %1891 = vmatpush1.msra.mxu0 %v1740
    %1892 = vmatprep.subr.mxu0 0.0
    %1893 = vmatpush1.msra.mxu0 %v1741
    %1894 = vmatprep.subr.mxu0 0.0
    %1895 = vmatpush1.msra.mxu0 %v1742
    %1896 = vmatprep.subr.mxu0 0.0
    %1897 = vmatpush1.msra.mxu0 0.0
    %1898 = vmatprep.subr.mxu0 0.0
    %1899 = vmatpush1.msra.mxu0 0.0
    %1900 = vmatprep.subr.mxu0 0.0
    %1901 = vmatpush1.msra.mxu0 0.0
    %1902 = vmatprep.subr.mxu0 0.0
    %1903 = vmatpush1.msra.mxu0 0.0
    %1904 = vmatprep.subr.mxu0 0.0
    %1905 = vmatpush1.msra.mxu0 0.0
    %1906 = vmatprep.subr.mxu0 0.0
    %1907 = vmatpush1.msra.mxu0 0.0
    %1908 = vmatprep.subr.mxu0 0.0
    %1909 = vmatpush1.msra.mxu0 0.0
    %1910 = vmatprep.subr.mxu0 0.0
    %1911 = vmatpush1.msra.mxu0 0.0
    %1912 = vmatprep.subr.mxu0 0.0
    %1913 = vmatpush1.msra.mxu0 0.0
    %1914 = vmatprep.subr.mxu0 0.0
    %1915 = vmatpush1.msra.mxu0 0.0
    %1916 = vmatprep.subr.mxu0 0.0
    %1917 = vmatpush1.msra.mxu0 0.0
    %1918 = vmatprep.subr.mxu0 0.0
    %1919 = vmatpush1.msra.mxu0 0.0
    %1920 = vmatprep.subr.mxu0 0.0
    %1921 = vmatpush1.msra.mxu0 0.0
    %1922 = vmatprep.subr.mxu0 0.0
    %1923 = vmatpush1.msra.mxu0 0.0
    %1924 = vmatprep.subr.mxu0 0.0
    %1925 = vmatpush1.msra.mxu0 0.0
    %1926 = vmatprep.subr.mxu0 0.0
    %1927 = vmatpush1.msra.mxu0 0.0
    %1928 = vmatprep.mubr.f32.mxu0 0.0
    %1929 = vmatmul.mubr.f32.gmra.mrb[0].mxu0 %v1553
    %v1930 = vpop.f32.mrb[0].mxu0
    %v1931 = vadd.f32 %v1826, %v1930
    %v1932 = vpop.f32.mrb[0].mxu0
    %1933 = vmatprep.mubr.f32.mxu0 0.0
    %1934 = vmatmul.mubr.f32.gmra.mrb[0].mxu0 %v1554
    %v1935 = vpop.f32.mrb[0].mxu0
    %v1936 = vadd.f32 %v1831, %v1935
    %v1937 = vpop.f32.mrb[0].mxu0
    %1938 = vmatprep.mubr.f32.mxu0 0.0
    %1939 = vmatmul.mubr.f32.gmra.mrb[0].mxu0 %v1555
    %v1940 = vpop.f32.mrb[0].mxu0
    %v1941 = vadd.f32 %v1836, %v1940
    %v1942 = vpop.f32.mrb[0].mxu0
    %1943 = vmatprep.mubr.f32.mxu0 0.0
    %1944 = vmatmul.mubr.f32.gmra.mrb[0].mxu0 %v1556
    %v1945 = vpop.f32.mrb[0].mxu0
    %v1946 = vadd.f32 %v1841, %v1945
    %v1947 = vpop.f32.mrb[0].mxu0
    %1948 = vmatprep.mubr.f32.mxu0 0.0
    %1949 = vmatmul.mubr.f32.gmra.mrb[0].mxu0 %v1557
    %v1950 = vpop.f32.mrb[0].mxu0
    %v1951 = vadd.f32 %v1846, %v1950
    %v1952 = vpop.f32.mrb[0].mxu0
    %1953 = vmatprep.mubr.f32.mxu0 0.0
    %1954 = vmatmul.mubr.f32.gmra.mrb[0].mxu0 %v1558
    %v1955 = vpop.f32.mrb[0].mxu0
    %v1956 = vadd.f32 %v1851, %v1955
    %v1957 = vpop.f32.mrb[0].mxu0
    %1958 = vmatprep.mubr.f32.mxu0 0.0
    %1959 = vmatmul.mubr.f32.gmra.mrb[0].mxu0 %v1559
    %v1960 = vpop.f32.mrb[0].mxu0
    %v1961 = vadd.f32 %v1856, %v1960
    %v1962 = vpop.f32.mrb[0].mxu0
    %1963 = vmatprep.mubr.f32.mxu0 0.0
    %1964 = vmatmul.mubr.f32.gmra.mrb[0].mxu0 %v1560
    %v1965 = vpop.f32.mrb[0].mxu0
    %v1966 = vadd.f32 %v1861, %v1965
    %v1967 = vpop.f32.mrb[0].mxu0
    %1968 = vdwg.mxu0
    %s1969 = scalar_lea.vmem %s4, 3
    %v1970 = vld [vmem:[%s1969] sm:$0x1]
    %v1972 = vlaneseq
    %v1973 = vshrl.u32 %v1972, 7
    %v1974 = vsub.s32 0, %v1973
    %v1975 = vrot.slane %v1970, %v1974
    %v1977 = vadd.f32 %v1931, %v1975
    %v1978 = vadd.f32 %v1936, %v1975
    %v1979 = vadd.f32 %v1941, %v1975
    %v1980 = vadd.f32 %v1946, %v1975
    %v1981 = vadd.f32 %v1951, %v1975
    %v1982 = vadd.f32 %v1956, %v1975
    %v1983 = vadd.f32 %v1961, %v1975
    %v1984 = vadd.f32 %v1966, %v1975
    %1985 = vst [vmem:[#allocation8] sm:$0xff] %v1977
    %1986 = vst [vmem:[#allocation8 + $0x8] sm:$0xff] %v1978
    %1987 = vst [vmem:[#allocation8 + $0x10] sm:$0xff] %v1979
    %1988 = vst [vmem:[#allocation8 + $0x18] sm:$0xff] %v1980
    %1989 = vst [vmem:[#allocation8 + $0x20] sm:$0xff] %v1981
    %1990 = vst [vmem:[#allocation8 + $0x28] sm:$0xff] %v1982
    %1991 = vst [vmem:[#allocation8 + $0x30] sm:$0xff] %v1983
    %1992 = vst [vmem:[#allocation8 + $0x38] sm:$0xff] %v1984
    // Predicated region
    $region30: #{tpu_custom_call.1} parent=1 // pred_check
      _
    $region31: #{tpu_custom_call.1} parent=1 // pred_check_branch
      %1994 = sbr.rel (0) target = $region33
    $region32: #{tpu_custom_call.1} parent=1 // pred_region
      %s1996 = ssub.s32 1024, 1024
      %1997 = vsyncadd [#allocation5], %s1996
      %s1998 = sshll.u32 [#allocation8], 4
      %s1999 = int_to_ptr.vmem [resolvable:$true] %s1998
      %2004 = dma.vmem_to_hbm [thread:$0]  %s1999, 1024, %s5, [#allocation5], 128, 128, 8
    $region33: #{tpu_custom_call.1} parent=1 // pred_fallthru
      _
    // Predicated region
    $region34: #{tpu_custom_call.1} parent=1 // pred_check
      _
    $region35: #{tpu_custom_call.1} parent=1 // pred_check_branch
      %2006 = sbr.rel (0) target = $region37
    $region36: #{tpu_custom_call.1} parent=1 // pred_region
      %2007 = dma.done [#allocation5], 1024
    $region37: #{tpu_custom_call.1} parent=1 // pred_fallthru
      _
    %2008 = vsyncpa [#allocation4], 1
    %2009 = vsyncpa [#allocation7], 1
    %2010 = vsyncpa [#allocation5], 1

</llo_original>
